<compile_context>
chip_gen: v6e
topology: v6e:2x2x1
jax: 0.10.0
libtpu: 0.0.40
codegen_flags: <defaults>
</compile_context>

<pallas_src>
import jax
import jax.numpy as jnp
from jax.experimental import pallas as pl
from jax.experimental.pallas import tpu as pltpu

CHANNELS = 32
LABEL_EMBED_DIM = 64
LANES = 128
GROUPS = LANES // CHANNELS          # 4 pixels packed per lane-dense output row
assert LANES % CHANNELS == 0


# ----------------------------------------------------------------------------
# Kernel 1: conv (im2col matmul, block-diag weight -> lane-dense output)
#           + BatchNorm(train) + ReLU, output stored as bf16
# ----------------------------------------------------------------------------
def conv_bn_relu_kernel(p_ref, w_ref, b_ref, g_ref, beta_ref, avg_ref, o_ref):
    # p_ref: [Q, 36], w_ref: [36, 128] (block-diag), b/g/beta: [1, 128],
    # avg_ref: [128, 128] per-channel group-average matrix, o_ref: [Q, 128] bf16
    z = jnp.dot(p_ref[...], w_ref[...], preferred_element_type=jnp.float32)
    z = z + b_ref[...]
    # BN training-mode stats over all N*H*W samples of each channel.  Channel
    # ch lives in columns ch, ch+C, ch+2C, ch+3C; avg_ref averages those groups
    # and rebroadcasts, so mu/var below are already per-channel, column-wise.
    mu = jnp.dot(jnp.mean(z, axis=0, keepdims=True), avg_ref[...],
                 preferred_element_type=jnp.float32)
    ex2 = jnp.dot(jnp.mean(z * z, axis=0, keepdims=True), avg_ref[...],
                  preferred_element_type=jnp.float32)
    var = ex2 - mu * mu
    zn = (z - mu) * jax.lax.rsqrt(var + 1e-5)
    zn = zn * g_ref[...] + beta_ref[...]
    o_ref[...] = jnp.maximum(zn, 0.0).astype(o_ref.dtype)


def conv_bn_relu(patches2, wblk, b, g, beta, avg):
    q, kdim = patches2.shape
    lanes = wblk.shape[1]
    full2d = lambda shape: pl.BlockSpec(shape, lambda i: (0, 0))
    return pl.pallas_call(
        conv_bn_relu_kernel,
        out_shape=jax.ShapeDtypeStruct((q, lanes), jnp.bfloat16),
        grid=(1,),
        in_specs=[
            full2d((q, kdim)),        # full-array block: exempt from 128-lane rule
            full2d((kdim, lanes)),
            full2d((1, lanes)),
            full2d((1, lanes)),
            full2d((1, lanes)),
            full2d((lanes, lanes)),
        ],
        out_specs=full2d((q, lanes)),  # lane-dense (128-wide) unmasked stores
        compiler_params=pltpu.CompilerParams(
            dimension_semantics=("arbitrary",)),
    )(patches2, wblk, b, g, beta, avg)


# ----------------------------------------------------------------------------
# Kernel 2: fused head MLP (split-w1 dots, bf16 K-tiled image contraction,
#           f32 accumulation) + batch mean
# ----------------------------------------------------------------------------
def head_kernel(img_ref, w1i_ref, lab_ref, w1l_ref, wv_ref, w1w_ref,
                b1_ref, w2_ref, b2_ref, w3_ref, b3_ref, o_ref, acc_ref):
    k = pl.program_id(0)

    @pl.when(k == 0)
    def _():
        acc_ref[...] = jnp.zeros_like(acc_ref)

    # Stream the big image-embedding contraction in bf16 K-tiles (pipelined
    # DMA), accumulate in f32.
    acc_ref[...] += jnp.dot(img_ref[...], w1i_ref[...],
                            preferred_element_type=jnp.float32)

    @pl.when(k == pl.num_programs(0) - 1)
    def _():
        h = acc_ref[...]
        # label-embedding part of layer 1
        h = h + jnp.dot(lab_ref[...], w1l_ref[...],
                        preferred_element_type=jnp.float32)
        # w part of layer 1: [1,P]@[P,H] -> [1,H], broadcast over batch rows
        h = h + jnp.dot(wv_ref[...], w1w_ref[...],
                        preferred_element_type=jnp.float32)
        h = jnp.maximum(h + b1_ref[...], 0.0)
        h = jnp.maximum(
            jnp.dot(h, w2_ref[...], preferred_element_type=jnp.float32)
            + b2_ref[...], 0.0)
        h = jnp.dot(h, w3_ref[...], preferred_element_type=jnp.float32) + b3_ref[...]
        # torch.mean(h, axis=0)
        o_ref[...] = jnp.mean(h, axis=0, keepdims=True)


def _vmem_limits():
    """(vmem_limit_bytes for CompilerParams, planning budget for tiles)."""
    try:
        phys = pltpu.get_tpu_info().vmem_capacity_bytes
    except Exception:                      # not queryable -> conservative (v7x)
        phys = 64 * 1024 * 1024
    limit = int(phys * 0.75)               # headroom for compiler internals
    return limit, int(limit * 0.8)


def _pick_tk(d_img, hidden, n, n_params, budget_bytes):
    """Largest K-tile that keeps double-buffered bf16 tiles + residents in VMEM."""
    # Grid-invariant blocks (conservatively counted twice: default double
    # buffering) plus the f32 accumulator.
    const_elems = (n * LABEL_EMBED_DIM + LABEL_EMBED_DIM * hidden      # lab, w1_lab
                   + n_params + n_params * hidden                       # wv, w1_w
                   + hidden + hidden * hidden + hidden                  # b1, w2, b2
                   + hidden * n_params + n_params)                      # w3, b3
    resident = 2 * 4 * const_elems + 4 * n * hidden
    avail = max(budget_bytes - resident, 256 * 1024)
    per_tk_bytes = 2 * 2 * (hidden + n)    # double-buffered bf16 w1 + img tiles
    tk_max = avail // per_tk_bytes
    for cand in (4096, 2048, 1024, 512, 256, 128):
        if cand <= tk_max and d_img % cand == 0:
            return cand
    return d_img                            # tiny model: single full-width block


def head_mlp(img, lab, wv, kp):
    n, d_img = img.shape
    hidden = kp["w2"].shape[0]
    n_params = kp["w3"].shape[1]
    vmem_limit, budget = _vmem_limits()
    tk = _pick_tk(d_img, hidden, n, n_params, budget)
    kt = d_img // tk
    const = lambda shape: pl.BlockSpec(shape, lambda k: (0, 0))
    out = pl.pallas_call(
        head_kernel,
        out_shape=jax.ShapeDtypeStruct((1, n_params), jnp.float32),
        grid=(kt,),
        in_specs=[
            pl.BlockSpec((n, tk), lambda k: (0, k)),        # img K-tile (bf16)
            pl.BlockSpec((tk, hidden), lambda k: (k, 0)),   # w1_img K-tile (bf16)
            const((n, LABEL_EMBED_DIM)),                    # lab (invariant)
            const((LABEL_EMBED_DIM, hidden)),               # w1_lab
            const((1, n_params)),                           # w row
            const((n_params, hidden)),                      # w1_w
            const((1, hidden)),                             # b1
            const((hidden, hidden)),                        # w2
            const((1, hidden)),                             # b2
            const((hidden, n_params)),                      # w3
            const((1, n_params)),                           # b3
        ],
        out_specs=const((1, n_params)),
        scratch_shapes=[pltpu.VMEM((n, hidden), jnp.float32)],
        compiler_params=pltpu.CompilerParams(
            dimension_semantics=("arbitrary",),
            vmem_limit_bytes=vmem_limit),
    )(img, kp["w1_img"], lab, kp["w1_lab"], wv, kp["w1_w"],
      kp["b1"], kp["w2"], kp["b2"], kp["w3"], kp["b3"])
    return out[0]


# ----------------------------------------------------------------------------
# Glue: im2col, parameter construction / one-time preparation
# ----------------------------------------------------------------------------
def im2col_3x3_same(x_nchw):
    # x: [N, 1, H, W] -> patches [N*H*W, 9], patch order (ky, kx)
    n, _, h, w = x_nchw.shape
    xp = jnp.pad(x_nchw[:, 0], ((0, 0), (1, 1), (1, 1)))
    cols = [xp[:, ky:ky + h, kx:kx + w] for ky in range(3) for kx in range(3)]
    patches = jnp.stack(cols, axis=-1)          # [N, H, W, 9]
    return patches.reshape(n * h * w, 9)


def init_raw_params(height, width, n_classes, n_parameters, hidden_size=512,
                    key=None):
    """Parameters in PyTorch-like convention (w1 image rows in CHW order)."""
    c = CHANNELS
    img_embed_dim = height * width * c
    d_in = img_embed_dim + LABEL_EMBED_DIM + n_parameters
    key = jax.random.PRNGKey(0) if key is None else key
    ks = jax.random.split(key, 8)
    return {
        "conv_w": 0.1 * jax.random.normal(ks[0], (c, 1, 3, 3), jnp.float32),
        "conv_b": 0.01 * jax.random.normal(ks[1], (c,), jnp.float32),
        "bn_gamma": jnp.ones((c,), jnp.float32),
        "bn_beta": jnp.zeros((c,), jnp.float32),
        "emb": 0.1 * jax.random.normal(ks[2], (n_classes, LABEL_EMBED_DIM), jnp.float32),
        "w1": (1.0 / jnp.sqrt(d_in)) *
              jax.random.normal(ks[3], (d_in, hidden_size), jnp.float32),
        "b1": jnp.zeros((hidden_size,), jnp.float32),
        "w2": (1.0 / jnp.sqrt(hidden_size)) *
              jax.random.normal(ks[4], (hidden_size, hidden_size), jnp.float32),
        "b2": jnp.zeros((hidden_size,), jnp.float32),
        "w3": (1.0 / jnp.sqrt(hidden_size)) *
              jax.random.normal(ks[5], (hidden_size, n_parameters), jnp.float32),
        "b3": jnp.zeros((n_parameters,), jnp.float32),
    }


def prepare_kernel_params(raw, height, width):
    """One-time weight reshuffling (free at init, saves per-call work).

    - conv weight -> im2col matrix [9, C] -> block-diagonal [9*G, 128] so the
      conv kernel writes a lane-dense output slab
    - bias / gamma / beta tiled to [1, 128]; BN group-average matrix [128,128]
    - w1 image rows permuted CHW -> HWC (free activation reshape), stored bf16
    - w1 split into image / label / w blocks (no concat+pad per call)
    """
    c = CHANNELS
    g = GROUPS
    hidden = raw["w2"].shape[0]
    n_params = raw["w3"].shape[1]
    d_img = height * width * c

    wc = jnp.transpose(raw["conv_w"][:, 0], (1, 2, 0)).reshape(9, c)   # [9, C]
    wblk = jnp.kron(jnp.eye(g, dtype=jnp.float32), wc)                 # [36, 128]

    tile_g = lambda v: jnp.tile(v.reshape(1, c), (1, g))               # [1, 128]

    idx = jnp.arange(c * g)
    avg = jnp.where((idx[:, None] % c) == (idx[None, :] % c),
                    1.0 / g, 0.0).astype(jnp.float32)                  # [128, 128]

    w1_img_chw = raw["w1"][:d_img]
    w1_lab = raw["w1"][d_img:d_img + LABEL_EMBED_DIM]
    w1_w = raw["w1"][d_img + LABEL_EMBED_DIM:]
    # row (ch*H*W + h*W + w)  ->  row (h*W*C + w*C + ch)
    w1_img_hwc = jnp.transpose(
        w1_img_chw.reshape(c, height, width, hidden),
        (1, 2, 0, 3)).reshape(d_img, hidden)

    return {
        "wblk": wblk,
        "conv_b": tile_g(raw["conv_b"]),
        "bn_gamma": tile_g(raw["bn_gamma"]),
        "bn_beta": tile_g(raw["bn_beta"]),
        "bn_avg": avg,
        "emb": raw["emb"],
        "w1_img": w1_img_hwc.astype(jnp.bfloat16),   # HBM-bound stream -> bf16
        "w1_lab": w1_lab,
        "w1_w": w1_w,
        "b1": raw["b1"].reshape(1, hidden),
        "w2": raw["w2"],
        "b2": raw["b2"].reshape(1, hidden),
        "w3": raw["w3"],
        "b3": raw["b3"].reshape(1, n_params),
    }


@jax.jit
def gradient_model_forward(x, y, w, kparams):
    """x: [N,1,H,W] f32 (NCHW), y: [N] int32, w: [P] f32."""
    n, _, h, wd = x.shape
    c = CHANNELS
    nhw = n * h * wd
    assert nhw % GROUPS == 0

    # ---- image embed: conv(3x3, same) + BN(train) + ReLU (Pallas) ----
    patches = im2col_3x3_same(x)                                 # [NHW, 9]
    # free reshape: pack GROUPS consecutive pixels per row -> lane-dense output
    patches2 = patches.reshape(nhw // GROUPS, 9 * GROUPS)        # [NHW/4, 36]
    feat = conv_bn_relu(patches2, kparams["wblk"], kparams["conv_b"],
                        kparams["bn_gamma"], kparams["bn_beta"],
                        kparams["bn_avg"])                       # [NHW/4, 128] bf16
    # Free reshape (HWC flatten) — w1_img rows were permuted to match at init.
    img = feat.reshape(n, h * wd * c)                            # bf16

    # ---- label embed (tiny gather, XLA glue) ----
    lab = jnp.take(kparams["emb"], y, axis=0)                    # [N, 64]

    # ---- fused head: split-w1 dots + 2 hidden layers + batch mean ----
    wv = w.reshape(1, -1)                                        # broadcast in-kernel
    return head_mlp(img, lab, wv, kparams)                       # [P]


# ----------------------------------------------------------------------------
# Pure-JAX f32 reference (PyTorch-convention weights / CHW flatten)
# ----------------------------------------------------------------------------
def reference_forward(x, y, w, raw):
    n, _, h, wd = x.shape
    c = CHANNELS
    patches = im2col_3x3_same(x)
    wc = jnp.transpose(raw["conv_w"][:, 0], (1, 2, 0)).reshape(9, c)
    z = patches @ wc + raw["conv_b"].reshape(1, c)
    mu = jnp.mean(z, axis=0, keepdims=True)
    var = jnp.mean((z - mu) ** 2, axis=0, keepdims=True)
    zn = (z - mu) * jax.lax.rsqrt(var + 1e-5)
    zn = zn * raw["bn_gamma"].reshape(1, c) + raw["bn_beta"].reshape(1, c)
    feat = jnp.maximum(zn, 0.0)
    # PyTorch Flatten of NCHW conv output: [N, C*H*W]
    img = jnp.transpose(feat.reshape(n, h, wd, c), (0, 3, 1, 2)).reshape(n, -1)
    lab = jnp.take(raw["emb"], y, axis=0)
    wexp = jnp.broadcast_to(w.reshape(1, -1), (n, w.shape[0]))
    xcat = jnp.concatenate([img, lab, wexp], axis=1)
    h1 = jnp.maximum(xcat @ raw["w1"] + raw["b1"], 0.0)
    h2 = jnp.maximum(h1 @ raw["w2"] + raw["b2"], 0.0)
    h3 = h2 @ raw["w3"] + raw["b3"]
    return jnp.mean(h3, axis=0)


if __name__ == "__main__":
    # Small shapes consistent with the module (in_channels=1, CHANNELS=32 fixed)
    N, H, W = 2, 16, 16
    N_CLASSES, N_PARAMS, HIDDEN = 4, 8, 32

    key = jax.random.PRNGKey(0)
    kx, ky, kw, kp = jax.random.split(key, 4)
    x = jax.random.normal(kx, (N, 1, H, W), jnp.float32)
    y = jax.random.randint(ky, (N,), 0, N_CLASSES, jnp.int32)
    w = jax.random.normal(kw, (N_PARAMS,), jnp.float32)

    raw = init_raw_params(H, W, N_CLASSES, N_PARAMS, hidden_size=HIDDEN, key=kp)
    kparams = prepare_kernel_params(raw, H, W)

    out = gradient_model_forward(x, y, w, kparams)
    out = jax.block_until_ready(out)

    assert out.shape == (N_PARAMS,)
    assert bool(jnp.all(jnp.isfinite(out)))

    ref = jax.block_until_ready(reference_forward(x, y, w, raw))
    # bf16 w1_img / bf16 conv activations on the dominant stream -> tolerance
    # relaxed vs. the all-f32 reference (review correctness note).
    assert jnp.allclose(out, ref, atol=2e-2, rtol=2e-2), (out, ref)

    print("KERNEL_OK")
</pallas_src>

<mosaic_0001>
module attributes {stable_mosaic.version = 11 : i64} {
  func.func @conv_bn_relu_kernel(%arg0: i32, %arg1: memref<128x36xf32, #tpu.memory_space<vmem>>, %arg2: memref<36x128xf32, #tpu.memory_space<vmem>>, %arg3: memref<1x128xf32, #tpu.memory_space<vmem>>, %arg4: memref<1x128xf32, #tpu.memory_space<vmem>>, %arg5: memref<1x128xf32, #tpu.memory_space<vmem>>, %arg6: memref<128x128xf32, #tpu.memory_space<vmem>>, %arg7: memref<128x128xbf16, #tpu.memory_space<vmem>>) attributes {dimension_semantics = [#tpu.dimension_semantics<arbitrary>], iteration_bounds = array<i64: 1>, scalar_prefetch = 0 : i64, scratch_operands = 0 : i64, tpu.core_type = #tpu.core_type<tc>, window_params = [{pipeline_mode = #tpu.pipeline_mode<synchronous>, transform_indices = @transform_0, window_bounds = array<i64: 128, 36>}, {pipeline_mode = #tpu.pipeline_mode<synchronous>, transform_indices = @transform_1, window_bounds = array<i64: 36, 128>}, {pipeline_mode = #tpu.pipeline_mode<synchronous>, transform_indices = @transform_2, window_bounds = array<i64: 1, 128>}, {pipeline_mode = #tpu.pipeline_mode<synchronous>, transform_indices = @transform_3, window_bounds = array<i64: 1, 128>}, {pipeline_mode = #tpu.pipeline_mode<synchronous>, transform_indices = @transform_4, window_bounds = array<i64: 1, 128>}, {pipeline_mode = #tpu.pipeline_mode<synchronous>, transform_indices = @transform_5, window_bounds = array<i64: 128, 128>}, {pipeline_mode = #tpu.pipeline_mode<synchronous>, transform_indices = @transform_6, window_bounds = array<i64: 128, 128>}]} {
    %c0 = arith.constant 0 : index
    %c0_0 = arith.constant 0 : index
    %0 = vector.load %arg1[%c0, %c0_0] : memref<128x36xf32, #tpu.memory_space<vmem>>, vector<128x36xf32>
    %c0_1 = arith.constant 0 : index
    %c0_2 = arith.constant 0 : index
    %1 = vector.load %arg2[%c0_1, %c0_2] : memref<36x128xf32, #tpu.memory_space<vmem>>, vector<36x128xf32>
    %cst = arith.constant dense<0.000000e+00> : vector<128x128xf32>
    %2 = tpu.matmul %0, %1, %cst {dimension_numbers = #tpu.dot_dimension_numbers<[1], [0], [0], [1], [0, 0, 1, 1], [], []>} : vector<128x36xf32>, vector<36x128xf32>, vector<128x128xf32> -> vector<128x128xf32>
    %c0_3 = arith.constant 0 : index
    %c0_4 = arith.constant 0 : index
    %3 = vector.load %arg3[%c0_3, %c0_4] : memref<1x128xf32, #tpu.memory_space<vmem>>, vector<1x128xf32>
    %4 = vector.broadcast %3 : vector<1x128xf32> to vector<128x128xf32>
    %5 = arith.addf %2, %4 : vector<128x128xf32>
    %cst_5 = arith.constant dense<0.000000e+00> : vector<128xf32>
    %6 = vector.multi_reduction <add>, %5, %cst_5 [0] : vector<128x128xf32> to vector<128xf32>
    %7 = vector.shape_cast %6 : vector<128xf32> to vector<1x128xf32>
    %cst_6 = arith.constant 1.280000e+02 : f32
    %8 = vector.broadcast %cst_6 : f32 to vector<1x128xf32>
    %9 = arith.divf %7, %8 : vector<1x128xf32>
    %c0_7 = arith.constant 0 : index
    %c0_8 = arith.constant 0 : index
    %10 = vector.load %arg6[%c0_7, %c0_8] : memref<128x128xf32, #tpu.memory_space<vmem>>, vector<128x128xf32>
    %cst_9 = arith.constant dense<0.000000e+00> : vector<1x128xf32>
    %11 = tpu.matmul %9, %10, %cst_9 {dimension_numbers = #tpu.dot_dimension_numbers<[1], [0], [0], [1], [0, 0, 1, 1], [], []>} : vector<1x128xf32>, vector<128x128xf32>, vector<1x128xf32> -> vector<1x128xf32>
    %12 = arith.mulf %5, %5 : vector<128x128xf32>
    %cst_10 = arith.constant dense<0.000000e+00> : vector<128xf32>
    %13 = vector.multi_reduction <add>, %12, %cst_10 [0] : vector<128x128xf32> to vector<128xf32>
    %14 = vector.shape_cast %13 : vector<128xf32> to vector<1x128xf32>
    %cst_11 = arith.constant 1.280000e+02 : f32
    %15 = vector.broadcast %cst_11 : f32 to vector<1x128xf32>
    %16 = arith.divf %14, %15 : vector<1x128xf32>
    %c0_12 = arith.constant 0 : index
    %c0_13 = arith.constant 0 : index
    %17 = vector.load %arg6[%c0_12, %c0_13] : memref<128x128xf32, #tpu.memory_space<vmem>>, vector<128x128xf32>
    %cst_14 = arith.constant dense<0.000000e+00> : vector<1x128xf32>
    %18 = tpu.matmul %16, %17, %cst_14 {dimension_numbers = #tpu.dot_dimension_numbers<[1], [0], [0], [1], [0, 0, 1, 1], [], []>} : vector<1x128xf32>, vector<128x128xf32>, vector<1x128xf32> -> vector<1x128xf32>
    %19 = arith.mulf %11, %11 : vector<1x128xf32>
    %20 = arith.subf %18, %19 : vector<1x128xf32>
    %21 = vector.broadcast %11 : vector<1x128xf32> to vector<128x128xf32>
    %22 = arith.subf %5, %21 : vector<128x128xf32>
    %cst_15 = arith.constant 9.99999974E-6 : f32
    %23 = vector.broadcast %cst_15 : f32 to vector<1x128xf32>
    %24 = arith.addf %20, %23 : vector<1x128xf32>
    %25 = math.rsqrt %24 : vector<1x128xf32>
    %26 = vector.broadcast %25 : vector<1x128xf32> to vector<128x128xf32>
    %27 = arith.mulf %22, %26 : vector<128x128xf32>
    %c0_16 = arith.constant 0 : index
    %c0_17 = arith.constant 0 : index
    %28 = vector.load %arg4[%c0_16, %c0_17] : memref<1x128xf32, #tpu.memory_space<vmem>>, vector<1x128xf32>
    %29 = vector.broadcast %28 : vector<1x128xf32> to vector<128x128xf32>
    %30 = arith.mulf %27, %29 : vector<128x128xf32>
    %c0_18 = arith.constant 0 : index
    %c0_19 = arith.constant 0 : index
    %31 = vector.load %arg5[%c0_18, %c0_19] : memref<1x128xf32, #tpu.memory_space<vmem>>, vector<1x128xf32>
    %32 = vector.broadcast %31 : vector<1x128xf32> to vector<128x128xf32>
    %33 = arith.addf %30, %32 : vector<128x128xf32>
    %cst_20 = arith.constant 0.000000e+00 : f32
    %34 = vector.broadcast %cst_20 : f32 to vector<128x128xf32>
    %35 = arith.maximumf %33, %34 : vector<128x128xf32>
    %36 = arith.truncf %35 : vector<128x128xf32> to vector<128x128xbf16>
    %c0_21 = arith.constant 0 : index
    %c0_22 = arith.constant 0 : index
    %37 = vector.load %arg7[%c0_21, %c0_22] : memref<128x128xbf16, #tpu.memory_space<vmem>>, vector<128x128xbf16>
    tpu.vector_store %arg7[%c0_21, %c0_22], %36 {strides = array<i32>} : memref<128x128xbf16, #tpu.memory_space<vmem>>, vector<128x128xbf16>,
    return
  }
  func.func @transform_0(%arg0: i32) -> (i32, i32) {
    %c0_i32 = arith.constant 0 : i32
    %c0_i32_0 = arith.constant 0 : i32
    %c0_i32_1 = arith.constant 0 : i32
    return %c0_i32, %c0_i32_0 : i32, i32
  }
  func.func @transform_1(%arg0: i32) -> (i32, i32) {
    %c0_i32 = arith.constant 0 : i32
    %c0_i32_0 = arith.constant 0 : i32
    %c0_i32_1 = arith.constant 0 : i32
    return %c0_i32, %c0_i32_0 : i32, i32
  }
  func.func @transform_2(%arg0: i32) -> (i32, i32) {
    %c0_i32 = arith.constant 0 : i32
    %c0_i32_0 = arith.constant 0 : i32
    %c0_i32_1 = arith.constant 0 : i32
    return %c0_i32, %c0_i32_0 : i32, i32
  }
  func.func @transform_3(%arg0: i32) -> (i32, i32) {
    %c0_i32 = arith.constant 0 : i32
    %c0_i32_0 = arith.constant 0 : i32
    %c0_i32_1 = arith.constant 0 : i32
    return %c0_i32, %c0_i32_0 : i32, i32
  }
  func.func @transform_4(%arg0: i32) -> (i32, i32) {
    %c0_i32 = arith.constant 0 : i32
    %c0_i32_0 = arith.constant 0 : i32
    %c0_i32_1 = arith.constant 0 : i32
    return %c0_i32, %c0_i32_0 : i32, i32
  }
  func.func @transform_5(%arg0: i32) -> (i32, i32) {
    %c0_i32 = arith.constant 0 : i32
    %c0_i32_0 = arith.constant 0 : i32
    %c0_i32_1 = arith.constant 0 : i32
    return %c0_i32, %c0_i32_0 : i32, i32
  }
  func.func @transform_6(%arg0: i32) -> (i32, i32) {
    %c0_i32 = arith.constant 0 : i32
    %c0_i32_0 = arith.constant 0 : i32
    %c0_i32_1 = arith.constant 0 : i32
    return %c0_i32, %c0_i32_0 : i32, i32
  }
}

module attributes {stable_mosaic.version = 11 : i64} {
  func.func @head_kernel(%arg0: i32, %arg1: memref<2x4096xbf16, #tpu.memory_space<vmem>>, %arg2: memref<4096x32xbf16, #tpu.memory_space<vmem>>, %arg3: memref<2x64xf32, #tpu.memory_space<vmem>>, %arg4: memref<64x32xf32, #tpu.memory_space<vmem>>, %arg5: memref<1x8xf32, #tpu.memory_space<vmem>>, %arg6: memref<8x32xf32, #tpu.memory_space<vmem>>, %arg7: memref<1x32xf32, #tpu.memory_space<vmem>>, %arg8: memref<32x32xf32, #tpu.memory_space<vmem>>, %arg9: memref<1x32xf32, #tpu.memory_space<vmem>>, %arg10: memref<32x8xf32, #tpu.memory_space<vmem>>, %arg11: memref<1x8xf32, #tpu.memory_space<vmem>>, %arg12: memref<1x8xf32, #tpu.memory_space<vmem>>, %arg13: memref<2x32xf32, #tpu.memory_space<vmem>>) attributes {dimension_semantics = [#tpu.dimension_semantics<arbitrary>], iteration_bounds = array<i64: 2>, scalar_prefetch = 0 : i64, scratch_operands = 1 : i64, tpu.core_type = #tpu.core_type<tc>, window_params = [{transform_indices = @transform_0, window_bounds = array<i64: 2, 4096>}, {transform_indices = @transform_1, window_bounds = array<i64: 4096, 32>}, {pipeline_mode = #tpu.pipeline_mode<synchronous>, transform_indices = @transform_2, window_bounds = array<i64: 2, 64>}, {pipeline_mode = #tpu.pipeline_mode<synchronous>, transform_indices = @transform_3, window_bounds = array<i64: 64, 32>}, {pipeline_mode = #tpu.pipeline_mode<synchronous>, transform_indices = @transform_4, window_bounds = array<i64: 1, 8>}, {pipeline_mode = #tpu.pipeline_mode<synchronous>, transform_indices = @transform_5, window_bounds = array<i64: 8, 32>}, {pipeline_mode = #tpu.pipeline_mode<synchronous>, transform_indices = @transform_6, window_bounds = array<i64: 1, 32>}, {pipeline_mode = #tpu.pipeline_mode<synchronous>, transform_indices = @transform_7, window_bounds = array<i64: 32, 32>}, {pipeline_mode = #tpu.pipeline_mode<synchronous>, transform_indices = @transform_8, window_bounds = array<i64: 1, 32>}, {pipeline_mode = #tpu.pipeline_mode<synchronous>, transform_indices = @transform_9, window_bounds = array<i64: 32, 8>}, {pipeline_mode = #tpu.pipeline_mode<synchronous>, transform_indices = @transform_10, window_bounds = array<i64: 1, 8>}, {pipeline_mode = #tpu.pipeline_mode<synchronous>, transform_indices = @transform_11, window_bounds = array<i64: 1, 8>}]} {
    %c0_i32 = arith.constant 0 : i32
    %0 = arith.cmpi eq, %arg0, %c0_i32 : i32
    %1 = arith.extui %0 : i1 to i32
    %c0_i32_0 = arith.constant 0 : i32
    %2 = arith.cmpi ne, %1, %c0_i32_0 : i32
    scf.if %2 {
      %cst_9 = arith.constant 0.000000e+00 : f32
      %12 = vector.broadcast %cst_9 : f32 to vector<2x32xf32>
      %c0_10 = arith.constant 0 : index
      %c0_11 = arith.constant 0 : index
      %13 = vector.load %arg13[%c0_10, %c0_11] : memref<2x32xf32, #tpu.memory_space<vmem>>, vector<2x32xf32>
      tpu.vector_store %arg13[%c0_10, %c0_11], %12 {strides = array<i32>} : memref<2x32xf32, #tpu.memory_space<vmem>>, vector<2x32xf32>,
    } else {
    }
    %c0 = arith.constant 0 : index
    %c0_1 = arith.constant 0 : index
    %3 = vector.load %arg13[%c0, %c0_1] : memref<2x32xf32, #tpu.memory_space<vmem>>, vector<2x32xf32>
    %c0_2 = arith.constant 0 : index
    %c0_3 = arith.constant 0 : index
    %4 = vector.load %arg1[%c0_2, %c0_3] : memref<2x4096xbf16, #tpu.memory_space<vmem>>, vector<2x4096xbf16>
    %c0_4 = arith.constant 0 : index
    %c0_5 = arith.constant 0 : index
    %5 = vector.load %arg2[%c0_4, %c0_5] : memref<4096x32xbf16, #tpu.memory_space<vmem>>, vector<4096x32xbf16>
    %cst = arith.constant dense<0.000000e+00> : vector<2x32xf32>
    %6 = tpu.matmul %4, %5, %cst {dimension_numbers = #tpu.dot_dimension_numbers<[1], [0], [0], [1], [0, 0, 1, 1], [], []>} : vector<2x4096xbf16>, vector<4096x32xbf16>, vector<2x32xf32> -> vector<2x32xf32>
    %7 = arith.addf %3, %6 : vector<2x32xf32>
    %c0_6 = arith.constant 0 : index
    %c0_7 = arith.constant 0 : index
    %8 = vector.load %arg13[%c0_6, %c0_7] : memref<2x32xf32, #tpu.memory_space<vmem>>, vector<2x32xf32>
    tpu.vector_store %arg13[%c0_6, %c0_7], %7 {strides = array<i32>} : memref<2x32xf32, #tpu.memory_space<vmem>>, vector<2x32xf32>,
    %c1_i32 = arith.constant 1 : i32
    %9 = arith.cmpi eq, %arg0, %c1_i32 : i32
    %10 = arith.extui %9 : i1 to i32
    %c0_i32_8 = arith.constant 0 : i32
    %11 = arith.cmpi ne, %10, %c0_i32_8 : i32
    scf.if %11 {
      %c0_9 = arith.constant 0 : index
      %c0_10 = arith.constant 0 : index
      %12 = vector.load %arg13[%c0_9, %c0_10] : memref<2x32xf32, #tpu.memory_space<vmem>>, vector<2x32xf32>
      %c0_11 = arith.constant 0 : index
      %c0_12 = arith.constant 0 : index
      %13 = vector.load %arg3[%c0_11, %c0_12] : memref<2x64xf32, #tpu.memory_space<vmem>>, vector<2x64xf32>
      %c0_13 = arith.constant 0 : index
      %c0_14 = arith.constant 0 : index
      %14 = vector.load %arg4[%c0_13, %c0_14] : memref<64x32xf32, #tpu.memory_space<vmem>>, vector<64x32xf32>
      %cst_15 = arith.constant dense<0.000000e+00> : vector<2x32xf32>
      %15 = tpu.matmul %13, %14, %cst_15 {dimension_numbers = #tpu.dot_dimension_numbers<[1], [0], [0], [1], [0, 0, 1, 1], [], []>} : vector<2x64xf32>, vector<64x32xf32>, vector<2x32xf32> -> vector<2x32xf32>
      %16 = arith.addf %12, %15 : vector<2x32xf32>
      %c0_16 = arith.constant 0 : index
      %c0_17 = arith.constant 0 : index
      %17 = vector.load %arg5[%c0_16, %c0_17] : memref<1x8xf32, #tpu.memory_space<vmem>>, vector<1x8xf32>
      %c0_18 = arith.constant 0 : index
      %c0_19 = arith.constant 0 : index
      %18 = vector.load %arg6[%c0_18, %c0_19] : memref<8x32xf32, #tpu.memory_space<vmem>>, vector<8x32xf32>
      %cst_20 = arith.constant dense<0.000000e+00> : vector<1x32xf32>
      %19 = tpu.matmul %17, %18, %cst_20 {dimension_numbers = #tpu.dot_dimension_numbers<[1], [0], [0], [1], [0, 0, 1, 1], [], []>} : vector<1x8xf32>, vector<8x32xf32>, vector<1x32xf32> -> vector<1x32xf32>
      %20 = vector.broadcast %19 : vector<1x32xf32> to vector<2x32xf32>
      %21 = arith.addf %16, %20 : vector<2x32xf32>
      %c0_21 = arith.constant 0 : index
      %c0_22 = arith.constant 0 : index
      %22 = vector.load %arg7[%c0_21, %c0_22] : memref<1x32xf32, #tpu.memory_space<vmem>>, vector<1x32xf32>
      %23 = vector.broadcast %22 : vector<1x32xf32> to vector<2x32xf32>
      %24 = arith.addf %21, %23 : vector<2x32xf32>
      %cst_23 = arith.constant 0.000000e+00 : f32
      %25 = vector.broadcast %cst_23 : f32 to vector<2x32xf32>
      %26 = arith.maximumf %24, %25 : vector<2x32xf32>
      %c0_24 = arith.constant 0 : index
      %c0_25 = arith.constant 0 : index
      %27 = vector.load %arg8[%c0_24, %c0_25] : memref<32x32xf32, #tpu.memory_space<vmem>>, vector<32x32xf32>
      %cst_26 = arith.constant dense<0.000000e+00> : vector<2x32xf32>
      %28 = tpu.matmul %26, %27, %cst_26 {dimension_numbers = #tpu.dot_dimension_numbers<[1], [0], [0], [1], [0, 0, 1, 1], [], []>} : vector<2x32xf32>, vector<32x32xf32>, vector<2x32xf32> -> vector<2x32xf32>
      %c0_27 = arith.constant 0 : index
      %c0_28 = arith.constant 0 : index
      %29 = vector.load %arg9[%c0_27, %c0_28] : memref<1x32xf32, #tpu.memory_space<vmem>>, vector<1x32xf32>
      %30 = vector.broadcast %29 : vector<1x32xf32> to vector<2x32xf32>
      %31 = arith.addf %28, %30 : vector<2x32xf32>
      %cst_29 = arith.constant 0.000000e+00 : f32
      %32 = vector.broadcast %cst_29 : f32 to vector<2x32xf32>
      %33 = arith.maximumf %31, %32 : vector<2x32xf32>
      %c0_30 = arith.constant 0 : index
      %c0_31 = arith.constant 0 : index
      %34 = vector.load %arg10[%c0_30, %c0_31] : memref<32x8xf32, #tpu.memory_space<vmem>>, vector<32x8xf32>
      %cst_32 = arith.constant dense<0.000000e+00> : vector<2x8xf32>
      %35 = tpu.matmul %33, %34, %cst_32 {dimension_numbers = #tpu.dot_dimension_numbers<[1], [0], [0], [1], [0, 0, 1, 1], [], []>} : vector<2x32xf32>, vector<32x8xf32>, vector<2x8xf32> -> vector<2x8xf32>
      %c0_33 = arith.constant 0 : index
      %c0_34 = arith.constant 0 : index
      %36 = vector.load %arg11[%c0_33, %c0_34] : memref<1x8xf32, #tpu.memory_space<vmem>>, vector<1x8xf32>
      %37 = vector.broadcast %36 : vector<1x8xf32> to vector<2x8xf32>
      %38 = arith.addf %35, %37 : vector<2x8xf32>
      %cst_35 = arith.constant dense<0.000000e+00> : vector<8xf32>
      %39 = vector.multi_reduction <add>, %38, %cst_35 [0] : vector<2x8xf32> to vector<8xf32>
      %40 = vector.shape_cast %39 : vector<8xf32> to vector<1x8xf32>
      %cst_36 = arith.constant 2.000000e+00 : f32
      %41 = vector.broadcast %cst_36 : f32 to vector<1x8xf32>
      %42 = arith.divf %40, %41 : vector<1x8xf32>
      %c0_37 = arith.constant 0 : index
      %c0_38 = arith.constant 0 : index
      %43 = vector.load %arg12[%c0_37, %c0_38] : memref<1x8xf32, #tpu.memory_space<vmem>>, vector<1x8xf32>
      tpu.vector_store %arg12[%c0_37, %c0_38], %42 {strides = array<i32>} : memref<1x8xf32, #tpu.memory_space<vmem>>, vector<1x8xf32>,
    } else {
    }
    return
  }
  func.func @transform_0(%arg0: i32) -> (i32, i32) {
    %c0_i32 = arith.constant 0 : i32
    %c0_i32_0 = arith.constant 0 : i32
    return %c0_i32, %arg0 : i32, i32
  }
  func.func @transform_1(%arg0: i32) -> (i32, i32) {
    %c0_i32 = arith.constant 0 : i32
    %c0_i32_0 = arith.constant 0 : i32
    return %arg0, %c0_i32 : i32, i32
  }
  func.func @transform_2(%arg0: i32) -> (i32, i32) {
    %c0_i32 = arith.constant 0 : i32
    %c0_i32_0 = arith.constant 0 : i32
    %c0_i32_1 = arith.constant 0 : i32
    return %c0_i32, %c0_i32_0 : i32, i32
  }
  func.func @transform_3(%arg0: i32) -> (i32, i32) {
    %c0_i32 = arith.constant 0 : i32
    %c0_i32_0 = arith.constant 0 : i32
    %c0_i32_1 = arith.constant 0 : i32
    return %c0_i32, %c0_i32_0 : i32, i32
  }
  func.func @transform_4(%arg0: i32) -> (i32, i32) {
    %c0_i32 = arith.constant 0 : i32
    %c0_i32_0 = arith.constant 0 : i32
    %c0_i32_1 = arith.constant 0 : i32
    return %c0_i32, %c0_i32_0 : i32, i32
  }
  func.func @transform_5(%arg0: i32) -> (i32, i32) {
    %c0_i32 = arith.constant 0 : i32
    %c0_i32_0 = arith.constant 0 : i32
    %c0_i32_1 = arith.constant 0 : i32
    return %c0_i32, %c0_i32_0 : i32, i32
  }
  func.func @transform_6(%arg0: i32) -> (i32, i32) {
    %c0_i32 = arith.constant 0 : i32
    %c0_i32_0 = arith.constant 0 : i32
    %c0_i32_1 = arith.constant 0 : i32
    return %c0_i32, %c0_i32_0 : i32, i32
  }
  func.func @transform_7(%arg0: i32) -> (i32, i32) {
    %c0_i32 = arith.constant 0 : i32
    %c0_i32_0 = arith.constant 0 : i32
    %c0_i32_1 = arith.constant 0 : i32
    return %c0_i32, %c0_i32_0 : i32, i32
  }
  func.func @transform_8(%arg0: i32) -> (i32, i32) {
    %c0_i32 = arith.constant 0 : i32
    %c0_i32_0 = arith.constant 0 : i32
    %c0_i32_1 = arith.constant 0 : i32
    return %c0_i32, %c0_i32_0 : i32, i32
  }
  func.func @transform_9(%arg0: i32) -> (i32, i32) {
    %c0_i32 = arith.constant 0 : i32
    %c0_i32_0 = arith.constant 0 : i32
    %c0_i32_1 = arith.constant 0 : i32
    return %c0_i32, %c0_i32_0 : i32, i32
  }
  func.func @transform_10(%arg0: i32) -> (i32, i32) {
    %c0_i32 = arith.constant 0 : i32
    %c0_i32_0 = arith.constant 0 : i32
    %c0_i32_1 = arith.constant 0 : i32
    return %c0_i32, %c0_i32_0 : i32, i32
  }
  func.func @transform_11(%arg0: i32) -> (i32, i32) {
    %c0_i32 = arith.constant 0 : i32
    %c0_i32_0 = arith.constant 0 : i32
    %c0_i32_1 = arith.constant 0 : i32
    return %c0_i32, %c0_i32_0 : i32, i32
  }
}

</mosaic_0001>

<llo_original>
// kernel: gradient_model_forward.2
$region0: #{gradient_model_forward.2}
  #allocation0 [shape = 'u32[]', space=smem, size = 0x4, offset = 0x4, fixed_abs, tag = 'smem constant byte address 0x4 - core index']
  #allocation1 [shape = 'u32[144,128]{1,0:T(1,128)}', space=vmem, size = 0x12000, scoped, tag = 'internal scratch']
  %s0 = inlined_call_operand.vmem [shape: f32[128,36], index: 0, kind: input, shape index: {}]
  %s1 = inlined_call_operand.hbm [shape: f32[36,128], index: 1, kind: input, shape index: {}]
  %s2 = inlined_call_operand.hbm [shape: f32[1,128], index: 2, kind: input, shape index: {}]
  %s3 = inlined_call_operand.hbm [shape: f32[1,128], index: 3, kind: input, shape index: {}]
  %s4 = inlined_call_operand.hbm [shape: f32[1,128], index: 4, kind: input, shape index: {}]
  %s5 = inlined_call_operand.hbm [shape: f32[128,128], index: 5, kind: input, shape index: {}]
  %s6 = inlined_call_operand.vmem [shape: bf16[128,128], index: 6, kind: output, shape index: {}]
  %s7 = sld [smem:[#allocation0]]
  $region54: #{gradient_model_forward.2} parent=0
    _
  %s9 = ssub.s32 1, %s7
  %s10 = scalar_select 0, %s9, %s7
  $region1: #{gradient_model_forward.2} parent=0
    #allocation2 [shape = 'u8[20480]{0}', space=vmem, size = 0x5000, scoped, tag = 'input window, operand 1, single buffered']
    #allocation3 [shape = 's32[1]{0}', space=sflag, size = 0x4, scoped, tag = 'scoped memory for gradient_model_forward.2']
    #allocation4 [shape = 'u8[512]{0}', space=vmem, size = 0x400, scoped, tag = 'input window, operand 2, single buffered']
    #allocation5 [shape = 's32[1]{0}', space=sflag, size = 0x4, scoped, tag = 'scoped memory for gradient_model_forward.2']
    #allocation6 [shape = 'u8[512]{0}', space=vmem, size = 0x400, scoped, tag = 'input window, operand 3, single buffered']
    #allocation7 [shape = 'u8[512]{0}', space=vmem, size = 0x400, scoped, tag = 'input window, operand 4, single buffered']
    #allocation8 [shape = 's32[1]{0}', space=sflag, size = 0x4, scoped, tag = 'scoped memory for gradient_model_forward.2']
    #allocation9 [shape = 'u8[65536]{0}', space=vmem, size = 0x10000, scoped, tag = 'input window, operand 5, single buffered']
    %11 = vsyncpa [#allocation3], 0
    %12 = vsyncpa [#allocation5], 0
    %13 = vsyncpa [#allocation8], 0
    // Predicated region
    $region2: #{gradient_model_forward.2} parent=1 // pred_check
      _
    $region3: #{gradient_model_forward.2} parent=1 // pred_check_branch
      %15 = sbr.rel (0) target = $region5
    $region4: #{gradient_model_forward.2} parent=1 // pred_region
      _
    $region5: #{gradient_model_forward.2} parent=1 // pred_fallthru
      _
    // Predicated region
    $region6: #{gradient_model_forward.2} parent=1 // pred_check
      _
    $region7: #{gradient_model_forward.2} parent=1 // pred_check_branch
      %17 = sbr.rel (0) target = $region9
    $region8: #{gradient_model_forward.2} parent=1 // pred_region
      %s19 = ssub.s32 640, 640
      %20 = vsyncadd [#allocation3], %s19
      %s21 = sshll.u32 [#allocation2], 4
      %s22 = int_to_ptr.vmem [resolvable:$true] %s21
      %27 = dma.hbm_to_vmem [thread:$0]  %s1, 640, %s22, [#allocation3], 128, 128, 8
    $region9: #{gradient_model_forward.2} parent=1 // pred_fallthru
      _
    // Predicated region
    $region10: #{gradient_model_forward.2} parent=1 // pred_check
      _
    $region11: #{gradient_model_forward.2} parent=1 // pred_check_branch
      %29 = sbr.rel (0) target = $region13
    $region12: #{gradient_model_forward.2} parent=1 // pred_region
      %s31 = ssub.s32 16, 16
      %32 = vsyncadd [#allocation5], %s31
      %s34 = sshll.u32 [#allocation4], 4
      %s35 = int_to_ptr.vmem [resolvable:$true] %s34
      %37 = dma.hbm_to_vmem [thread:$0]  %s2, 16, %s35, [#allocation5]
    $region13: #{gradient_model_forward.2} parent=1 // pred_fallthru
      _
    // Predicated region
    $region14: #{gradient_model_forward.2} parent=1 // pred_check
      _
    $region15: #{gradient_model_forward.2} parent=1 // pred_check_branch
      %39 = sbr.rel (0) target = $region17
    $region16: #{gradient_model_forward.2} parent=1 // pred_region
      %s41 = ssub.s32 16, 16
      %42 = vsyncadd [#allocation5], %s41
      %s44 = sshll.u32 [#allocation6], 4
      %s45 = int_to_ptr.vmem [resolvable:$true] %s44
      %47 = dma.hbm_to_vmem [thread:$0]  %s3, 16, %s45, [#allocation5]
    $region17: #{gradient_model_forward.2} parent=1 // pred_fallthru
      _
    // Predicated region
    $region18: #{gradient_model_forward.2} parent=1 // pred_check
      _
    $region19: #{gradient_model_forward.2} parent=1 // pred_check_branch
      %49 = sbr.rel (0) target = $region21
    $region20: #{gradient_model_forward.2} parent=1 // pred_region
      %s51 = ssub.s32 16, 16
      %52 = vsyncadd [#allocation8], %s51
      %s54 = sshll.u32 [#allocation7], 4
      %s55 = int_to_ptr.vmem [resolvable:$true] %s54
      %57 = dma.hbm_to_vmem [thread:$0]  %s4, 16, %s55, [#allocation8]
    $region21: #{gradient_model_forward.2} parent=1 // pred_fallthru
      _
    // Predicated region
    $region22: #{gradient_model_forward.2} parent=1 // pred_check
      _
    $region23: #{gradient_model_forward.2} parent=1 // pred_check_branch
      %59 = sbr.rel (0) target = $region25
    $region24: #{gradient_model_forward.2} parent=1 // pred_region
      %s61 = ssub.s32 2048, 2048
      %62 = vsyncadd [#allocation8], %s61
      %s63 = sshll.u32 [#allocation9], 4
      %s64 = int_to_ptr.vmem [resolvable:$true] %s63
      %69 = dma.hbm_to_vmem [thread:$0]  %s5, 2048, %s64, [#allocation8], 128, 128, 8
    $region25: #{gradient_model_forward.2} parent=1 // pred_fallthru
      _
    // Predicated region
    $region26: #{gradient_model_forward.2} parent=1 // pred_check
      _
    $region27: #{gradient_model_forward.2} parent=1 // pred_check_branch
      %71 = sbr.rel (0) target = $region29
    $region28: #{gradient_model_forward.2} parent=1 // pred_region
      %72 = dma.done [#allocation3], 640
    $region29: #{gradient_model_forward.2} parent=1 // pred_fallthru
      _
    // Predicated region
    $region30: #{gradient_model_forward.2} parent=1 // pred_check
      _
    $region31: #{gradient_model_forward.2} parent=1 // pred_check_branch
      %74 = sbr.rel (0) target = $region33
    $region32: #{gradient_model_forward.2} parent=1 // pred_region
      %75 = dma.done [#allocation5], 16
    $region33: #{gradient_model_forward.2} parent=1 // pred_fallthru
      _
    // Predicated region
    $region34: #{gradient_model_forward.2} parent=1 // pred_check
      _
    $region35: #{gradient_model_forward.2} parent=1 // pred_check_branch
      %77 = sbr.rel (0) target = $region37
    $region36: #{gradient_model_forward.2} parent=1 // pred_region
      %78 = dma.done [#allocation5], 16
    $region37: #{gradient_model_forward.2} parent=1 // pred_fallthru
      _
    // Predicated region
    $region38: #{gradient_model_forward.2} parent=1 // pred_check
      _
    $region39: #{gradient_model_forward.2} parent=1 // pred_check_branch
      %80 = sbr.rel (0) target = $region41
    $region40: #{gradient_model_forward.2} parent=1 // pred_region
      %81 = dma.done [#allocation8], 16
    $region41: #{gradient_model_forward.2} parent=1 // pred_fallthru
      _
    // Predicated region
    $region42: #{gradient_model_forward.2} parent=1 // pred_check
      _
    $region43: #{gradient_model_forward.2} parent=1 // pred_check_branch
      %83 = sbr.rel (0) target = $region45
    $region44: #{gradient_model_forward.2} parent=1 // pred_region
      %84 = dma.done [#allocation8], 2048
    $region45: #{gradient_model_forward.2} parent=1 // pred_fallthru
      _
    %v85 = vld [vmem:[%s0] sm:$0xff]
    %v86 = vld [vmem:[%s0 + $0x8] sm:$0xff]
    %v87 = vld [vmem:[%s0 + $0x10] sm:$0xff]
    %v88 = vld [vmem:[%s0 + $0x18] sm:$0xff]
    %v89 = vld [vmem:[%s0 + $0x20] sm:$0xff]
    %v90 = vld [vmem:[%s0 + $0x28] sm:$0xff]
    %v91 = vld [vmem:[%s0 + $0x30] sm:$0xff]
    %v92 = vld [vmem:[%s0 + $0x38] sm:$0xff]
    %v93 = vld [vmem:[%s0 + $0x40] sm:$0xff]
    %v94 = vld [vmem:[%s0 + $0x48] sm:$0xff]
    %v95 = vld [vmem:[%s0 + $0x50] sm:$0xff]
    %v96 = vld [vmem:[%s0 + $0x58] sm:$0xff]
    %v97 = vld [vmem:[%s0 + $0x60] sm:$0xff]
    %v98 = vld [vmem:[%s0 + $0x68] sm:$0xff]
    %v99 = vld [vmem:[%s0 + $0x70] sm:$0xff]
    %v100 = vld [vmem:[%s0 + $0x78] sm:$0xff]
    %v101 = vld [vmem:[#allocation2] sm:$0xff]
    %v102 = vld [vmem:[#allocation2 + $0x8] sm:$0xff]
    %v103 = vld [vmem:[#allocation2 + $0x10] sm:$0xff]
    %v104 = vld [vmem:[#allocation2 + $0x18] sm:$0xff]
    %v105 = vld [vmem:[#allocation2 + $0x20] sm:$0xf]
    %v106 = vld [vmem:[#allocation4] sm:$0x1]
    %v108 = vlaneseq
    %v109 = vshrl.u32 %v108, 7
    %v110 = vsub.s32 0, %v109
    %v111 = vrot.slane %v106, %v110
    %vm113 = vcmask 293888
    %v115 = vsel %vm113, %v85, 0
    %v118 = vsel %vm113, %v86, 0
    %v121 = vsel %vm113, %v87, 0
    %v124 = vsel %vm113, %v88, 0
    %v127 = vsel %vm113, %v89, 0
    %v130 = vsel %vm113, %v90, 0
    %v133 = vsel %vm113, %v91, 0
    %v136 = vsel %vm113, %v92, 0
    %v139 = vsel %vm113, %v93, 0
    %v142 = vsel %vm113, %v94, 0
    %v145 = vsel %vm113, %v95, 0
    %v148 = vsel %vm113, %v96, 0
    %v151 = vsel %vm113, %v97, 0
    %v154 = vsel %vm113, %v98, 0
    %v157 = vsel %vm113, %v99, 0
    %v160 = vsel %vm113, %v100, 0
    %vm162 = vcmask 1043456
    %v164 = vsel %vm162, %v105, 0
    %166 = vmatprep.subr.mxu0 0.0
    %167 = vmatpush1.msra.mxu0 0.0
    %168 = vmatprep.subr.mxu0 0.0
    %169 = vmatpush1.msra.mxu0 0.0
    %170 = vmatprep.subr.mxu0 0.0
    %171 = vmatpush1.msra.mxu0 0.0
    %172 = vmatprep.subr.mxu0 0.0
    %173 = vmatpush1.msra.mxu0 0.0
    %174 = vmatprep.subr.mxu0 0.0
    %175 = vmatpush1.msra.mxu0 0.0
    %176 = vmatprep.subr.mxu0 0.0
    %177 = vmatpush1.msra.mxu0 0.0
    %178 = vmatprep.subr.mxu0 0.0
    %179 = vmatpush1.msra.mxu0 0.0
    %180 = vmatprep.subr.mxu0 0.0
    %181 = vmatpush1.msra.mxu0 0.0
    %182 = vmatprep.subr.mxu0 0.0
    %183 = vmatpush1.msra.mxu0 0.0
    %184 = vmatprep.subr.mxu0 0.0
    %185 = vmatpush1.msra.mxu0 0.0
    %186 = vmatprep.subr.mxu0 0.0
    %187 = vmatpush1.msra.mxu0 0.0
    %188 = vmatprep.subr.mxu0 0.0
    %189 = vmatpush1.msra.mxu0 %v164
    %190 = vmatprep.subr.mxu0 0.0
    %191 = vmatpush1.msra.mxu0 %v104
    %192 = vmatprep.subr.mxu0 0.0
    %193 = vmatpush1.msra.mxu0 %v103
    %194 = vmatprep.subr.mxu0 0.0
    %195 = vmatpush1.msra.mxu0 %v102
    %196 = vmatprep.subr.mxu0 0.0
    %197 = vmatpush1.msra.mxu0 %v101
    %198 = vmatprep.subr.mxu0 0.0
    %199 = vmatpush2.msra.mxu0 0.0
    %200 = vmatprep.subr.mxu0 0.0
    %201 = vmatpush2.msra.mxu0 0.0
    %202 = vmatprep.subr.mxu0 0.0
    %203 = vmatpush2.msra.mxu0 0.0
    %204 = vmatprep.subr.mxu0 0.0
    %205 = vmatpush2.msra.mxu0 0.0
    %206 = vmatprep.subr.mxu0 0.0
    %207 = vmatpush2.msra.mxu0 0.0
    %208 = vmatprep.subr.mxu0 0.0
    %209 = vmatpush2.msra.mxu0 0.0
    %210 = vmatprep.subr.mxu0 0.0
    %211 = vmatpush2.msra.mxu0 0.0
    %212 = vmatprep.subr.mxu0 0.0
    %213 = vmatpush2.msra.mxu0 0.0
    %214 = vmatprep.subr.mxu0 0.0
    %215 = vmatpush2.msra.mxu0 0.0
    %216 = vmatprep.subr.mxu0 0.0
    %217 = vmatpush2.msra.mxu0 0.0
    %218 = vmatprep.subr.mxu0 0.0
    %219 = vmatpush2.msra.mxu0 0.0
    %220 = vmatprep.subr.mxu0 0.0
    %221 = vmatpush2.msra.mxu0 0.0
    %222 = vmatprep.subr.mxu0 0.0
    %223 = vmatpush2.msra.mxu0 0.0
    %224 = vmatprep.subr.mxu0 0.0
    %225 = vmatpush2.msra.mxu0 0.0
    %226 = vmatprep.subr.mxu0 0.0
    %227 = vmatpush2.msra.mxu0 0.0
    %228 = vmatprep.subr.mxu0 0.0
    %229 = vmatpush2.msra.mxu0 0.0
    %230 = vmatprep.mubr.f32.mxu0 0.0
    %231 = vmatmul.mubr.f32.gmra.mxu0 %v115
    %v232 = vpop.f32.mrf.mxu0
    %v233 = vadd.f32 %v111, %v232
    %v234 = vpop.f32.mrf.mxu0
    %235 = vmatprep.mubr.f32.mxu0 0.0
    %236 = vmatmul.mubr.f32.gmra.mxu0 %v118
    %v237 = vpop.f32.mrf.mxu0
    %v238 = vadd.f32 %v111, %v237
    %v239 = vpop.f32.mrf.mxu0
    %240 = vmatprep.mubr.f32.mxu0 0.0
    %241 = vmatmul.mubr.f32.gmra.mxu0 %v121
    %v242 = vpop.f32.mrf.mxu0
    %v243 = vadd.f32 %v111, %v242
    %v244 = vpop.f32.mrf.mxu0
    %245 = vmatprep.mubr.f32.mxu0 0.0
    %246 = vmatmul.mubr.f32.gmra.mxu0 %v124
    %v247 = vpop.f32.mrf.mxu0
    %v248 = vadd.f32 %v111, %v247
    %v249 = vpop.f32.mrf.mxu0
    %250 = vmatprep.mubr.f32.mxu0 0.0
    %251 = vmatmul.mubr.f32.gmra.mxu0 %v127
    %v252 = vpop.f32.mrf.mxu0
    %v253 = vadd.f32 %v111, %v252
    %v254 = vpop.f32.mrf.mxu0
    %255 = vmatprep.mubr.f32.mxu0 0.0
    %256 = vmatmul.mubr.f32.gmra.mxu0 %v130
    %v257 = vpop.f32.mrf.mxu0
    %v258 = vadd.f32 %v111, %v257
    %v259 = vpop.f32.mrf.mxu0
    %260 = vmatprep.mubr.f32.mxu0 0.0
    %261 = vmatmul.mubr.f32.gmra.mxu0 %v133
    %v262 = vpop.f32.mrf.mxu0
    %v263 = vadd.f32 %v111, %v262
    %v264 = vpop.f32.mrf.mxu0
    %265 = vmatprep.mubr.f32.mxu0 0.0
    %266 = vmatmul.mubr.f32.gmra.mxu0 %v136
    %v267 = vpop.f32.mrf.mxu0
    %v268 = vadd.f32 %v111, %v267
    %v269 = vpop.f32.mrf.mxu0
    %270 = vmatprep.mubr.f32.mxu0 0.0
    %271 = vmatmul.mubr.f32.gmra.mxu0 %v139
    %v272 = vpop.f32.mrf.mxu0
    %v273 = vadd.f32 %v111, %v272
    %v274 = vpop.f32.mrf.mxu0
    %275 = vmatprep.mubr.f32.mxu0 0.0
    %276 = vmatmul.mubr.f32.gmra.mxu0 %v142
    %v277 = vpop.f32.mrf.mxu0
    %v278 = vadd.f32 %v111, %v277
    %v279 = vpop.f32.mrf.mxu0
    %280 = vmatprep.mubr.f32.mxu0 0.0
    %281 = vmatmul.mubr.f32.gmra.mxu0 %v145
    %v282 = vpop.f32.mrf.mxu0
    %v283 = vadd.f32 %v111, %v282
    %v284 = vpop.f32.mrf.mxu0
    %285 = vmatprep.mubr.f32.mxu0 0.0
    %286 = vmatmul.mubr.f32.gmra.mxu0 %v148
    %v287 = vpop.f32.mrf.mxu0
    %v288 = vadd.f32 %v111, %v287
    %v289 = vpop.f32.mrf.mxu0
    %290 = vmatprep.mubr.f32.mxu0 0.0
    %291 = vmatmul.mubr.f32.gmra.mxu0 %v151
    %v292 = vpop.f32.mrf.mxu0
    %v293 = vadd.f32 %v111, %v292
    %v294 = vpop.f32.mrf.mxu0
    %295 = vmatprep.mubr.f32.mxu0 0.0
    %296 = vmatmul.mubr.f32.gmra.mxu0 %v154
    %v297 = vpop.f32.mrf.mxu0
    %v298 = vadd.f32 %v111, %v297
    %v299 = vpop.f32.mrf.mxu0
    %300 = vmatprep.mubr.f32.mxu0 0.0
    %301 = vmatmul.mubr.f32.gmra.mxu0 %v157
    %v302 = vpop.f32.mrf.mxu0
    %v303 = vadd.f32 %v111, %v302
    %v304 = vpop.f32.mrf.mxu0
    %305 = vmatprep.mubr.f32.mxu0 0.0
    %306 = vmatmul.mubr.f32.gmra.mxu0 %v160
    %v307 = vpop.f32.mrf.mxu0
    %v308 = vadd.f32 %v111, %v307
    %v309 = vpop.f32.mrf.mxu0
    %310 = vdwg.mxu0
    %v311 = vadd.f32 %v233, %v238
    %v312 = vadd.f32 %v311, %v243
    %v313 = vadd.f32 %v312, %v248
    %v314 = vadd.f32 %v313, %v253
    %v315 = vadd.f32 %v314, %v258
    %v316 = vadd.f32 %v315, %v263
    %v317 = vadd.f32 %v316, %v268
    %v318 = vadd.f32 %v317, %v273
    %v319 = vadd.f32 %v318, %v278
    %v320 = vadd.f32 %v319, %v283
    %v321 = vadd.f32 %v320, %v288
    %v322 = vadd.f32 %v321, %v293
    %v323 = vadd.f32 %v322, %v298
    %v324 = vadd.f32 %v323, %v303
    %v325 = vadd.f32 %v324, %v308
    %v326 = vrot.slane %v325, 4
    %v327 = vadd.f32 %v325, %v326
    %v328 = vrot.slane %v327, 2
    %v329 = vadd.f32 %v327, %v328
    %v330 = vrot.slane %v329, 1
    %v331 = vadd.f32 %v329, %v330
    %v332 = vrcp.pop 128.0
    %v333 = vmul.f32 %v331, %v332
    %v334 = vld [vmem:[#allocation9] sm:$0xff]
    %v335 = vld [vmem:[#allocation9 + $0x8] sm:$0xff]
    %v336 = vld [vmem:[#allocation9 + $0x10] sm:$0xff]
    %v337 = vld [vmem:[#allocation9 + $0x18] sm:$0xff]
    %v338 = vld [vmem:[#allocation9 + $0x20] sm:$0xff]
    %v339 = vld [vmem:[#allocation9 + $0x28] sm:$0xff]
    %v340 = vld [vmem:[#allocation9 + $0x30] sm:$0xff]
    %v341 = vld [vmem:[#allocation9 + $0x38] sm:$0xff]
    %v342 = vld [vmem:[#allocation9 + $0x40] sm:$0xff]
    %v343 = vld [vmem:[#allocation9 + $0x48] sm:$0xff]
    %v344 = vld [vmem:[#allocation9 + $0x50] sm:$0xff]
    %v345 = vld [vmem:[#allocation9 + $0x58] sm:$0xff]
    %v346 = vld [vmem:[#allocation9 + $0x60] sm:$0xff]
    %v347 = vld [vmem:[#allocation9 + $0x68] sm:$0xff]
    %v348 = vld [vmem:[#allocation9 + $0x70] sm:$0xff]
    %v349 = vld [vmem:[#allocation9 + $0x78] sm:$0xff]
    %350 = vmatprep.subr.mxu0 0.0
    %351 = vmatpush1.msra.mxu0 %v349
    %352 = vmatprep.subr.mxu0 0.0
    %353 = vmatpush1.msra.mxu0 %v348
    %354 = vmatprep.subr.mxu0 0.0
    %355 = vmatpush1.msra.mxu0 %v347
    %356 = vmatprep.subr.mxu0 0.0
    %357 = vmatpush1.msra.mxu0 %v346
    %358 = vmatprep.subr.mxu0 0.0
    %359 = vmatpush1.msra.mxu0 %v345
    %360 = vmatprep.subr.mxu0 0.0
    %361 = vmatpush1.msra.mxu0 %v344
    %362 = vmatprep.subr.mxu0 0.0
    %363 = vmatpush1.msra.mxu0 %v343
    %364 = vmatprep.subr.mxu0 0.0
    %365 = vmatpush1.msra.mxu0 %v342
    %366 = vmatprep.subr.mxu0 0.0
    %367 = vmatpush1.msra.mxu0 %v341
    %368 = vmatprep.subr.mxu0 0.0
    %369 = vmatpush1.msra.mxu0 %v340
    %370 = vmatprep.subr.mxu0 0.0
    %371 = vmatpush1.msra.mxu0 %v339
    %372 = vmatprep.subr.mxu0 0.0
    %373 = vmatpush1.msra.mxu0 %v338
    %374 = vmatprep.subr.mxu0 0.0
    %375 = vmatpush1.msra.mxu0 %v337
    %376 = vmatprep.subr.mxu0 0.0
    %377 = vmatpush1.msra.mxu0 %v336
    %378 = vmatprep.subr.mxu0 0.0
    %379 = vmatpush1.msra.mxu0 %v335
    %380 = vmatprep.subr.mxu0 0.0
    %381 = vmatpush1.msra.mxu0 %v334
    %382 = vmatprep.subr.mxu0 0.0
    %383 = vmatpush2.msra.mxu0 0.0
    %384 = vmatprep.subr.mxu0 0.0
    %385 = vmatpush2.msra.mxu0 0.0
    %386 = vmatprep.subr.mxu0 0.0
    %387 = vmatpush2.msra.mxu0 0.0
    %388 = vmatprep.subr.mxu0 0.0
    %389 = vmatpush2.msra.mxu0 0.0
    %390 = vmatprep.subr.mxu0 0.0
    %391 = vmatpush2.msra.mxu0 0.0
    %392 = vmatprep.subr.mxu0 0.0
    %393 = vmatpush2.msra.mxu0 0.0
    %394 = vmatprep.subr.mxu0 0.0
    %395 = vmatpush2.msra.mxu0 0.0
    %396 = vmatprep.subr.mxu0 0.0
    %397 = vmatpush2.msra.mxu0 0.0
    %398 = vmatprep.subr.mxu0 0.0
    %399 = vmatpush2.msra.mxu0 0.0
    %400 = vmatprep.subr.mxu0 0.0
    %401 = vmatpush2.msra.mxu0 0.0
    %402 = vmatprep.subr.mxu0 0.0
    %403 = vmatpush2.msra.mxu0 0.0
    %404 = vmatprep.subr.mxu0 0.0
    %405 = vmatpush2.msra.mxu0 0.0
    %406 = vmatprep.subr.mxu0 0.0
    %407 = vmatpush2.msra.mxu0 0.0
    %408 = vmatprep.subr.mxu0 0.0
    %409 = vmatpush2.msra.mxu0 0.0
    %410 = vmatprep.subr.mxu0 0.0
    %411 = vmatpush2.msra.mxu0 0.0
    %412 = vmatprep.subr.mxu0 0.0
    %413 = vmatpush2.msra.mxu0 0.0
    %414 = vmatprep.mubr.f32.mxu0 0.0
    %415 = vmatmul.mubr.f32.gmra.mxu0 %v333
    %v416 = vpop.f32.mrf.mxu0
    %v417 = vadd.f32 0.0, %v416
    %v418 = vpop.f32.mrf.mxu0
    %419 = vdwg.mxu0
    %v420 = vmul.f32 %v233, %v233
    %v421 = vmul.f32 %v238, %v238
    %v422 = vmul.f32 %v243, %v243
    %v423 = vmul.f32 %v248, %v248
    %v424 = vmul.f32 %v253, %v253
    %v425 = vmul.f32 %v258, %v258
    %v426 = vmul.f32 %v263, %v263
    %v427 = vmul.f32 %v268, %v268
    %v428 = vmul.f32 %v273, %v273
    %v429 = vmul.f32 %v278, %v278
    %v430 = vmul.f32 %v283, %v283
    %v431 = vmul.f32 %v288, %v288
    %v432 = vmul.f32 %v293, %v293
    %v433 = vmul.f32 %v298, %v298
    %v434 = vmul.f32 %v303, %v303
    %v435 = vmul.f32 %v308, %v308
    %v436 = vadd.f32 %v420, %v421
    %v437 = vadd.f32 %v436, %v422
    %v438 = vadd.f32 %v437, %v423
    %v439 = vadd.f32 %v438, %v424
    %v440 = vadd.f32 %v439, %v425
    %v441 = vadd.f32 %v440, %v426
    %v442 = vadd.f32 %v441, %v427
    %v443 = vadd.f32 %v442, %v428
    %v444 = vadd.f32 %v443, %v429
    %v445 = vadd.f32 %v444, %v430
    %v446 = vadd.f32 %v445, %v431
    %v447 = vadd.f32 %v446, %v432
    %v448 = vadd.f32 %v447, %v433
    %v449 = vadd.f32 %v448, %v434
    %v450 = vadd.f32 %v449, %v435
    %v451 = vrot.slane %v450, 4
    %v452 = vadd.f32 %v450, %v451
    %v453 = vrot.slane %v452, 2
    %v454 = vadd.f32 %v452, %v453
    %v455 = vrot.slane %v454, 1
    %v456 = vadd.f32 %v454, %v455
    %v457 = vmul.f32 %v456, %v332
    %458 = vmatprep.subr.mxu0 0.0
    %459 = vmatpush1.msra.mxu0 %v349
    %460 = vmatprep.subr.mxu0 0.0
    %461 = vmatpush1.msra.mxu0 %v348
    %462 = vmatprep.subr.mxu0 0.0
    %463 = vmatpush1.msra.mxu0 %v347
    %464 = vmatprep.subr.mxu0 0.0
    %465 = vmatpush1.msra.mxu0 %v346
    %466 = vmatprep.subr.mxu0 0.0
    %467 = vmatpush1.msra.mxu0 %v345
    %468 = vmatprep.subr.mxu0 0.0
    %469 = vmatpush1.msra.mxu0 %v344
    %470 = vmatprep.subr.mxu0 0.0
    %471 = vmatpush1.msra.mxu0 %v343
    %472 = vmatprep.subr.mxu0 0.0
    %473 = vmatpush1.msra.mxu0 %v342
    %474 = vmatprep.subr.mxu0 0.0
    %475 = vmatpush1.msra.mxu0 %v341
    %476 = vmatprep.subr.mxu0 0.0
    %477 = vmatpush1.msra.mxu0 %v340
    %478 = vmatprep.subr.mxu0 0.0
    %479 = vmatpush1.msra.mxu0 %v339
    %480 = vmatprep.subr.mxu0 0.0
    %481 = vmatpush1.msra.mxu0 %v338
    %482 = vmatprep.subr.mxu0 0.0
    %483 = vmatpush1.msra.mxu0 %v337
    %484 = vmatprep.subr.mxu0 0.0
    %485 = vmatpush1.msra.mxu0 %v336
    %486 = vmatprep.subr.mxu0 0.0
    %487 = vmatpush1.msra.mxu0 %v335
    %488 = vmatprep.subr.mxu0 0.0
    %489 = vmatpush1.msra.mxu0 %v334
    %490 = vmatprep.subr.mxu0 0.0
    %491 = vmatpush2.msra.mxu0 0.0
    %492 = vmatprep.subr.mxu0 0.0
    %493 = vmatpush2.msra.mxu0 0.0
    %494 = vmatprep.subr.mxu0 0.0
    %495 = vmatpush2.msra.mxu0 0.0
    %496 = vmatprep.subr.mxu0 0.0
    %497 = vmatpush2.msra.mxu0 0.0
    %498 = vmatprep.subr.mxu0 0.0
    %499 = vmatpush2.msra.mxu0 0.0
    %500 = vmatprep.subr.mxu0 0.0
    %501 = vmatpush2.msra.mxu0 0.0
    %502 = vmatprep.subr.mxu0 0.0
    %503 = vmatpush2.msra.mxu0 0.0
    %504 = vmatprep.subr.mxu0 0.0
    %505 = vmatpush2.msra.mxu0 0.0
    %506 = vmatprep.subr.mxu0 0.0
    %507 = vmatpush2.msra.mxu0 0.0
    %508 = vmatprep.subr.mxu0 0.0
    %509 = vmatpush2.msra.mxu0 0.0
    %510 = vmatprep.subr.mxu0 0.0
    %511 = vmatpush2.msra.mxu0 0.0
    %512 = vmatprep.subr.mxu0 0.0
    %513 = vmatpush2.msra.mxu0 0.0
    %514 = vmatprep.subr.mxu0 0.0
    %515 = vmatpush2.msra.mxu0 0.0
    %516 = vmatprep.subr.mxu0 0.0
    %517 = vmatpush2.msra.mxu0 0.0
    %518 = vmatprep.subr.mxu0 0.0
    %519 = vmatpush2.msra.mxu0 0.0
    %520 = vmatprep.subr.mxu0 0.0
    %521 = vmatpush2.msra.mxu0 0.0
    %522 = vmatprep.mubr.f32.mxu0 0.0
    %523 = vmatmul.mubr.f32.gmra.mxu0 %v457
    %v524 = vpop.f32.mrf.mxu0
    %v525 = vadd.f32 0.0, %v524
    %v526 = vpop.f32.mrf.mxu0
    %527 = vdwg.mxu0
    %v528 = vmul.f32 %v417, %v417
    %v529 = vsub.f32 %v525, %v528
    %v530 = vlaneseq
    %v531 = vshrl.u32 %v530, 7
    %v532 = vsub.s32 0, %v531
    %v533 = vrot.slane %v417, %v532
    %v534 = vsub.f32 %v233, %v533
    %v535 = vsub.f32 %v238, %v533
    %v536 = vsub.f32 %v243, %v533
    %v537 = vsub.f32 %v248, %v533
    %v538 = vsub.f32 %v253, %v533
    %v539 = vsub.f32 %v258, %v533
    %v540 = vsub.f32 %v263, %v533
    %v541 = vsub.f32 %v268, %v533
    %v542 = vsub.f32 %v273, %v533
    %v543 = vsub.f32 %v278, %v533
    %v544 = vsub.f32 %v283, %v533
    %v545 = vsub.f32 %v288, %v533
    %v546 = vsub.f32 %v293, %v533
    %v547 = vsub.f32 %v298, %v533
    %v548 = vsub.f32 %v303, %v533
    %v549 = vsub.f32 %v308, %v533
    %v550 = vadd.f32 %v529, 1e-05
    %v551 = vrsqrt.pop %v550
    %v552 = vlaneseq
    %v553 = vshrl.u32 %v552, 7
    %v554 = vsub.s32 0, %v553
    %v555 = vrot.slane %v551, %v554
    %v556 = vmul.f32 %v534, %v555
    %v557 = vmul.f32 %v535, %v555
    %v558 = vmul.f32 %v536, %v555
    %v559 = vmul.f32 %v537, %v555
    %v560 = vmul.f32 %v538, %v555
    %v561 = vmul.f32 %v539, %v555
    %v562 = vmul.f32 %v540, %v555
    %v563 = vmul.f32 %v541, %v555
    %v564 = vmul.f32 %v542, %v555
    %v565 = vmul.f32 %v543, %v555
    %v566 = vmul.f32 %v544, %v555
    %v567 = vmul.f32 %v545, %v555
    %v568 = vmul.f32 %v546, %v555
    %v569 = vmul.f32 %v547, %v555
    %v570 = vmul.f32 %v548, %v555
    %v571 = vmul.f32 %v549, %v555
    %v572 = vld [vmem:[#allocation6] sm:$0x1]
    %v574 = vlaneseq
    %v575 = vshrl.u32 %v574, 7
    %v576 = vsub.s32 0, %v575
    %v577 = vrot.slane %v572, %v576
    %v579 = vmul.f32 %v556, %v577
    %v580 = vmul.f32 %v557, %v577
    %v581 = vmul.f32 %v558, %v577
    %v582 = vmul.f32 %v559, %v577
    %v583 = vmul.f32 %v560, %v577
    %v584 = vmul.f32 %v561, %v577
    %v585 = vmul.f32 %v562, %v577
    %v586 = vmul.f32 %v563, %v577
    %v587 = vmul.f32 %v564, %v577
    %v588 = vmul.f32 %v565, %v577
    %v589 = vmul.f32 %v566, %v577
    %v590 = vmul.f32 %v567, %v577
    %v591 = vmul.f32 %v568, %v577
    %v592 = vmul.f32 %v569, %v577
    %v593 = vmul.f32 %v570, %v577
    %v594 = vmul.f32 %v571, %v577
    %v595 = vld [vmem:[#allocation7] sm:$0x1]
    %v597 = vlaneseq
    %v598 = vshrl.u32 %v597, 7
    %v599 = vsub.s32 0, %v598
    %v600 = vrot.slane %v595, %v599
    %v602 = vadd.f32 %v579, %v600
    %v603 = vadd.f32 %v580, %v600
    %v604 = vadd.f32 %v581, %v600
    %v605 = vadd.f32 %v582, %v600
    %v606 = vadd.f32 %v583, %v600
    %v607 = vadd.f32 %v584, %v600
    %v608 = vadd.f32 %v585, %v600
    %v609 = vadd.f32 %v586, %v600
    %v610 = vadd.f32 %v587, %v600
    %v611 = vadd.f32 %v588, %v600
    %v612 = vadd.f32 %v589, %v600
    %v613 = vadd.f32 %v590, %v600
    %v614 = vadd.f32 %v591, %v600
    %v615 = vadd.f32 %v592, %v600
    %v616 = vadd.f32 %v593, %v600
    %v617 = vadd.f32 %v594, %v600
    %v618 = vmax.f32 %v602, 0.0
    %v619 = vmax.f32 %v603, 0.0
    %v620 = vmax.f32 %v604, 0.0
    %v621 = vmax.f32 %v605, 0.0
    %v622 = vmax.f32 %v606, 0.0
    %v623 = vmax.f32 %v607, 0.0
    %v624 = vmax.f32 %v608, 0.0
    %v625 = vmax.f32 %v609, 0.0
    %v626 = vmax.f32 %v610, 0.0
    %v627 = vmax.f32 %v611, 0.0
    %v628 = vmax.f32 %v612, 0.0
    %v629 = vmax.f32 %v613, 0.0
    %v630 = vmax.f32 %v614, 0.0
    %v631 = vmax.f32 %v615, 0.0
    %v632 = vmax.f32 %v616, 0.0
    %v633 = vmax.f32 %v617, 0.0
    %v634 = vpack.c.bf16 %v619, %v618
    %v635 = vpack.c.bf16 %v621, %v620
    %v636 = vpack.c.bf16 %v623, %v622
    %v637 = vpack.c.bf16 %v625, %v624
    %v638 = vpack.c.bf16 %v627, %v626
    %v639 = vpack.c.bf16 %v629, %v628
    %v640 = vpack.c.bf16 %v631, %v630
    %v641 = vpack.c.bf16 %v633, %v632
    %v650 = vunpack.c.l.b16 %v634
    %v651 = vunpack.c.h.b16 %v634
    %v652 = vunpack.c.l.b16 %v635
    %v653 = vunpack.c.h.b16 %v635
    %v654 = vunpack.c.l.b16 %v636
    %v655 = vunpack.c.h.b16 %v636
    %v656 = vunpack.c.l.b16 %v637
    %v657 = vunpack.c.h.b16 %v637
    %v658 = vunpack.c.l.b16 %v638
    %v659 = vunpack.c.h.b16 %v638
    %v660 = vunpack.c.l.b16 %v639
    %v661 = vunpack.c.h.b16 %v639
    %v662 = vunpack.c.l.b16 %v640
    %v663 = vunpack.c.h.b16 %v640
    %v664 = vunpack.c.l.b16 %v641
    %v665 = vunpack.c.h.b16 %v641
    %v666 = vpack.c.b16 %v650, %v650
    %v667 = vpack.c.b16 %v651, %v651
    %v668 = vpack.c.b16 %v652, %v652
    %v669 = vpack.c.b16 %v653, %v653
    %v670 = vpack.c.b16 %v654, %v654
    %v671 = vpack.c.b16 %v655, %v655
    %v672 = vpack.c.b16 %v656, %v656
    %v673 = vpack.c.b16 %v657, %v657
    %v674 = vpack.c.b16 %v658, %v658
    %v675 = vpack.c.b16 %v659, %v659
    %v676 = vpack.c.b16 %v660, %v660
    %v677 = vpack.c.b16 %v661, %v661
    %v678 = vpack.c.b16 %v662, %v662
    %v679 = vpack.c.b16 %v663, %v663
    %v680 = vpack.c.b16 %v664, %v664
    %v681 = vpack.c.b16 %v665, %v665
    %698 = vst [vmem:[%s6] sm:$0xf] %v666
    %699 = vst [vmem:[%s6 + $0x4] sm:$0xf] %v667
    %700 = vst [vmem:[%s6 + $0x8] sm:$0xf] %v668
    %701 = vst [vmem:[%s6 + $0xc] sm:$0xf] %v669
    %702 = vst [vmem:[%s6 + $0x10] sm:$0xf] %v670
    %703 = vst [vmem:[%s6 + $0x14] sm:$0xf] %v671
    %704 = vst [vmem:[%s6 + $0x18] sm:$0xf] %v672
    %705 = vst [vmem:[%s6 + $0x1c] sm:$0xf] %v673
    %706 = vst [vmem:[%s6 + $0x20] sm:$0xf] %v674
    %707 = vst [vmem:[%s6 + $0x24] sm:$0xf] %v675
    %708 = vst [vmem:[%s6 + $0x28] sm:$0xf] %v676
    %709 = vst [vmem:[%s6 + $0x2c] sm:$0xf] %v677
    %710 = vst [vmem:[%s6 + $0x30] sm:$0xf] %v678
    %711 = vst [vmem:[%s6 + $0x34] sm:$0xf] %v679
    %712 = vst [vmem:[%s6 + $0x38] sm:$0xf] %v680
    %713 = vst [vmem:[%s6 + $0x3c] sm:$0xf] %v681
    // Predicated region
    $region46: #{gradient_model_forward.2} parent=1 // pred_check
      _
    $region47: #{gradient_model_forward.2} parent=1 // pred_check_branch
      %715 = sbr.rel (0) target = $region49
    $region48: #{gradient_model_forward.2} parent=1 // pred_region
      _
    $region49: #{gradient_model_forward.2} parent=1 // pred_fallthru
      _
    // Predicated region
    $region50: #{gradient_model_forward.2} parent=1 // pred_check
      _
    $region51: #{gradient_model_forward.2} parent=1 // pred_check_branch
      %717 = sbr.rel (0) target = $region53
    $region52: #{gradient_model_forward.2} parent=1 // pred_region
      _
    $region53: #{gradient_model_forward.2} parent=1 // pred_fallthru
      _
    %718 = vsyncpa [#allocation3], 1
    %719 = vsyncpa [#allocation5], 1
    %720 = vsyncpa [#allocation8], 1

// kernel: gradient_model_forward.3
$region0: #{gradient_model_forward.3}
  #allocation0 [shape = 'u32[]', space=smem, size = 0x4, offset = 0x4, fixed_abs, tag = 'smem constant byte address 0x4 - core index']
  #allocation1 [shape = 'u32[144,128]{1,0:T(1,128)}', space=vmem, size = 0x12000, scoped, tag = 'internal scratch']
  #allocation2 [shape = 'f32[2,32]{1,0:T(2,128)}', space=vmem, size = 0x400, scoped, tag = 'scratch operand']
  %s0 = inlined_call_operand.vmem [shape: bf16[2,8192], index: 0, kind: input, shape index: {}]
  %s1 = inlined_call_operand.vmem [shape: bf16[8192,32], index: 1, kind: input, shape index: {}]
  %s2 = inlined_call_operand.vmem [shape: f32[2,64], index: 2, kind: input, shape index: {}]
  %s3 = inlined_call_operand.vmem [shape: f32[64,32], index: 3, kind: input, shape index: {}]
  %s4 = inlined_call_operand.vmem [shape: f32[1,8], index: 4, kind: input, shape index: {}]
  %s5 = inlined_call_operand.vmem [shape: f32[8,32], index: 5, kind: input, shape index: {}]
  %s6 = inlined_call_operand.vmem [shape: f32[1,32], index: 6, kind: input, shape index: {}]
  %s7 = inlined_call_operand.vmem [shape: f32[32,32], index: 7, kind: input, shape index: {}]
  %s8 = inlined_call_operand.vmem [shape: f32[1,32], index: 8, kind: input, shape index: {}]
  %s9 = inlined_call_operand.vmem [shape: f32[32,8], index: 9, kind: input, shape index: {}]
  %s10 = inlined_call_operand.vmem [shape: f32[1,8], index: 10, kind: input, shape index: {}]
  %s11 = inlined_call_operand.hbm [shape: f32[1,8], index: 11, kind: output, shape index: {}]
  %s12 = sld [smem:[#allocation0]]
  $region85: #{gradient_model_forward.3} parent=0
    _
  %s14 = ssub.s32 1, %s12
  %s15 = scalar_select 0, %s14, %s12
  $region1: #{gradient_model_forward.3} parent=0
    #allocation3 [shape = 'u8[512]{0}', space=vmem, size = 0x400, scoped, tag = 'output window, operand 0, single buffered']
    #allocation4 [shape = 's32[2]{0}', space=sflag, size = 0x8, scoped, tag = 'scoped memory for gradient_model_forward.3']
    %16 = vsyncpa [#allocation4], 0
    loop: start=0, step=1, limit=4
    $region2: #{gradient_model_forward.3} parent=1 // loop_pre_header
      _
    $region3: #{gradient_model_forward.3} parent=1 // loop_header
      %s18 = sphi 0, %s22
      %p19 = scmp.ge.s32.totalorder %s18, 4
      %s28 = sphi 0, %s30
      %s31 = sphi 0, %s28
      %s32 = sphi 0, %s31
      %s48 = sphi 0, %s32
      %s54 = sphi 0, %s56
      %s57 = sphi 0, %s54
      %s58 = sphi 0, %s57
      %s74 = sphi 0, %s58
      %s78 = sphi 0, %s78
      %s80 = sphi 0, %s78
      %s81 = sphi 0, %s80
      %s95 = sphi 0, %s81
      %s99 = sphi 0, %s99
      %s101 = sphi 0, %s99
      %s102 = sphi 0, %s101
      %s116 = sphi 0, %s102
      %s120 = sphi 0, %s120
      %s122 = sphi 0, %s120
      %s123 = sphi 0, %s122
      %s137 = sphi 0, %s123
      %s141 = sphi 0, %s141
      %s143 = sphi 0, %s141
      %s144 = sphi 0, %s143
      %s158 = sphi 0, %s144
      %s162 = sphi 0, %s162
      %s164 = sphi 0, %s162
      %s165 = sphi 0, %s164
      %s179 = sphi 0, %s165
      %s183 = sphi 0, %s183
      %s185 = sphi 0, %s183
      %s186 = sphi 0, %s185
      %s200 = sphi 0, %s186
      %s204 = sphi 0, %s204
      %s206 = sphi 0, %s204
      %s207 = sphi 0, %s206
      %s221 = sphi 0, %s207
      %s225 = sphi 0, %s225
      %s227 = sphi 0, %s225
      %s228 = sphi 0, %s227
      %s242 = sphi 0, %s228
      %s246 = sphi 0, %s246
      %s248 = sphi 0, %s246
      %s249 = sphi 0, %s248
      %s263 = sphi 0, %s249
      %s267 = sphi 0, %s267
      %s269 = sphi 0, %s267
      %s270 = sphi 0, %s269
      %s284 = sphi 0, %s270
    $region4: #{gradient_model_forward.3} parent=1 // loop_header_branch
      %21 = sbr.rel (%p19) target = $region8
    $region5: #{gradient_model_forward.3} parent=1 // loop_body
      %s23 = ssub.s32 %s18, 1
      %s24 = ssub.s32 %s18, 2
      %s25 = sadd.s32 %s18, 1
      %s26 = ssub.s32 %s18, %s25
      %p27 = scmp.eq.s32.totalorder %s26, 0
      %s29 = sadd.s32 %s28, 1
      %s30 = scalar_select %p27, %s28, %s29
      %p33 = pneg %p27
      %p34 = scmp.eq.s32.totalorder %s18, 1
      %p35 = por %p33, %p34
      %p36 = scmp.ne.s32.totalorder %s28, %s31
      %p37 = scmp.eq.s32.totalorder %s18, 0
      %p38 = por %p36, %p37
      %p39 = scmp.ne.s32.totalorder %s28, %s31
      %p40 = scmp.eq.s32.totalorder %s23, 1
      %p41 = por %p39, %p40
      %p42 = scmp.ne.s32.totalorder %s31, %s32
      %p43 = scmp.eq.s32.totalorder %s23, 0
      %p44 = por %p42, %p43
      %p45 = scmp.ne.s32.totalorder %s31, %s32
      %p46 = scmp.eq.s32.totalorder %s24, 1
      %p47 = por %p45, %p46
      %p49 = scmp.ne.s32.totalorder %s32, %s48
      %p50 = scmp.eq.s32.totalorder %s24, 0
      %p51 = por %p49, %p50
      %s52 = ssub.s32 %s18, %s25
      %p53 = scmp.eq.s32.totalorder %s52, 0
      %s55 = sadd.s32 %s54, 1
      %s56 = scalar_select %p53, %s54, %s55
      %p59 = pneg %p53
      %p60 = scmp.eq.s32.totalorder %s18, 1
      %p61 = por %p59, %p60
      %p62 = scmp.ne.s32.totalorder %s54, %s57
      %p63 = scmp.eq.s32.totalorder %s18, 0
      %p64 = por %p62, %p63
      %p65 = scmp.ne.s32.totalorder %s54, %s57
      %p66 = scmp.eq.s32.totalorder %s23, 1
      %p67 = por %p65, %p66
      %p68 = scmp.ne.s32.totalorder %s57, %s58
      %p69 = scmp.eq.s32.totalorder %s23, 0
      %p70 = por %p68, %p69
      %p71 = scmp.ne.s32.totalorder %s57, %s58
      %p72 = scmp.eq.s32.totalorder %s24, 1
      %p73 = por %p71, %p72
      %p75 = scmp.ne.s32.totalorder %s58, %s74
      %p76 = scmp.eq.s32.totalorder %s24, 0
      %p77 = por %p75, %p76
      %s79 = sadd.s32 %s78, 1
      %p82 = scmp.eq.s32.totalorder %s18, 1
      %p83 = scmp.ne.s32.totalorder %s78, %s80
      %p84 = scmp.eq.s32.totalorder %s18, 0
      %p85 = por %p83, %p84
      %p86 = scmp.ne.s32.totalorder %s78, %s80
      %p87 = scmp.eq.s32.totalorder %s23, 1
      %p88 = por %p86, %p87
      %p89 = scmp.ne.s32.totalorder %s80, %s81
      %p90 = scmp.eq.s32.totalorder %s23, 0
      %p91 = por %p89, %p90
      %p92 = scmp.ne.s32.totalorder %s80, %s81
      %p93 = scmp.eq.s32.totalorder %s24, 1
      %p94 = por %p92, %p93
      %p96 = scmp.ne.s32.totalorder %s81, %s95
      %p97 = scmp.eq.s32.totalorder %s24, 0
      %p98 = por %p96, %p97
      %s100 = sadd.s32 %s99, 1
      %p103 = scmp.eq.s32.totalorder %s18, 1
      %p104 = scmp.ne.s32.totalorder %s99, %s101
      %p105 = scmp.eq.s32.totalorder %s18, 0
      %p106 = por %p104, %p105
      %p107 = scmp.ne.s32.totalorder %s99, %s101
      %p108 = scmp.eq.s32.totalorder %s23, 1
      %p109 = por %p107, %p108
      %p110 = scmp.ne.s32.totalorder %s101, %s102
      %p111 = scmp.eq.s32.totalorder %s23, 0
      %p112 = por %p110, %p111
      %p113 = scmp.ne.s32.totalorder %s101, %s102
      %p114 = scmp.eq.s32.totalorder %s24, 1
      %p115 = por %p113, %p114
      %p117 = scmp.ne.s32.totalorder %s102, %s116
      %p118 = scmp.eq.s32.totalorder %s24, 0
      %p119 = por %p117, %p118
      %s121 = sadd.s32 %s120, 1
      %p124 = scmp.eq.s32.totalorder %s18, 1
      %p125 = scmp.ne.s32.totalorder %s120, %s122
      %p126 = scmp.eq.s32.totalorder %s18, 0
      %p127 = por %p125, %p126
      %p128 = scmp.ne.s32.totalorder %s120, %s122
      %p129 = scmp.eq.s32.totalorder %s23, 1
      %p130 = por %p128, %p129
      %p131 = scmp.ne.s32.totalorder %s122, %s123
      %p132 = scmp.eq.s32.totalorder %s23, 0
      %p133 = por %p131, %p132
      %p134 = scmp.ne.s32.totalorder %s122, %s123
      %p135 = scmp.eq.s32.totalorder %s24, 1
      %p136 = por %p134, %p135
      %p138 = scmp.ne.s32.totalorder %s123, %s137
      %p139 = scmp.eq.s32.totalorder %s24, 0
      %p140 = por %p138, %p139
      %s142 = sadd.s32 %s141, 1
      %p145 = scmp.eq.s32.totalorder %s18, 1
      %p146 = scmp.ne.s32.totalorder %s141, %s143
      %p147 = scmp.eq.s32.totalorder %s18, 0
      %p148 = por %p146, %p147
      %p149 = scmp.ne.s32.totalorder %s141, %s143
      %p150 = scmp.eq.s32.totalorder %s23, 1
      %p151 = por %p149, %p150
      %p152 = scmp.ne.s32.totalorder %s143, %s144
      %p153 = scmp.eq.s32.totalorder %s23, 0
      %p154 = por %p152, %p153
      %p155 = scmp.ne.s32.totalorder %s143, %s144
      %p156 = scmp.eq.s32.totalorder %s24, 1
      %p157 = por %p155, %p156
      %p159 = scmp.ne.s32.totalorder %s144, %s158
      %p160 = scmp.eq.s32.totalorder %s24, 0
      %p161 = por %p159, %p160
      %s163 = sadd.s32 %s162, 1
      %p166 = scmp.eq.s32.totalorder %s18, 1
      %p167 = scmp.ne.s32.totalorder %s162, %s164
      %p168 = scmp.eq.s32.totalorder %s18, 0
      %p169 = por %p167, %p168
      %p170 = scmp.ne.s32.totalorder %s162, %s164
      %p171 = scmp.eq.s32.totalorder %s23, 1
      %p172 = por %p170, %p171
      %p173 = scmp.ne.s32.totalorder %s164, %s165
      %p174 = scmp.eq.s32.totalorder %s23, 0
      %p175 = por %p173, %p174
      %p176 = scmp.ne.s32.totalorder %s164, %s165
      %p177 = scmp.eq.s32.totalorder %s24, 1
      %p178 = por %p176, %p177
      %p180 = scmp.ne.s32.totalorder %s165, %s179
      %p181 = scmp.eq.s32.totalorder %s24, 0
      %p182 = por %p180, %p181
      %s184 = sadd.s32 %s183, 1
      %p187 = scmp.eq.s32.totalorder %s18, 1
      %p188 = scmp.ne.s32.totalorder %s183, %s185
      %p189 = scmp.eq.s32.totalorder %s18, 0
      %p190 = por %p188, %p189
      %p191 = scmp.ne.s32.totalorder %s183, %s185
      %p192 = scmp.eq.s32.totalorder %s23, 1
      %p193 = por %p191, %p192
      %p194 = scmp.ne.s32.totalorder %s185, %s186
      %p195 = scmp.eq.s32.totalorder %s23, 0
      %p196 = por %p194, %p195
      %p197 = scmp.ne.s32.totalorder %s185, %s186
      %p198 = scmp.eq.s32.totalorder %s24, 1
      %p199 = por %p197, %p198
      %p201 = scmp.ne.s32.totalorder %s186, %s200
      %p202 = scmp.eq.s32.totalorder %s24, 0
      %p203 = por %p201, %p202
      %s205 = sadd.s32 %s204, 1
      %p208 = scmp.eq.s32.totalorder %s18, 1
      %p209 = scmp.ne.s32.totalorder %s204, %s206
      %p210 = scmp.eq.s32.totalorder %s18, 0
      %p211 = por %p209, %p210
      %p212 = scmp.ne.s32.totalorder %s204, %s206
      %p213 = scmp.eq.s32.totalorder %s23, 1
      %p214 = por %p212, %p213
      %p215 = scmp.ne.s32.totalorder %s206, %s207
      %p216 = scmp.eq.s32.totalorder %s23, 0
      %p217 = por %p215, %p216
      %p218 = scmp.ne.s32.totalorder %s206, %s207
      %p219 = scmp.eq.s32.totalorder %s24, 1
      %p220 = por %p218, %p219
      %p222 = scmp.ne.s32.totalorder %s207, %s221
      %p223 = scmp.eq.s32.totalorder %s24, 0
      %p224 = por %p222, %p223
      %s226 = sadd.s32 %s225, 1
      %p229 = scmp.eq.s32.totalorder %s18, 1
      %p230 = scmp.ne.s32.totalorder %s225, %s227
      %p231 = scmp.eq.s32.totalorder %s18, 0
      %p232 = por %p230, %p231
      %p233 = scmp.ne.s32.totalorder %s225, %s227
      %p234 = scmp.eq.s32.totalorder %s23, 1
      %p235 = por %p233, %p234
      %p236 = scmp.ne.s32.totalorder %s227, %s228
      %p237 = scmp.eq.s32.totalorder %s23, 0
      %p238 = por %p236, %p237
      %p239 = scmp.ne.s32.totalorder %s227, %s228
      %p240 = scmp.eq.s32.totalorder %s24, 1
      %p241 = por %p239, %p240
      %p243 = scmp.ne.s32.totalorder %s228, %s242
      %p244 = scmp.eq.s32.totalorder %s24, 0
      %p245 = por %p243, %p244
      %s247 = sadd.s32 %s246, 1
      %p250 = scmp.eq.s32.totalorder %s18, 1
      %p251 = scmp.ne.s32.totalorder %s246, %s248
      %p252 = scmp.eq.s32.totalorder %s18, 0
      %p253 = por %p251, %p252
      %p254 = scmp.ne.s32.totalorder %s246, %s248
      %p255 = scmp.eq.s32.totalorder %s23, 1
      %p256 = por %p254, %p255
      %p257 = scmp.ne.s32.totalorder %s248, %s249
      %p258 = scmp.eq.s32.totalorder %s23, 0
      %p259 = por %p257, %p258
      %p260 = scmp.ne.s32.totalorder %s248, %s249
      %p261 = scmp.eq.s32.totalorder %s24, 1
      %p262 = por %p260, %p261
      %p264 = scmp.ne.s32.totalorder %s249, %s263
      %p265 = scmp.eq.s32.totalorder %s24, 0
      %p266 = por %p264, %p265
      %s268 = sadd.s32 %s267, 1
      %p271 = scmp.eq.s32.totalorder %s18, 1
      %p272 = scmp.ne.s32.totalorder %s267, %s269
      %p273 = scmp.eq.s32.totalorder %s18, 0
      %p274 = por %p272, %p273
      %p275 = scmp.ne.s32.totalorder %s267, %s269
      %p276 = scmp.eq.s32.totalorder %s23, 1
      %p277 = por %p275, %p276
      %p278 = scmp.ne.s32.totalorder %s269, %s270
      %p279 = scmp.eq.s32.totalorder %s23, 0
      %p280 = por %p278, %p279
      %p281 = scmp.ne.s32.totalorder %s269, %s270
      %p282 = scmp.eq.s32.totalorder %s24, 1
      %p283 = por %p281, %p282
      %p285 = scmp.ne.s32.totalorder %s270, %s284
      %p286 = scmp.eq.s32.totalorder %s24, 0
      %p287 = por %p285, %p286
      %p288 = scmp.le.s32.totalorder 1, %s18
      %p289 = scmp.lt.s32.totalorder %s18, 3
      %p290 = pnand %p288, %p289
      %p291 = pneg %p290
      // Predicated region
      $region9: #{gradient_model_forward.3} parent=5 // pred_check
        _
      $region10: #{gradient_model_forward.3} parent=5 // pred_check_branch
        %293 = sbr.rel (%p290) target = $region12
      $region11: #{gradient_model_forward.3} parent=5 // pred_region
        %s294 = ssub.s32 %s18, 1
        // Predicated region
        $region13: #{gradient_model_forward.3} parent=11 // pred_check
          %p295 = pneg %p91
        $region14: #{gradient_model_forward.3} parent=11 // pred_check_branch
          %297 = sbr.rel (%p295) target = $region16
        $region15: #{gradient_model_forward.3} parent=11 // pred_region
          _
        $region16: #{gradient_model_forward.3} parent=11 // pred_fallthru
          _
        // Predicated region
        $region17: #{gradient_model_forward.3} parent=11 // pred_check
          %p298 = pneg %p112
        $region18: #{gradient_model_forward.3} parent=11 // pred_check_branch
          %300 = sbr.rel (%p298) target = $region20
        $region19: #{gradient_model_forward.3} parent=11 // pred_region
          _
        $region20: #{gradient_model_forward.3} parent=11 // pred_fallthru
          _
        // Predicated region
        $region21: #{gradient_model_forward.3} parent=11 // pred_check
          %p301 = pneg %p133
        $region22: #{gradient_model_forward.3} parent=11 // pred_check_branch
          %303 = sbr.rel (%p301) target = $region24
        $region23: #{gradient_model_forward.3} parent=11 // pred_region
          _
        $region24: #{gradient_model_forward.3} parent=11 // pred_fallthru
          _
        // Predicated region
        $region25: #{gradient_model_forward.3} parent=11 // pred_check
          %p304 = pneg %p154
        $region26: #{gradient_model_forward.3} parent=11 // pred_check_branch
          %306 = sbr.rel (%p304) target = $region28
        $region27: #{gradient_model_forward.3} parent=11 // pred_region
          _
        $region28: #{gradient_model_forward.3} parent=11 // pred_fallthru
          _
        // Predicated region
        $region29: #{gradient_model_forward.3} parent=11 // pred_check
          %p307 = pneg %p175
        $region30: #{gradient_model_forward.3} parent=11 // pred_check_branch
          %309 = sbr.rel (%p307) target = $region32
        $region31: #{gradient_model_forward.3} parent=11 // pred_region
          _
        $region32: #{gradient_model_forward.3} parent=11 // pred_fallthru
          _
        // Predicated region
        $region33: #{gradient_model_forward.3} parent=11 // pred_check
          %p310 = pneg %p196
        $region34: #{gradient_model_forward.3} parent=11 // pred_check_branch
          %312 = sbr.rel (%p310) target = $region36
        $region35: #{gradient_model_forward.3} parent=11 // pred_region
          _
        $region36: #{gradient_model_forward.3} parent=11 // pred_fallthru
          _
        // Predicated region
        $region37: #{gradient_model_forward.3} parent=11 // pred_check
          %p313 = pneg %p217
        $region38: #{gradient_model_forward.3} parent=11 // pred_check_branch
          %315 = sbr.rel (%p313) target = $region40
        $region39: #{gradient_model_forward.3} parent=11 // pred_region
          _
        $region40: #{gradient_model_forward.3} parent=11 // pred_fallthru
          _
        // Predicated region
        $region41: #{gradient_model_forward.3} parent=11 // pred_check
          %p316 = pneg %p238
        $region42: #{gradient_model_forward.3} parent=11 // pred_check_branch
          %318 = sbr.rel (%p316) target = $region44
        $region43: #{gradient_model_forward.3} parent=11 // pred_region
          _
        $region44: #{gradient_model_forward.3} parent=11 // pred_fallthru
          _
        // Predicated region
        $region45: #{gradient_model_forward.3} parent=11 // pred_check
          %p319 = pneg %p259
        $region46: #{gradient_model_forward.3} parent=11 // pred_check_branch
          %321 = sbr.rel (%p319) target = $region48
        $region47: #{gradient_model_forward.3} parent=11 // pred_region
          _
        $region48: #{gradient_model_forward.3} parent=11 // pred_fallthru
          _
      $region12: #{gradient_model_forward.3} parent=5 // pred_fallthru
        _
      %p322 = scmp.lt.s32.totalorder %s18, 2
      // Predicated region
      $region49: #{gradient_model_forward.3} parent=5 // pred_check
        %p323 = pneg %p322
      $region50: #{gradient_model_forward.3} parent=5 // pred_check_branch
        %325 = sbr.rel (%p323) target = $region52
      $region51: #{gradient_model_forward.3} parent=5 // pred_region
        // Predicated region
        $region53: #{gradient_model_forward.3} parent=51 // pred_check
          %p326 = pneg %p38
        $region54: #{gradient_model_forward.3} parent=51 // pred_check_branch
          %328 = sbr.rel (%p326) target = $region56
        $region55: #{gradient_model_forward.3} parent=51 // pred_region
          %s329 = smul.u32 32, %s18
          %p330 = scmp.lt.s32.totalorder %s329, 63
          %s331 = scalar_select %p330, %s329, 63
          %s332 = scalar_lea.vmem %s0, %s331
          %s333 = smul.u32 32, %s18
        $region56: #{gradient_model_forward.3} parent=51 // pred_fallthru
          _
        // Predicated region
        $region57: #{gradient_model_forward.3} parent=51 // pred_check
          %p334 = pneg %p64
        $region58: #{gradient_model_forward.3} parent=51 // pred_check_branch
          %336 = sbr.rel (%p334) target = $region60
        $region59: #{gradient_model_forward.3} parent=51 // pred_region
          %s337 = smul.u32 512, %s18
          %p338 = scmp.lt.s32.totalorder %s337, 1023
          %s339 = scalar_select %p338, %s337, 1023
          %s340 = smul.addr %s339, 4
          %s341 = scalar_lea.vmem %s1, %s340
          %s342 = smul.u32 512, %s18
        $region60: #{gradient_model_forward.3} parent=51 // pred_fallthru
          _
      $region52: #{gradient_model_forward.3} parent=5 // pred_fallthru
        _
      %p343 = scmp.le.s32.totalorder 1, %s18
      %p344 = scmp.lt.s32.totalorder %s18, 3
      %p345 = pnand %p343, %p344
      %p346 = pneg %p345
      // Predicated region
      $region61: #{gradient_model_forward.3} parent=5 // pred_check
        _
      $region62: #{gradient_model_forward.3} parent=5 // pred_check_branch
        %348 = sbr.rel (%p345) target = $region64
      $region63: #{gradient_model_forward.3} parent=5 // pred_region
        %s349 = ssub.s32 %s18, 1
        %s350 = smul.u32 32, %s23
        %p351 = scmp.lt.s32.totalorder %s350, 63
        %s352 = scalar_select %p351, %s350, 63
        %s353 = scalar_lea.vmem %s0, %s352
        %p354 = pneg %p44
        %p355 = pneg %p41
        %s356 = smul.u32 512, %s23
        %p357 = scmp.lt.s32.totalorder %s356, 1023
        %s358 = scalar_select %p357, %s356, 1023
        %s359 = smul.addr %s358, 4
        %s360 = scalar_lea.vmem %s1, %s359
        %p361 = pneg %p70
        %p362 = pneg %p67
        %p363 = pneg %p91
        %p364 = pneg %p88
        %p365 = pneg %p112
        %p366 = pneg %p109
        %p367 = pneg %p133
        %p368 = pneg %p130
        %p369 = pneg %p154
        %p370 = pneg %p151
        %p371 = pneg %p175
        %p372 = pneg %p172
        %p373 = pneg %p196
        %p374 = pneg %p193
        %p375 = pneg %p217
        %p376 = pneg %p214
        %p377 = pneg %p238
        %p378 = pneg %p235
        %p379 = pneg %p259
        %p380 = pneg %p256
        %p381 = pneg %p280
        %p382 = pneg %p277
        %s383 = smul.u32 32, %s23
        %p384 = scmp.lt.s32.totalorder %s383, 63
        %s385 = scalar_select %p384, %s383, 63
        %s386 = scalar_lea.vmem %s0, %s385
        %s387 = smul.u32 32, %s23
        %s388 = smul.u32 512, %s23
        %p389 = scmp.lt.s32.totalorder %s388, 1023
        %s390 = scalar_select %p389, %s388, 1023
        %s391 = smul.addr %s390, 4
        %s392 = scalar_lea.vmem %s1, %s391
        %s393 = smul.u32 512, %s23
        %p395 = scmp.eq.s32.totalorder %s23, 0
        // Predicated region
        $region65: #{gradient_model_forward.3} parent=63 // pred_check
          %p396 = pneg %p395
        $region66: #{gradient_model_forward.3} parent=63 // pred_check_branch
          %398 = sbr.rel (%p396) target = $region68
        $region67: #{gradient_model_forward.3} parent=63 // pred_region
          %vm399 = vcmask 254976
          %400 = vst.msk [vmem:[#allocation2] sm:$0x3] %vm399, 0.0
        $region68: #{gradient_model_forward.3} parent=63 // pred_fallthru
          _
        %v401 = vld [vmem:[#allocation2] sm:$0x3]
        %v402 = vld [vmem:[%s386] sm:$0xff]
        %v403 = vld [vmem:[%s386 + $0x8] sm:$0xff]
        %v404 = vld [vmem:[%s386 + $0x10] sm:$0xff]
        %v405 = vld [vmem:[%s386 + $0x18] sm:$0xff]
        %v406 = vld [vmem:[%s392] sm:$0xf]
        %v407 = vld [vmem:[%s392 + $0x4] sm:$0xf]
        %v408 = vld [vmem:[%s392 + $0x8] sm:$0xf]
        %v409 = vld [vmem:[%s392 + $0xc] sm:$0xf]
        %v410 = vld [vmem:[%s392 + $0x10] sm:$0xf]
        %v411 = vld [vmem:[%s392 + $0x14] sm:$0xf]
        %v412 = vld [vmem:[%s392 + $0x18] sm:$0xf]
        %v413 = vld [vmem:[%s392 + $0x1c] sm:$0xf]
        %v414 = vld [vmem:[%s392 + $0x20] sm:$0xf]
        %v415 = vld [vmem:[%s392 + $0x24] sm:$0xf]
        %v416 = vld [vmem:[%s392 + $0x28] sm:$0xf]
        %v417 = vld [vmem:[%s392 + $0x2c] sm:$0xf]
        %v418 = vld [vmem:[%s392 + $0x30] sm:$0xf]
        %v419 = vld [vmem:[%s392 + $0x34] sm:$0xf]
        %v420 = vld [vmem:[%s392 + $0x38] sm:$0xf]
        %v421 = vld [vmem:[%s392 + $0x3c] sm:$0xf]
        %v422 = vld [vmem:[%s392 + $0x40] sm:$0xf]
        %v423 = vld [vmem:[%s392 + $0x44] sm:$0xf]
        %v424 = vld [vmem:[%s392 + $0x48] sm:$0xf]
        %v425 = vld [vmem:[%s392 + $0x4c] sm:$0xf]
        %v426 = vld [vmem:[%s392 + $0x50] sm:$0xf]
        %v427 = vld [vmem:[%s392 + $0x54] sm:$0xf]
        %v428 = vld [vmem:[%s392 + $0x58] sm:$0xf]
        %v429 = vld [vmem:[%s392 + $0x5c] sm:$0xf]
        %v430 = vld [vmem:[%s392 + $0x60] sm:$0xf]
        %v431 = vld [vmem:[%s392 + $0x64] sm:$0xf]
        %v432 = vld [vmem:[%s392 + $0x68] sm:$0xf]
        %v433 = vld [vmem:[%s392 + $0x6c] sm:$0xf]
        %v434 = vld [vmem:[%s392 + $0x70] sm:$0xf]
        %v435 = vld [vmem:[%s392 + $0x74] sm:$0xf]
        %v436 = vld [vmem:[%s392 + $0x78] sm:$0xf]
        %v437 = vld [vmem:[%s392 + $0x7c] sm:$0xf]
        %v438 = vld [vmem:[%s392 + $0x80] sm:$0xf]
        %v439 = vld [vmem:[%s392 + $0x84] sm:$0xf]
        %v440 = vld [vmem:[%s392 + $0x88] sm:$0xf]
        %v441 = vld [vmem:[%s392 + $0x8c] sm:$0xf]
        %v442 = vld [vmem:[%s392 + $0x90] sm:$0xf]
        %v443 = vld [vmem:[%s392 + $0x94] sm:$0xf]
        %v444 = vld [vmem:[%s392 + $0x98] sm:$0xf]
        %v445 = vld [vmem:[%s392 + $0x9c] sm:$0xf]
        %v446 = vld [vmem:[%s392 + $0xa0] sm:$0xf]
        %v447 = vld [vmem:[%s392 + $0xa4] sm:$0xf]
        %v448 = vld [vmem:[%s392 + $0xa8] sm:$0xf]
        %v449 = vld [vmem:[%s392 + $0xac] sm:$0xf]
        %v450 = vld [vmem:[%s392 + $0xb0] sm:$0xf]
        %v451 = vld [vmem:[%s392 + $0xb4] sm:$0xf]
        %v452 = vld [vmem:[%s392 + $0xb8] sm:$0xf]
        %v453 = vld [vmem:[%s392 + $0xbc] sm:$0xf]
        %v454 = vld [vmem:[%s392 + $0xc0] sm:$0xf]
        %v455 = vld [vmem:[%s392 + $0xc4] sm:$0xf]
        %v456 = vld [vmem:[%s392 + $0xc8] sm:$0xf]
        %v457 = vld [vmem:[%s392 + $0xcc] sm:$0xf]
        %v458 = vld [vmem:[%s392 + $0xd0] sm:$0xf]
        %v459 = vld [vmem:[%s392 + $0xd4] sm:$0xf]
        %v460 = vld [vmem:[%s392 + $0xd8] sm:$0xf]
        %v461 = vld [vmem:[%s392 + $0xdc] sm:$0xf]
        %v462 = vld [vmem:[%s392 + $0xe0] sm:$0xf]
        %v463 = vld [vmem:[%s392 + $0xe4] sm:$0xf]
        %v464 = vld [vmem:[%s392 + $0xe8] sm:$0xf]
        %v465 = vld [vmem:[%s392 + $0xec] sm:$0xf]
        %v466 = vld [vmem:[%s392 + $0xf0] sm:$0xf]
        %v467 = vld [vmem:[%s392 + $0xf4] sm:$0xf]
        %v468 = vld [vmem:[%s392 + $0xf8] sm:$0xf]
        %v469 = vld [vmem:[%s392 + $0xfc] sm:$0xf]
        %v470 = vld [vmem:[%s392 + $0x100] sm:$0xf]
        %v471 = vld [vmem:[%s392 + $0x104] sm:$0xf]
        %v472 = vld [vmem:[%s392 + $0x108] sm:$0xf]
        %v473 = vld [vmem:[%s392 + $0x10c] sm:$0xf]
        %v474 = vld [vmem:[%s392 + $0x110] sm:$0xf]
        %v475 = vld [vmem:[%s392 + $0x114] sm:$0xf]
        %v476 = vld [vmem:[%s392 + $0x118] sm:$0xf]
        %v477 = vld [vmem:[%s392 + $0x11c] sm:$0xf]
        %v478 = vld [vmem:[%s392 + $0x120] sm:$0xf]
        %v479 = vld [vmem:[%s392 + $0x124] sm:$0xf]
        %v480 = vld [vmem:[%s392 + $0x128] sm:$0xf]
        %v481 = vld [vmem:[%s392 + $0x12c] sm:$0xf]
        %v482 = vld [vmem:[%s392 + $0x130] sm:$0xf]
        %v483 = vld [vmem:[%s392 + $0x134] sm:$0xf]
        %v484 = vld [vmem:[%s392 + $0x138] sm:$0xf]
        %v485 = vld [vmem:[%s392 + $0x13c] sm:$0xf]
        %v486 = vld [vmem:[%s392 + $0x140] sm:$0xf]
        %v487 = vld [vmem:[%s392 + $0x144] sm:$0xf]
        %v488 = vld [vmem:[%s392 + $0x148] sm:$0xf]
        %v489 = vld [vmem:[%s392 + $0x14c] sm:$0xf]
        %v490 = vld [vmem:[%s392 + $0x150] sm:$0xf]
        %v491 = vld [vmem:[%s392 + $0x154] sm:$0xf]
        %v492 = vld [vmem:[%s392 + $0x158] sm:$0xf]
        %v493 = vld [vmem:[%s392 + $0x15c] sm:$0xf]
        %v494 = vld [vmem:[%s392 + $0x160] sm:$0xf]
        %v495 = vld [vmem:[%s392 + $0x164] sm:$0xf]
        %v496 = vld [vmem:[%s392 + $0x168] sm:$0xf]
        %v497 = vld [vmem:[%s392 + $0x16c] sm:$0xf]
        %v498 = vld [vmem:[%s392 + $0x170] sm:$0xf]
        %v499 = vld [vmem:[%s392 + $0x174] sm:$0xf]
        %v500 = vld [vmem:[%s392 + $0x178] sm:$0xf]
        %v501 = vld [vmem:[%s392 + $0x17c] sm:$0xf]
        %v502 = vld [vmem:[%s392 + $0x180] sm:$0xf]
        %v503 = vld [vmem:[%s392 + $0x184] sm:$0xf]
        %v504 = vld [vmem:[%s392 + $0x188] sm:$0xf]
        %v505 = vld [vmem:[%s392 + $0x18c] sm:$0xf]
        %v506 = vld [vmem:[%s392 + $0x190] sm:$0xf]
        %v507 = vld [vmem:[%s392 + $0x194] sm:$0xf]
        %v508 = vld [vmem:[%s392 + $0x198] sm:$0xf]
        %v509 = vld [vmem:[%s392 + $0x19c] sm:$0xf]
        %v510 = vld [vmem:[%s392 + $0x1a0] sm:$0xf]
        %v511 = vld [vmem:[%s392 + $0x1a4] sm:$0xf]
        %v512 = vld [vmem:[%s392 + $0x1a8] sm:$0xf]
        %v513 = vld [vmem:[%s392 + $0x1ac] sm:$0xf]
        %v514 = vld [vmem:[%s392 + $0x1b0] sm:$0xf]
        %v515 = vld [vmem:[%s392 + $0x1b4] sm:$0xf]
        %v516 = vld [vmem:[%s392 + $0x1b8] sm:$0xf]
        %v517 = vld [vmem:[%s392 + $0x1bc] sm:$0xf]
        %v518 = vld [vmem:[%s392 + $0x1c0] sm:$0xf]
        %v519 = vld [vmem:[%s392 + $0x1c4] sm:$0xf]
        %v520 = vld [vmem:[%s392 + $0x1c8] sm:$0xf]
        %v521 = vld [vmem:[%s392 + $0x1cc] sm:$0xf]
        %v522 = vld [vmem:[%s392 + $0x1d0] sm:$0xf]
        %v523 = vld [vmem:[%s392 + $0x1d4] sm:$0xf]
        %v524 = vld [vmem:[%s392 + $0x1d8] sm:$0xf]
        %v525 = vld [vmem:[%s392 + $0x1dc] sm:$0xf]
        %v526 = vld [vmem:[%s392 + $0x1e0] sm:$0xf]
        %v527 = vld [vmem:[%s392 + $0x1e4] sm:$0xf]
        %v528 = vld [vmem:[%s392 + $0x1e8] sm:$0xf]
        %v529 = vld [vmem:[%s392 + $0x1ec] sm:$0xf]
        %v530 = vld [vmem:[%s392 + $0x1f0] sm:$0xf]
        %v531 = vld [vmem:[%s392 + $0x1f4] sm:$0xf]
        %v532 = vld [vmem:[%s392 + $0x1f8] sm:$0xf]
        %v533 = vld [vmem:[%s392 + $0x1fc] sm:$0xf]
        %v534 = vld [vmem:[%s392 + $0x200] sm:$0xf]
        %v535 = vld [vmem:[%s392 + $0x204] sm:$0xf]
        %v536 = vld [vmem:[%s392 + $0x208] sm:$0xf]
        %v537 = vld [vmem:[%s392 + $0x20c] sm:$0xf]
        %v538 = vld [vmem:[%s392 + $0x210] sm:$0xf]
        %v539 = vld [vmem:[%s392 + $0x214] sm:$0xf]
        %v540 = vld [vmem:[%s392 + $0x218] sm:$0xf]
        %v541 = vld [vmem:[%s392 + $0x21c] sm:$0xf]
        %v542 = vld [vmem:[%s392 + $0x220] sm:$0xf]
        %v543 = vld [vmem:[%s392 + $0x224] sm:$0xf]
        %v544 = vld [vmem:[%s392 + $0x228] sm:$0xf]
        %v545 = vld [vmem:[%s392 + $0x22c] sm:$0xf]
        %v546 = vld [vmem:[%s392 + $0x230] sm:$0xf]
        %v547 = vld [vmem:[%s392 + $0x234] sm:$0xf]
        %v548 = vld [vmem:[%s392 + $0x238] sm:$0xf]
        %v549 = vld [vmem:[%s392 + $0x23c] sm:$0xf]
        %v550 = vld [vmem:[%s392 + $0x240] sm:$0xf]
        %v551 = vld [vmem:[%s392 + $0x244] sm:$0xf]
        %v552 = vld [vmem:[%s392 + $0x248] sm:$0xf]
        %v553 = vld [vmem:[%s392 + $0x24c] sm:$0xf]
        %v554 = vld [vmem:[%s392 + $0x250] sm:$0xf]
        %v555 = vld [vmem:[%s392 + $0x254] sm:$0xf]
        %v556 = vld [vmem:[%s392 + $0x258] sm:$0xf]
        %v557 = vld [vmem:[%s392 + $0x25c] sm:$0xf]
        %v558 = vld [vmem:[%s392 + $0x260] sm:$0xf]
        %v559 = vld [vmem:[%s392 + $0x264] sm:$0xf]
        %v560 = vld [vmem:[%s392 + $0x268] sm:$0xf]
        %v561 = vld [vmem:[%s392 + $0x26c] sm:$0xf]
        %v562 = vld [vmem:[%s392 + $0x270] sm:$0xf]
        %v563 = vld [vmem:[%s392 + $0x274] sm:$0xf]
        %v564 = vld [vmem:[%s392 + $0x278] sm:$0xf]
        %v565 = vld [vmem:[%s392 + $0x27c] sm:$0xf]
        %v566 = vld [vmem:[%s392 + $0x280] sm:$0xf]
        %v567 = vld [vmem:[%s392 + $0x284] sm:$0xf]
        %v568 = vld [vmem:[%s392 + $0x288] sm:$0xf]
        %v569 = vld [vmem:[%s392 + $0x28c] sm:$0xf]
        %v570 = vld [vmem:[%s392 + $0x290] sm:$0xf]
        %v571 = vld [vmem:[%s392 + $0x294] sm:$0xf]
        %v572 = vld [vmem:[%s392 + $0x298] sm:$0xf]
        %v573 = vld [vmem:[%s392 + $0x29c] sm:$0xf]
        %v574 = vld [vmem:[%s392 + $0x2a0] sm:$0xf]
        %v575 = vld [vmem:[%s392 + $0x2a4] sm:$0xf]
        %v576 = vld [vmem:[%s392 + $0x2a8] sm:$0xf]
        %v577 = vld [vmem:[%s392 + $0x2ac] sm:$0xf]
        %v578 = vld [vmem:[%s392 + $0x2b0] sm:$0xf]
        %v579 = vld [vmem:[%s392 + $0x2b4] sm:$0xf]
        %v580 = vld [vmem:[%s392 + $0x2b8] sm:$0xf]
        %v581 = vld [vmem:[%s392 + $0x2bc] sm:$0xf]
        %v582 = vld [vmem:[%s392 + $0x2c0] sm:$0xf]
        %v583 = vld [vmem:[%s392 + $0x2c4] sm:$0xf]
        %v584 = vld [vmem:[%s392 + $0x2c8] sm:$0xf]
        %v585 = vld [vmem:[%s392 + $0x2cc] sm:$0xf]
        %v586 = vld [vmem:[%s392 + $0x2d0] sm:$0xf]
        %v587 = vld [vmem:[%s392 + $0x2d4] sm:$0xf]
        %v588 = vld [vmem:[%s392 + $0x2d8] sm:$0xf]
        %v589 = vld [vmem:[%s392 + $0x2dc] sm:$0xf]
        %v590 = vld [vmem:[%s392 + $0x2e0] sm:$0xf]
        %v591 = vld [vmem:[%s392 + $0x2e4] sm:$0xf]
        %v592 = vld [vmem:[%s392 + $0x2e8] sm:$0xf]
        %v593 = vld [vmem:[%s392 + $0x2ec] sm:$0xf]
        %v594 = vld [vmem:[%s392 + $0x2f0] sm:$0xf]
        %v595 = vld [vmem:[%s392 + $0x2f4] sm:$0xf]
        %v596 = vld [vmem:[%s392 + $0x2f8] sm:$0xf]
        %v597 = vld [vmem:[%s392 + $0x2fc] sm:$0xf]
        %v598 = vld [vmem:[%s392 + $0x300] sm:$0xf]
        %v599 = vld [vmem:[%s392 + $0x304] sm:$0xf]
        %v600 = vld [vmem:[%s392 + $0x308] sm:$0xf]
        %v601 = vld [vmem:[%s392 + $0x30c] sm:$0xf]
        %v602 = vld [vmem:[%s392 + $0x310] sm:$0xf]
        %v603 = vld [vmem:[%s392 + $0x314] sm:$0xf]
        %v604 = vld [vmem:[%s392 + $0x318] sm:$0xf]
        %v605 = vld [vmem:[%s392 + $0x31c] sm:$0xf]
        %v606 = vld [vmem:[%s392 + $0x320] sm:$0xf]
        %v607 = vld [vmem:[%s392 + $0x324] sm:$0xf]
        %v608 = vld [vmem:[%s392 + $0x328] sm:$0xf]
        %v609 = vld [vmem:[%s392 + $0x32c] sm:$0xf]
        %v610 = vld [vmem:[%s392 + $0x330] sm:$0xf]
        %v611 = vld [vmem:[%s392 + $0x334] sm:$0xf]
        %v612 = vld [vmem:[%s392 + $0x338] sm:$0xf]
        %v613 = vld [vmem:[%s392 + $0x33c] sm:$0xf]
        %v614 = vld [vmem:[%s392 + $0x340] sm:$0xf]
        %v615 = vld [vmem:[%s392 + $0x344] sm:$0xf]
        %v616 = vld [vmem:[%s392 + $0x348] sm:$0xf]
        %v617 = vld [vmem:[%s392 + $0x34c] sm:$0xf]
        %v618 = vld [vmem:[%s392 + $0x350] sm:$0xf]
        %v619 = vld [vmem:[%s392 + $0x354] sm:$0xf]
        %v620 = vld [vmem:[%s392 + $0x358] sm:$0xf]
        %v621 = vld [vmem:[%s392 + $0x35c] sm:$0xf]
        %v622 = vld [vmem:[%s392 + $0x360] sm:$0xf]
        %v623 = vld [vmem:[%s392 + $0x364] sm:$0xf]
        %v624 = vld [vmem:[%s392 + $0x368] sm:$0xf]
        %v625 = vld [vmem:[%s392 + $0x36c] sm:$0xf]
        %v626 = vld [vmem:[%s392 + $0x370] sm:$0xf]
        %v627 = vld [vmem:[%s392 + $0x374] sm:$0xf]
        %v628 = vld [vmem:[%s392 + $0x378] sm:$0xf]
        %v629 = vld [vmem:[%s392 + $0x37c] sm:$0xf]
        %v630 = vld [vmem:[%s392 + $0x380] sm:$0xf]
        %v631 = vld [vmem:[%s392 + $0x384] sm:$0xf]
        %v632 = vld [vmem:[%s392 + $0x388] sm:$0xf]
        %v633 = vld [vmem:[%s392 + $0x38c] sm:$0xf]
        %v634 = vld [vmem:[%s392 + $0x390] sm:$0xf]
        %v635 = vld [vmem:[%s392 + $0x394] sm:$0xf]
        %v636 = vld [vmem:[%s392 + $0x398] sm:$0xf]
        %v637 = vld [vmem:[%s392 + $0x39c] sm:$0xf]
        %v638 = vld [vmem:[%s392 + $0x3a0] sm:$0xf]
        %v639 = vld [vmem:[%s392 + $0x3a4] sm:$0xf]
        %v640 = vld [vmem:[%s392 + $0x3a8] sm:$0xf]
        %v641 = vld [vmem:[%s392 + $0x3ac] sm:$0xf]
        %v642 = vld [vmem:[%s392 + $0x3b0] sm:$0xf]
        %v643 = vld [vmem:[%s392 + $0x3b4] sm:$0xf]
        %v644 = vld [vmem:[%s392 + $0x3b8] sm:$0xf]
        %v645 = vld [vmem:[%s392 + $0x3bc] sm:$0xf]
        %v646 = vld [vmem:[%s392 + $0x3c0] sm:$0xf]
        %v647 = vld [vmem:[%s392 + $0x3c4] sm:$0xf]
        %v648 = vld [vmem:[%s392 + $0x3c8] sm:$0xf]
        %v649 = vld [vmem:[%s392 + $0x3cc] sm:$0xf]
        %v650 = vld [vmem:[%s392 + $0x3d0] sm:$0xf]
        %v651 = vld [vmem:[%s392 + $0x3d4] sm:$0xf]
        %v652 = vld [vmem:[%s392 + $0x3d8] sm:$0xf]
        %v653 = vld [vmem:[%s392 + $0x3dc] sm:$0xf]
        %v654 = vld [vmem:[%s392 + $0x3e0] sm:$0xf]
        %v655 = vld [vmem:[%s392 + $0x3e4] sm:$0xf]
        %v656 = vld [vmem:[%s392 + $0x3e8] sm:$0xf]
        %v657 = vld [vmem:[%s392 + $0x3ec] sm:$0xf]
        %v658 = vld [vmem:[%s392 + $0x3f0] sm:$0xf]
        %v659 = vld [vmem:[%s392 + $0x3f4] sm:$0xf]
        %v660 = vld [vmem:[%s392 + $0x3f8] sm:$0xf]
        %v661 = vld [vmem:[%s392 + $0x3fc] sm:$0xf]
        %v662 = vld [vmem:[%s392 + $0x400] sm:$0xf]
        %v663 = vld [vmem:[%s392 + $0x404] sm:$0xf]
        %v664 = vld [vmem:[%s392 + $0x408] sm:$0xf]
        %v665 = vld [vmem:[%s392 + $0x40c] sm:$0xf]
        %v666 = vld [vmem:[%s392 + $0x410] sm:$0xf]
        %v667 = vld [vmem:[%s392 + $0x414] sm:$0xf]
        %v668 = vld [vmem:[%s392 + $0x418] sm:$0xf]
        %v669 = vld [vmem:[%s392 + $0x41c] sm:$0xf]
        %v670 = vld [vmem:[%s392 + $0x420] sm:$0xf]
        %v671 = vld [vmem:[%s392 + $0x424] sm:$0xf]
        %v672 = vld [vmem:[%s392 + $0x428] sm:$0xf]
        %v673 = vld [vmem:[%s392 + $0x42c] sm:$0xf]
        %v674 = vld [vmem:[%s392 + $0x430] sm:$0xf]
        %v675 = vld [vmem:[%s392 + $0x434] sm:$0xf]
        %v676 = vld [vmem:[%s392 + $0x438] sm:$0xf]
        %v677 = vld [vmem:[%s392 + $0x43c] sm:$0xf]
        %v678 = vld [vmem:[%s392 + $0x440] sm:$0xf]
        %v679 = vld [vmem:[%s392 + $0x444] sm:$0xf]
        %v680 = vld [vmem:[%s392 + $0x448] sm:$0xf]
        %v681 = vld [vmem:[%s392 + $0x44c] sm:$0xf]
        %v682 = vld [vmem:[%s392 + $0x450] sm:$0xf]
        %v683 = vld [vmem:[%s392 + $0x454] sm:$0xf]
        %v684 = vld [vmem:[%s392 + $0x458] sm:$0xf]
        %v685 = vld [vmem:[%s392 + $0x45c] sm:$0xf]
        %v686 = vld [vmem:[%s392 + $0x460] sm:$0xf]
        %v687 = vld [vmem:[%s392 + $0x464] sm:$0xf]
        %v688 = vld [vmem:[%s392 + $0x468] sm:$0xf]
        %v689 = vld [vmem:[%s392 + $0x46c] sm:$0xf]
        %v690 = vld [vmem:[%s392 + $0x470] sm:$0xf]
        %v691 = vld [vmem:[%s392 + $0x474] sm:$0xf]
        %v692 = vld [vmem:[%s392 + $0x478] sm:$0xf]
        %v693 = vld [vmem:[%s392 + $0x47c] sm:$0xf]
        %v694 = vld [vmem:[%s392 + $0x480] sm:$0xf]
        %v695 = vld [vmem:[%s392 + $0x484] sm:$0xf]
        %v696 = vld [vmem:[%s392 + $0x488] sm:$0xf]
        %v697 = vld [vmem:[%s392 + $0x48c] sm:$0xf]
        %v698 = vld [vmem:[%s392 + $0x490] sm:$0xf]
        %v699 = vld [vmem:[%s392 + $0x494] sm:$0xf]
        %v700 = vld [vmem:[%s392 + $0x498] sm:$0xf]
        %v701 = vld [vmem:[%s392 + $0x49c] sm:$0xf]
        %v702 = vld [vmem:[%s392 + $0x4a0] sm:$0xf]
        %v703 = vld [vmem:[%s392 + $0x4a4] sm:$0xf]
        %v704 = vld [vmem:[%s392 + $0x4a8] sm:$0xf]
        %v705 = vld [vmem:[%s392 + $0x4ac] sm:$0xf]
        %v706 = vld [vmem:[%s392 + $0x4b0] sm:$0xf]
        %v707 = vld [vmem:[%s392 + $0x4b4] sm:$0xf]
        %v708 = vld [vmem:[%s392 + $0x4b8] sm:$0xf]
        %v709 = vld [vmem:[%s392 + $0x4bc] sm:$0xf]
        %v710 = vld [vmem:[%s392 + $0x4c0] sm:$0xf]
        %v711 = vld [vmem:[%s392 + $0x4c4] sm:$0xf]
        %v712 = vld [vmem:[%s392 + $0x4c8] sm:$0xf]
        %v713 = vld [vmem:[%s392 + $0x4cc] sm:$0xf]
        %v714 = vld [vmem:[%s392 + $0x4d0] sm:$0xf]
        %v715 = vld [vmem:[%s392 + $0x4d4] sm:$0xf]
        %v716 = vld [vmem:[%s392 + $0x4d8] sm:$0xf]
        %v717 = vld [vmem:[%s392 + $0x4dc] sm:$0xf]
        %v718 = vld [vmem:[%s392 + $0x4e0] sm:$0xf]
        %v719 = vld [vmem:[%s392 + $0x4e4] sm:$0xf]
        %v720 = vld [vmem:[%s392 + $0x4e8] sm:$0xf]
        %v721 = vld [vmem:[%s392 + $0x4ec] sm:$0xf]
        %v722 = vld [vmem:[%s392 + $0x4f0] sm:$0xf]
        %v723 = vld [vmem:[%s392 + $0x4f4] sm:$0xf]
        %v724 = vld [vmem:[%s392 + $0x4f8] sm:$0xf]
        %v725 = vld [vmem:[%s392 + $0x4fc] sm:$0xf]
        %v726 = vld [vmem:[%s392 + $0x500] sm:$0xf]
        %v727 = vld [vmem:[%s392 + $0x504] sm:$0xf]
        %v728 = vld [vmem:[%s392 + $0x508] sm:$0xf]
        %v729 = vld [vmem:[%s392 + $0x50c] sm:$0xf]
        %v730 = vld [vmem:[%s392 + $0x510] sm:$0xf]
        %v731 = vld [vmem:[%s392 + $0x514] sm:$0xf]
        %v732 = vld [vmem:[%s392 + $0x518] sm:$0xf]
        %v733 = vld [vmem:[%s392 + $0x51c] sm:$0xf]
        %v734 = vld [vmem:[%s392 + $0x520] sm:$0xf]
        %v735 = vld [vmem:[%s392 + $0x524] sm:$0xf]
        %v736 = vld [vmem:[%s392 + $0x528] sm:$0xf]
        %v737 = vld [vmem:[%s392 + $0x52c] sm:$0xf]
        %v738 = vld [vmem:[%s392 + $0x530] sm:$0xf]
        %v739 = vld [vmem:[%s392 + $0x534] sm:$0xf]
        %v740 = vld [vmem:[%s392 + $0x538] sm:$0xf]
        %v741 = vld [vmem:[%s392 + $0x53c] sm:$0xf]
        %v742 = vld [vmem:[%s392 + $0x540] sm:$0xf]
        %v743 = vld [vmem:[%s392 + $0x544] sm:$0xf]
        %v744 = vld [vmem:[%s392 + $0x548] sm:$0xf]
        %v745 = vld [vmem:[%s392 + $0x54c] sm:$0xf]
        %v746 = vld [vmem:[%s392 + $0x550] sm:$0xf]
        %v747 = vld [vmem:[%s392 + $0x554] sm:$0xf]
        %v748 = vld [vmem:[%s392 + $0x558] sm:$0xf]
        %v749 = vld [vmem:[%s392 + $0x55c] sm:$0xf]
        %v750 = vld [vmem:[%s392 + $0x560] sm:$0xf]
        %v751 = vld [vmem:[%s392 + $0x564] sm:$0xf]
        %v752 = vld [vmem:[%s392 + $0x568] sm:$0xf]
        %v753 = vld [vmem:[%s392 + $0x56c] sm:$0xf]
        %v754 = vld [vmem:[%s392 + $0x570] sm:$0xf]
        %v755 = vld [vmem:[%s392 + $0x574] sm:$0xf]
        %v756 = vld [vmem:[%s392 + $0x578] sm:$0xf]
        %v757 = vld [vmem:[%s392 + $0x57c] sm:$0xf]
        %v758 = vld [vmem:[%s392 + $0x580] sm:$0xf]
        %v759 = vld [vmem:[%s392 + $0x584] sm:$0xf]
        %v760 = vld [vmem:[%s392 + $0x588] sm:$0xf]
        %v761 = vld [vmem:[%s392 + $0x58c] sm:$0xf]
        %v762 = vld [vmem:[%s392 + $0x590] sm:$0xf]
        %v763 = vld [vmem:[%s392 + $0x594] sm:$0xf]
        %v764 = vld [vmem:[%s392 + $0x598] sm:$0xf]
        %v765 = vld [vmem:[%s392 + $0x59c] sm:$0xf]
        %v766 = vld [vmem:[%s392 + $0x5a0] sm:$0xf]
        %v767 = vld [vmem:[%s392 + $0x5a4] sm:$0xf]
        %v768 = vld [vmem:[%s392 + $0x5a8] sm:$0xf]
        %v769 = vld [vmem:[%s392 + $0x5ac] sm:$0xf]
        %v770 = vld [vmem:[%s392 + $0x5b0] sm:$0xf]
        %v771 = vld [vmem:[%s392 + $0x5b4] sm:$0xf]
        %v772 = vld [vmem:[%s392 + $0x5b8] sm:$0xf]
        %v773 = vld [vmem:[%s392 + $0x5bc] sm:$0xf]
        %v774 = vld [vmem:[%s392 + $0x5c0] sm:$0xf]
        %v775 = vld [vmem:[%s392 + $0x5c4] sm:$0xf]
        %v776 = vld [vmem:[%s392 + $0x5c8] sm:$0xf]
        %v777 = vld [vmem:[%s392 + $0x5cc] sm:$0xf]
        %v778 = vld [vmem:[%s392 + $0x5d0] sm:$0xf]
        %v779 = vld [vmem:[%s392 + $0x5d4] sm:$0xf]
        %v780 = vld [vmem:[%s392 + $0x5d8] sm:$0xf]
        %v781 = vld [vmem:[%s392 + $0x5dc] sm:$0xf]
        %v782 = vld [vmem:[%s392 + $0x5e0] sm:$0xf]
        %v783 = vld [vmem:[%s392 + $0x5e4] sm:$0xf]
        %v784 = vld [vmem:[%s392 + $0x5e8] sm:$0xf]
        %v785 = vld [vmem:[%s392 + $0x5ec] sm:$0xf]
        %v786 = vld [vmem:[%s392 + $0x5f0] sm:$0xf]
        %v787 = vld [vmem:[%s392 + $0x5f4] sm:$0xf]
        %v788 = vld [vmem:[%s392 + $0x5f8] sm:$0xf]
        %v789 = vld [vmem:[%s392 + $0x5fc] sm:$0xf]
        %v790 = vld [vmem:[%s392 + $0x600] sm:$0xf]
        %v791 = vld [vmem:[%s392 + $0x604] sm:$0xf]
        %v792 = vld [vmem:[%s392 + $0x608] sm:$0xf]
        %v793 = vld [vmem:[%s392 + $0x60c] sm:$0xf]
        %v794 = vld [vmem:[%s392 + $0x610] sm:$0xf]
        %v795 = vld [vmem:[%s392 + $0x614] sm:$0xf]
        %v796 = vld [vmem:[%s392 + $0x618] sm:$0xf]
        %v797 = vld [vmem:[%s392 + $0x61c] sm:$0xf]
        %v798 = vld [vmem:[%s392 + $0x620] sm:$0xf]
        %v799 = vld [vmem:[%s392 + $0x624] sm:$0xf]
        %v800 = vld [vmem:[%s392 + $0x628] sm:$0xf]
        %v801 = vld [vmem:[%s392 + $0x62c] sm:$0xf]
        %v802 = vld [vmem:[%s392 + $0x630] sm:$0xf]
        %v803 = vld [vmem:[%s392 + $0x634] sm:$0xf]
        %v804 = vld [vmem:[%s392 + $0x638] sm:$0xf]
        %v805 = vld [vmem:[%s392 + $0x63c] sm:$0xf]
        %v806 = vld [vmem:[%s392 + $0x640] sm:$0xf]
        %v807 = vld [vmem:[%s392 + $0x644] sm:$0xf]
        %v808 = vld [vmem:[%s392 + $0x648] sm:$0xf]
        %v809 = vld [vmem:[%s392 + $0x64c] sm:$0xf]
        %v810 = vld [vmem:[%s392 + $0x650] sm:$0xf]
        %v811 = vld [vmem:[%s392 + $0x654] sm:$0xf]
        %v812 = vld [vmem:[%s392 + $0x658] sm:$0xf]
        %v813 = vld [vmem:[%s392 + $0x65c] sm:$0xf]
        %v814 = vld [vmem:[%s392 + $0x660] sm:$0xf]
        %v815 = vld [vmem:[%s392 + $0x664] sm:$0xf]
        %v816 = vld [vmem:[%s392 + $0x668] sm:$0xf]
        %v817 = vld [vmem:[%s392 + $0x66c] sm:$0xf]
        %v818 = vld [vmem:[%s392 + $0x670] sm:$0xf]
        %v819 = vld [vmem:[%s392 + $0x674] sm:$0xf]
        %v820 = vld [vmem:[%s392 + $0x678] sm:$0xf]
        %v821 = vld [vmem:[%s392 + $0x67c] sm:$0xf]
        %v822 = vld [vmem:[%s392 + $0x680] sm:$0xf]
        %v823 = vld [vmem:[%s392 + $0x684] sm:$0xf]
        %v824 = vld [vmem:[%s392 + $0x688] sm:$0xf]
        %v825 = vld [vmem:[%s392 + $0x68c] sm:$0xf]
        %v826 = vld [vmem:[%s392 + $0x690] sm:$0xf]
        %v827 = vld [vmem:[%s392 + $0x694] sm:$0xf]
        %v828 = vld [vmem:[%s392 + $0x698] sm:$0xf]
        %v829 = vld [vmem:[%s392 + $0x69c] sm:$0xf]
        %v830 = vld [vmem:[%s392 + $0x6a0] sm:$0xf]
        %v831 = vld [vmem:[%s392 + $0x6a4] sm:$0xf]
        %v832 = vld [vmem:[%s392 + $0x6a8] sm:$0xf]
        %v833 = vld [vmem:[%s392 + $0x6ac] sm:$0xf]
        %v834 = vld [vmem:[%s392 + $0x6b0] sm:$0xf]
        %v835 = vld [vmem:[%s392 + $0x6b4] sm:$0xf]
        %v836 = vld [vmem:[%s392 + $0x6b8] sm:$0xf]
        %v837 = vld [vmem:[%s392 + $0x6bc] sm:$0xf]
        %v838 = vld [vmem:[%s392 + $0x6c0] sm:$0xf]
        %v839 = vld [vmem:[%s392 + $0x6c4] sm:$0xf]
        %v840 = vld [vmem:[%s392 + $0x6c8] sm:$0xf]
        %v841 = vld [vmem:[%s392 + $0x6cc] sm:$0xf]
        %v842 = vld [vmem:[%s392 + $0x6d0] sm:$0xf]
        %v843 = vld [vmem:[%s392 + $0x6d4] sm:$0xf]
        %v844 = vld [vmem:[%s392 + $0x6d8] sm:$0xf]
        %v845 = vld [vmem:[%s392 + $0x6dc] sm:$0xf]
        %v846 = vld [vmem:[%s392 + $0x6e0] sm:$0xf]
        %v847 = vld [vmem:[%s392 + $0x6e4] sm:$0xf]
        %v848 = vld [vmem:[%s392 + $0x6e8] sm:$0xf]
        %v849 = vld [vmem:[%s392 + $0x6ec] sm:$0xf]
        %v850 = vld [vmem:[%s392 + $0x6f0] sm:$0xf]
        %v851 = vld [vmem:[%s392 + $0x6f4] sm:$0xf]
        %v852 = vld [vmem:[%s392 + $0x6f8] sm:$0xf]
        %v853 = vld [vmem:[%s392 + $0x6fc] sm:$0xf]
        %v854 = vld [vmem:[%s392 + $0x700] sm:$0xf]
        %v855 = vld [vmem:[%s392 + $0x704] sm:$0xf]
        %v856 = vld [vmem:[%s392 + $0x708] sm:$0xf]
        %v857 = vld [vmem:[%s392 + $0x70c] sm:$0xf]
        %v858 = vld [vmem:[%s392 + $0x710] sm:$0xf]
        %v859 = vld [vmem:[%s392 + $0x714] sm:$0xf]
        %v860 = vld [vmem:[%s392 + $0x718] sm:$0xf]
        %v861 = vld [vmem:[%s392 + $0x71c] sm:$0xf]
        %v862 = vld [vmem:[%s392 + $0x720] sm:$0xf]
        %v863 = vld [vmem:[%s392 + $0x724] sm:$0xf]
        %v864 = vld [vmem:[%s392 + $0x728] sm:$0xf]
        %v865 = vld [vmem:[%s392 + $0x72c] sm:$0xf]
        %v866 = vld [vmem:[%s392 + $0x730] sm:$0xf]
        %v867 = vld [vmem:[%s392 + $0x734] sm:$0xf]
        %v868 = vld [vmem:[%s392 + $0x738] sm:$0xf]
        %v869 = vld [vmem:[%s392 + $0x73c] sm:$0xf]
        %v870 = vld [vmem:[%s392 + $0x740] sm:$0xf]
        %v871 = vld [vmem:[%s392 + $0x744] sm:$0xf]
        %v872 = vld [vmem:[%s392 + $0x748] sm:$0xf]
        %v873 = vld [vmem:[%s392 + $0x74c] sm:$0xf]
        %v874 = vld [vmem:[%s392 + $0x750] sm:$0xf]
        %v875 = vld [vmem:[%s392 + $0x754] sm:$0xf]
        %v876 = vld [vmem:[%s392 + $0x758] sm:$0xf]
        %v877 = vld [vmem:[%s392 + $0x75c] sm:$0xf]
        %v878 = vld [vmem:[%s392 + $0x760] sm:$0xf]
        %v879 = vld [vmem:[%s392 + $0x764] sm:$0xf]
        %v880 = vld [vmem:[%s392 + $0x768] sm:$0xf]
        %v881 = vld [vmem:[%s392 + $0x76c] sm:$0xf]
        %v882 = vld [vmem:[%s392 + $0x770] sm:$0xf]
        %v883 = vld [vmem:[%s392 + $0x774] sm:$0xf]
        %v884 = vld [vmem:[%s392 + $0x778] sm:$0xf]
        %v885 = vld [vmem:[%s392 + $0x77c] sm:$0xf]
        %v886 = vld [vmem:[%s392 + $0x780] sm:$0xf]
        %v887 = vld [vmem:[%s392 + $0x784] sm:$0xf]
        %v888 = vld [vmem:[%s392 + $0x788] sm:$0xf]
        %v889 = vld [vmem:[%s392 + $0x78c] sm:$0xf]
        %v890 = vld [vmem:[%s392 + $0x790] sm:$0xf]
        %v891 = vld [vmem:[%s392 + $0x794] sm:$0xf]
        %v892 = vld [vmem:[%s392 + $0x798] sm:$0xf]
        %v893 = vld [vmem:[%s392 + $0x79c] sm:$0xf]
        %v894 = vld [vmem:[%s392 + $0x7a0] sm:$0xf]
        %v895 = vld [vmem:[%s392 + $0x7a4] sm:$0xf]
        %v896 = vld [vmem:[%s392 + $0x7a8] sm:$0xf]
        %v897 = vld [vmem:[%s392 + $0x7ac] sm:$0xf]
        %v898 = vld [vmem:[%s392 + $0x7b0] sm:$0xf]
        %v899 = vld [vmem:[%s392 + $0x7b4] sm:$0xf]
        %v900 = vld [vmem:[%s392 + $0x7b8] sm:$0xf]
        %v901 = vld [vmem:[%s392 + $0x7bc] sm:$0xf]
        %v902 = vld [vmem:[%s392 + $0x7c0] sm:$0xf]
        %v903 = vld [vmem:[%s392 + $0x7c4] sm:$0xf]
        %v904 = vld [vmem:[%s392 + $0x7c8] sm:$0xf]
        %v905 = vld [vmem:[%s392 + $0x7cc] sm:$0xf]
        %v906 = vld [vmem:[%s392 + $0x7d0] sm:$0xf]
        %v907 = vld [vmem:[%s392 + $0x7d4] sm:$0xf]
        %v908 = vld [vmem:[%s392 + $0x7d8] sm:$0xf]
        %v909 = vld [vmem:[%s392 + $0x7dc] sm:$0xf]
        %v910 = vld [vmem:[%s392 + $0x7e0] sm:$0xf]
        %v911 = vld [vmem:[%s392 + $0x7e4] sm:$0xf]
        %v912 = vld [vmem:[%s392 + $0x7e8] sm:$0xf]
        %v913 = vld [vmem:[%s392 + $0x7ec] sm:$0xf]
        %v914 = vld [vmem:[%s392 + $0x7f0] sm:$0xf]
        %v915 = vld [vmem:[%s392 + $0x7f4] sm:$0xf]
        %v916 = vld [vmem:[%s392 + $0x7f8] sm:$0xf]
        %v917 = vld [vmem:[%s392 + $0x7fc] sm:$0xf]
        %v922 = vcombine.high %v402, %v402
        %v924 = vunpack.c.l.s4 1966171168
        %v925 = vunpack.c.0.s8 %v924
        %v926 = vlaneseq
        %v927 = vshrl.u32 %v926, 7
        %v928 = vsub.s32 %v925, %v927
        %v929 = vrot.slane %v402, %v928
        %v931 = vunpack.c.l.s4 1966171168
        %v932 = vunpack.c.0.s8 %v931
        %v933 = vlaneseq
        %v934 = vshrl.u32 %v933, 7
        %v935 = vsub.s32 %v932, %v934
        %v936 = vrot.slane %v922, %v935
        %v937 = vcombine.high %v929, %v929
        %v938 = vcombine.high %v936, %v936
        %v940 = vunpack.c.l.s4 1966171168
        %v941 = vunpack.c.0.s8 %v940
        %v942 = vlaneseq
        %v943 = vshrl.u32 %v942, 7
        %v944 = vsub.s32 %v941, %v943
        %v945 = vrot.slane %v929, %v944
        %v947 = vunpack.c.l.s4 1966171168
        %v948 = vunpack.c.0.s8 %v947
        %v949 = vlaneseq
        %v950 = vshrl.u32 %v949, 7
        %v951 = vsub.s32 %v948, %v950
        %v952 = vrot.slane %v936, %v951
        %v954 = vunpack.c.l.s4 1966171168
        %v955 = vunpack.c.0.s8 %v954
        %v956 = vlaneseq
        %v957 = vshrl.u32 %v956, 7
        %v958 = vsub.s32 %v955, %v957
        %v959 = vrot.slane %v937, %v958
        %v961 = vunpack.c.l.s4 1966171168
        %v962 = vunpack.c.0.s8 %v961
        %v963 = vlaneseq
        %v964 = vshrl.u32 %v963, 7
        %v965 = vsub.s32 %v962, %v964
        %v966 = vrot.slane %v938, %v965
        %v967 = vcombine.high %v945, %v945
        %v968 = vcombine.high %v952, %v952
        %v969 = vcombine.high %v959, %v959
        %v970 = vcombine.high %v966, %v966
        %v971 = vcombine.high %v403, %v403
        %v973 = vunpack.c.l.s4 1966171168
        %v974 = vunpack.c.0.s8 %v973
        %v975 = vlaneseq
        %v976 = vshrl.u32 %v975, 7
        %v977 = vsub.s32 %v974, %v976
        %v978 = vrot.slane %v403, %v977
        %v980 = vunpack.c.l.s4 1966171168
        %v981 = vunpack.c.0.s8 %v980
        %v982 = vlaneseq
        %v983 = vshrl.u32 %v982, 7
        %v984 = vsub.s32 %v981, %v983
        %v985 = vrot.slane %v971, %v984
        %v986 = vcombine.high %v978, %v978
        %v987 = vcombine.high %v985, %v985
        %v989 = vunpack.c.l.s4 1966171168
        %v990 = vunpack.c.0.s8 %v989
        %v991 = vlaneseq
        %v992 = vshrl.u32 %v991, 7
        %v993 = vsub.s32 %v990, %v992
        %v994 = vrot.slane %v978, %v993
        %v996 = vunpack.c.l.s4 1966171168
        %v997 = vunpack.c.0.s8 %v996
        %v998 = vlaneseq
        %v999 = vshrl.u32 %v998, 7
        %v1000 = vsub.s32 %v997, %v999
        %v1001 = vrot.slane %v985, %v1000
        %v1003 = vunpack.c.l.s4 1966171168
        %v1004 = vunpack.c.0.s8 %v1003
        %v1005 = vlaneseq
        %v1006 = vshrl.u32 %v1005, 7
        %v1007 = vsub.s32 %v1004, %v1006
        %v1008 = vrot.slane %v986, %v1007
        %v1010 = vunpack.c.l.s4 1966171168
        %v1011 = vunpack.c.0.s8 %v1010
        %v1012 = vlaneseq
        %v1013 = vshrl.u32 %v1012, 7
        %v1014 = vsub.s32 %v1011, %v1013
        %v1015 = vrot.slane %v987, %v1014
        %v1016 = vcombine.high %v994, %v994
        %v1017 = vcombine.high %v1001, %v1001
        %v1018 = vcombine.high %v1008, %v1008
        %v1019 = vcombine.high %v1015, %v1015
        %v1020 = vcombine.high %v404, %v404
        %v1022 = vunpack.c.l.s4 1966171168
        %v1023 = vunpack.c.0.s8 %v1022
        %v1024 = vlaneseq
        %v1025 = vshrl.u32 %v1024, 7
        %v1026 = vsub.s32 %v1023, %v1025
        %v1027 = vrot.slane %v404, %v1026
        %v1029 = vunpack.c.l.s4 1966171168
        %v1030 = vunpack.c.0.s8 %v1029
        %v1031 = vlaneseq
        %v1032 = vshrl.u32 %v1031, 7
        %v1033 = vsub.s32 %v1030, %v1032
        %v1034 = vrot.slane %v1020, %v1033
        %v1035 = vcombine.high %v1027, %v1027
        %v1036 = vcombine.high %v1034, %v1034
        %v1038 = vunpack.c.l.s4 1966171168
        %v1039 = vunpack.c.0.s8 %v1038
        %v1040 = vlaneseq
        %v1041 = vshrl.u32 %v1040, 7
        %v1042 = vsub.s32 %v1039, %v1041
        %v1043 = vrot.slane %v1027, %v1042
        %v1045 = vunpack.c.l.s4 1966171168
        %v1046 = vunpack.c.0.s8 %v1045
        %v1047 = vlaneseq
        %v1048 = vshrl.u32 %v1047, 7
        %v1049 = vsub.s32 %v1046, %v1048
        %v1050 = vrot.slane %v1034, %v1049
        %v1052 = vunpack.c.l.s4 1966171168
        %v1053 = vunpack.c.0.s8 %v1052
        %v1054 = vlaneseq
        %v1055 = vshrl.u32 %v1054, 7
        %v1056 = vsub.s32 %v1053, %v1055
        %v1057 = vrot.slane %v1035, %v1056
        %v1059 = vunpack.c.l.s4 1966171168
        %v1060 = vunpack.c.0.s8 %v1059
        %v1061 = vlaneseq
        %v1062 = vshrl.u32 %v1061, 7
        %v1063 = vsub.s32 %v1060, %v1062
        %v1064 = vrot.slane %v1036, %v1063
        %v1065 = vcombine.high %v1043, %v1043
        %v1066 = vcombine.high %v1050, %v1050
        %v1067 = vcombine.high %v1057, %v1057
        %v1068 = vcombine.high %v1064, %v1064
        %v1069 = vcombine.high %v405, %v405
        %v1071 = vunpack.c.l.s4 1966171168
        %v1072 = vunpack.c.0.s8 %v1071
        %v1073 = vlaneseq
        %v1074 = vshrl.u32 %v1073, 7
        %v1075 = vsub.s32 %v1072, %v1074
        %v1076 = vrot.slane %v405, %v1075
        %v1078 = vunpack.c.l.s4 1966171168
        %v1079 = vunpack.c.0.s8 %v1078
        %v1080 = vlaneseq
        %v1081 = vshrl.u32 %v1080, 7
        %v1082 = vsub.s32 %v1079, %v1081
        %v1083 = vrot.slane %v1069, %v1082
        %v1084 = vcombine.high %v1076, %v1076
        %v1085 = vcombine.high %v1083, %v1083
        %v1087 = vunpack.c.l.s4 1966171168
        %v1088 = vunpack.c.0.s8 %v1087
        %v1089 = vlaneseq
        %v1090 = vshrl.u32 %v1089, 7
        %v1091 = vsub.s32 %v1088, %v1090
        %v1092 = vrot.slane %v1076, %v1091
        %v1094 = vunpack.c.l.s4 1966171168
        %v1095 = vunpack.c.0.s8 %v1094
        %v1096 = vlaneseq
        %v1097 = vshrl.u32 %v1096, 7
        %v1098 = vsub.s32 %v1095, %v1097
        %v1099 = vrot.slane %v1083, %v1098
        %v1101 = vunpack.c.l.s4 1966171168
        %v1102 = vunpack.c.0.s8 %v1101
        %v1103 = vlaneseq
        %v1104 = vshrl.u32 %v1103, 7
        %v1105 = vsub.s32 %v1102, %v1104
        %v1106 = vrot.slane %v1084, %v1105
        %v1108 = vunpack.c.l.s4 1966171168
        %v1109 = vunpack.c.0.s8 %v1108
        %v1110 = vlaneseq
        %v1111 = vshrl.u32 %v1110, 7
        %v1112 = vsub.s32 %v1109, %v1111
        %v1113 = vrot.slane %v1085, %v1112
        %v1114 = vcombine.high %v1092, %v1092
        %v1115 = vcombine.high %v1099, %v1099
        %v1116 = vcombine.high %v1106, %v1106
        %v1117 = vcombine.high %v1113, %v1113
        %v1662 = vunpack.c.l.b16 %v406
        %v1663 = vunpack.c.l.b16 %v407
        %v1664 = vunpack.c.l.b16 %v408
        %v1665 = vunpack.c.l.b16 %v409
        %v1666 = vunpack.c.l.b16 %v410
        %v1667 = vunpack.c.l.b16 %v411
        %v1668 = vunpack.c.l.b16 %v412
        %v1669 = vunpack.c.l.b16 %v413
        %v1670 = vunpack.c.l.b16 %v414
        %v1671 = vunpack.c.l.b16 %v415
        %v1672 = vunpack.c.l.b16 %v416
        %v1673 = vunpack.c.l.b16 %v417
        %v1674 = vunpack.c.l.b16 %v418
        %v1675 = vunpack.c.l.b16 %v419
        %v1676 = vunpack.c.l.b16 %v420
        %v1677 = vunpack.c.l.b16 %v421
        %v1678 = vunpack.c.l.b16 %v422
        %v1679 = vunpack.c.l.b16 %v423
        %v1680 = vunpack.c.l.b16 %v424
        %v1681 = vunpack.c.l.b16 %v425
        %v1682 = vunpack.c.l.b16 %v426
        %v1683 = vunpack.c.l.b16 %v427
        %v1684 = vunpack.c.l.b16 %v428
        %v1685 = vunpack.c.l.b16 %v429
        %v1686 = vunpack.c.l.b16 %v430
        %v1687 = vunpack.c.l.b16 %v431
        %v1688 = vunpack.c.l.b16 %v432
        %v1689 = vunpack.c.l.b16 %v433
        %v1690 = vunpack.c.l.b16 %v434
        %v1691 = vunpack.c.l.b16 %v435
        %v1692 = vunpack.c.l.b16 %v436
        %v1693 = vunpack.c.l.b16 %v437
        %v1694 = vunpack.c.l.b16 %v438
        %v1695 = vunpack.c.l.b16 %v439
        %v1696 = vunpack.c.l.b16 %v440
        %v1697 = vunpack.c.l.b16 %v441
        %v1698 = vunpack.c.l.b16 %v442
        %v1699 = vunpack.c.l.b16 %v443
        %v1700 = vunpack.c.l.b16 %v444
        %v1701 = vunpack.c.l.b16 %v445
        %v1702 = vunpack.c.l.b16 %v446
        %v1703 = vunpack.c.l.b16 %v447
        %v1704 = vunpack.c.l.b16 %v448
        %v1705 = vunpack.c.l.b16 %v449
        %v1706 = vunpack.c.l.b16 %v450
        %v1707 = vunpack.c.l.b16 %v451
        %v1708 = vunpack.c.l.b16 %v452
        %v1709 = vunpack.c.l.b16 %v453
        %v1710 = vunpack.c.l.b16 %v454
        %v1711 = vunpack.c.l.b16 %v455
        %v1712 = vunpack.c.l.b16 %v456
        %v1713 = vunpack.c.l.b16 %v457
        %v1714 = vunpack.c.l.b16 %v458
        %v1715 = vunpack.c.l.b16 %v459
        %v1716 = vunpack.c.l.b16 %v460
        %v1717 = vunpack.c.l.b16 %v461
        %v1718 = vunpack.c.l.b16 %v462
        %v1719 = vunpack.c.l.b16 %v463
        %v1720 = vunpack.c.l.b16 %v464
        %v1721 = vunpack.c.l.b16 %v465
        %v1722 = vunpack.c.l.b16 %v466
        %v1723 = vunpack.c.l.b16 %v467
        %v1724 = vunpack.c.l.b16 %v468
        %v1725 = vunpack.c.l.b16 %v469
        %v1726 = vunpack.c.l.b16 %v470
        %v1727 = vunpack.c.l.b16 %v471
        %v1728 = vunpack.c.l.b16 %v472
        %v1729 = vunpack.c.l.b16 %v473
        %v1730 = vunpack.c.l.b16 %v474
        %v1731 = vunpack.c.l.b16 %v475
        %v1732 = vunpack.c.l.b16 %v476
        %v1733 = vunpack.c.l.b16 %v477
        %v1734 = vunpack.c.l.b16 %v478
        %v1735 = vunpack.c.l.b16 %v479
        %v1736 = vunpack.c.l.b16 %v480
        %v1737 = vunpack.c.l.b16 %v481
        %v1738 = vunpack.c.l.b16 %v482
        %v1739 = vunpack.c.l.b16 %v483
        %v1740 = vunpack.c.l.b16 %v484
        %v1741 = vunpack.c.l.b16 %v485
        %v1742 = vunpack.c.l.b16 %v486
        %v1743 = vunpack.c.l.b16 %v487
        %v1744 = vunpack.c.l.b16 %v488
        %v1745 = vunpack.c.l.b16 %v489
        %v1746 = vunpack.c.l.b16 %v490
        %v1747 = vunpack.c.l.b16 %v491
        %v1748 = vunpack.c.l.b16 %v492
        %v1749 = vunpack.c.l.b16 %v493
        %v1750 = vunpack.c.l.b16 %v494
        %v1751 = vunpack.c.l.b16 %v495
        %v1752 = vunpack.c.l.b16 %v496
        %v1753 = vunpack.c.l.b16 %v497
        %v1754 = vunpack.c.l.b16 %v498
        %v1755 = vunpack.c.l.b16 %v499
        %v1756 = vunpack.c.l.b16 %v500
        %v1757 = vunpack.c.l.b16 %v501
        %v1758 = vunpack.c.l.b16 %v502
        %v1759 = vunpack.c.l.b16 %v503
        %v1760 = vunpack.c.l.b16 %v504
        %v1761 = vunpack.c.l.b16 %v505
        %v1762 = vunpack.c.l.b16 %v506
        %v1763 = vunpack.c.l.b16 %v507
        %v1764 = vunpack.c.l.b16 %v508
        %v1765 = vunpack.c.l.b16 %v509
        %v1766 = vunpack.c.l.b16 %v510
        %v1767 = vunpack.c.l.b16 %v511
        %v1768 = vunpack.c.l.b16 %v512
        %v1769 = vunpack.c.l.b16 %v513
        %v1770 = vunpack.c.l.b16 %v514
        %v1771 = vunpack.c.l.b16 %v515
        %v1772 = vunpack.c.l.b16 %v516
        %v1773 = vunpack.c.l.b16 %v517
        %v1774 = vunpack.c.l.b16 %v518
        %v1775 = vunpack.c.l.b16 %v519
        %v1776 = vunpack.c.l.b16 %v520
        %v1777 = vunpack.c.l.b16 %v521
        %v1778 = vunpack.c.l.b16 %v522
        %v1779 = vunpack.c.l.b16 %v523
        %v1780 = vunpack.c.l.b16 %v524
        %v1781 = vunpack.c.l.b16 %v525
        %v1782 = vunpack.c.l.b16 %v526
        %v1783 = vunpack.c.l.b16 %v527
        %v1784 = vunpack.c.l.b16 %v528
        %v1785 = vunpack.c.l.b16 %v529
        %v1786 = vunpack.c.l.b16 %v530
        %v1787 = vunpack.c.l.b16 %v531
        %v1788 = vunpack.c.l.b16 %v532
        %v1789 = vunpack.c.l.b16 %v533
        %v1790 = vunpack.c.l.b16 %v534
        %v1791 = vunpack.c.l.b16 %v535
        %v1792 = vunpack.c.l.b16 %v536
        %v1793 = vunpack.c.l.b16 %v537
        %v1794 = vunpack.c.l.b16 %v538
        %v1795 = vunpack.c.l.b16 %v539
        %v1796 = vunpack.c.l.b16 %v540
        %v1797 = vunpack.c.l.b16 %v541
        %v1798 = vunpack.c.l.b16 %v542
        %v1799 = vunpack.c.l.b16 %v543
        %v1800 = vunpack.c.l.b16 %v544
        %v1801 = vunpack.c.l.b16 %v545
        %v1802 = vunpack.c.l.b16 %v546
        %v1803 = vunpack.c.l.b16 %v547
        %v1804 = vunpack.c.l.b16 %v548
        %v1805 = vunpack.c.l.b16 %v549
        %v1806 = vunpack.c.l.b16 %v550
        %v1807 = vunpack.c.l.b16 %v551
        %v1808 = vunpack.c.l.b16 %v552
        %v1809 = vunpack.c.l.b16 %v553
        %v1810 = vunpack.c.l.b16 %v554
        %v1811 = vunpack.c.l.b16 %v555
        %v1812 = vunpack.c.l.b16 %v556
        %v1813 = vunpack.c.l.b16 %v557
        %v1814 = vunpack.c.l.b16 %v558
        %v1815 = vunpack.c.l.b16 %v559
        %v1816 = vunpack.c.l.b16 %v560
        %v1817 = vunpack.c.l.b16 %v561
        %v1818 = vunpack.c.l.b16 %v562
        %v1819 = vunpack.c.l.b16 %v563
        %v1820 = vunpack.c.l.b16 %v564
        %v1821 = vunpack.c.l.b16 %v565
        %v1822 = vunpack.c.l.b16 %v566
        %v1823 = vunpack.c.l.b16 %v567
        %v1824 = vunpack.c.l.b16 %v568
        %v1825 = vunpack.c.l.b16 %v569
        %v1826 = vunpack.c.l.b16 %v570
        %v1827 = vunpack.c.l.b16 %v571
        %v1828 = vunpack.c.l.b16 %v572
        %v1829 = vunpack.c.l.b16 %v573
        %v1830 = vunpack.c.l.b16 %v574
        %v1831 = vunpack.c.l.b16 %v575
        %v1832 = vunpack.c.l.b16 %v576
        %v1833 = vunpack.c.l.b16 %v577
        %v1834 = vunpack.c.l.b16 %v578
        %v1835 = vunpack.c.l.b16 %v579
        %v1836 = vunpack.c.l.b16 %v580
        %v1837 = vunpack.c.l.b16 %v581
        %v1838 = vunpack.c.l.b16 %v582
        %v1839 = vunpack.c.l.b16 %v583
        %v1840 = vunpack.c.l.b16 %v584
        %v1841 = vunpack.c.l.b16 %v585
        %v1842 = vunpack.c.l.b16 %v586
        %v1843 = vunpack.c.l.b16 %v587
        %v1844 = vunpack.c.l.b16 %v588
        %v1845 = vunpack.c.l.b16 %v589
        %v1846 = vunpack.c.l.b16 %v590
        %v1847 = vunpack.c.l.b16 %v591
        %v1848 = vunpack.c.l.b16 %v592
        %v1849 = vunpack.c.l.b16 %v593
        %v1850 = vunpack.c.l.b16 %v594
        %v1851 = vunpack.c.l.b16 %v595
        %v1852 = vunpack.c.l.b16 %v596
        %v1853 = vunpack.c.l.b16 %v597
        %v1854 = vunpack.c.l.b16 %v598
        %v1855 = vunpack.c.l.b16 %v599
        %v1856 = vunpack.c.l.b16 %v600
        %v1857 = vunpack.c.l.b16 %v601
        %v1858 = vunpack.c.l.b16 %v602
        %v1859 = vunpack.c.l.b16 %v603
        %v1860 = vunpack.c.l.b16 %v604
        %v1861 = vunpack.c.l.b16 %v605
        %v1862 = vunpack.c.l.b16 %v606
        %v1863 = vunpack.c.l.b16 %v607
        %v1864 = vunpack.c.l.b16 %v608
        %v1865 = vunpack.c.l.b16 %v609
        %v1866 = vunpack.c.l.b16 %v610
        %v1867 = vunpack.c.l.b16 %v611
        %v1868 = vunpack.c.l.b16 %v612
        %v1869 = vunpack.c.l.b16 %v613
        %v1870 = vunpack.c.l.b16 %v614
        %v1871 = vunpack.c.l.b16 %v615
        %v1872 = vunpack.c.l.b16 %v616
        %v1873 = vunpack.c.l.b16 %v617
        %v1874 = vunpack.c.l.b16 %v618
        %v1875 = vunpack.c.l.b16 %v619
        %v1876 = vunpack.c.l.b16 %v620
        %v1877 = vunpack.c.l.b16 %v621
        %v1878 = vunpack.c.l.b16 %v622
        %v1879 = vunpack.c.l.b16 %v623
        %v1880 = vunpack.c.l.b16 %v624
        %v1881 = vunpack.c.l.b16 %v625
        %v1882 = vunpack.c.l.b16 %v626
        %v1883 = vunpack.c.l.b16 %v627
        %v1884 = vunpack.c.l.b16 %v628
        %v1885 = vunpack.c.l.b16 %v629
        %v1886 = vunpack.c.l.b16 %v630
        %v1887 = vunpack.c.l.b16 %v631
        %v1888 = vunpack.c.l.b16 %v632
        %v1889 = vunpack.c.l.b16 %v633
        %v1890 = vunpack.c.l.b16 %v634
        %v1891 = vunpack.c.l.b16 %v635
        %v1892 = vunpack.c.l.b16 %v636
        %v1893 = vunpack.c.l.b16 %v637
        %v1894 = vunpack.c.l.b16 %v638
        %v1895 = vunpack.c.l.b16 %v639
        %v1896 = vunpack.c.l.b16 %v640
        %v1897 = vunpack.c.l.b16 %v641
        %v1898 = vunpack.c.l.b16 %v642
        %v1899 = vunpack.c.l.b16 %v643
        %v1900 = vunpack.c.l.b16 %v644
        %v1901 = vunpack.c.l.b16 %v645
        %v1902 = vunpack.c.l.b16 %v646
        %v1903 = vunpack.c.l.b16 %v647
        %v1904 = vunpack.c.l.b16 %v648
        %v1905 = vunpack.c.l.b16 %v649
        %v1906 = vunpack.c.l.b16 %v650
        %v1907 = vunpack.c.l.b16 %v651
        %v1908 = vunpack.c.l.b16 %v652
        %v1909 = vunpack.c.l.b16 %v653
        %v1910 = vunpack.c.l.b16 %v654
        %v1911 = vunpack.c.l.b16 %v655
        %v1912 = vunpack.c.l.b16 %v656
        %v1913 = vunpack.c.l.b16 %v657
        %v1914 = vunpack.c.l.b16 %v658
        %v1915 = vunpack.c.l.b16 %v659
        %v1916 = vunpack.c.l.b16 %v660
        %v1917 = vunpack.c.l.b16 %v661
        %v1918 = vunpack.c.l.b16 %v662
        %v1919 = vunpack.c.l.b16 %v663
        %v1920 = vunpack.c.l.b16 %v664
        %v1921 = vunpack.c.l.b16 %v665
        %v1922 = vunpack.c.l.b16 %v666
        %v1923 = vunpack.c.l.b16 %v667
        %v1924 = vunpack.c.l.b16 %v668
        %v1925 = vunpack.c.l.b16 %v669
        %v1926 = vunpack.c.l.b16 %v670
        %v1927 = vunpack.c.l.b16 %v671
        %v1928 = vunpack.c.l.b16 %v672
        %v1929 = vunpack.c.l.b16 %v673
        %v1930 = vunpack.c.l.b16 %v674
        %v1931 = vunpack.c.l.b16 %v675
        %v1932 = vunpack.c.l.b16 %v676
        %v1933 = vunpack.c.l.b16 %v677
        %v1934 = vunpack.c.l.b16 %v678
        %v1935 = vunpack.c.l.b16 %v679
        %v1936 = vunpack.c.l.b16 %v680
        %v1937 = vunpack.c.l.b16 %v681
        %v1938 = vunpack.c.l.b16 %v682
        %v1939 = vunpack.c.l.b16 %v683
        %v1940 = vunpack.c.l.b16 %v684
        %v1941 = vunpack.c.l.b16 %v685
        %v1942 = vunpack.c.l.b16 %v686
        %v1943 = vunpack.c.l.b16 %v687
        %v1944 = vunpack.c.l.b16 %v688
        %v1945 = vunpack.c.l.b16 %v689
        %v1946 = vunpack.c.l.b16 %v690
        %v1947 = vunpack.c.l.b16 %v691
        %v1948 = vunpack.c.l.b16 %v692
        %v1949 = vunpack.c.l.b16 %v693
        %v1950 = vunpack.c.l.b16 %v694
        %v1951 = vunpack.c.l.b16 %v695
        %v1952 = vunpack.c.l.b16 %v696
        %v1953 = vunpack.c.l.b16 %v697
        %v1954 = vunpack.c.l.b16 %v698
        %v1955 = vunpack.c.l.b16 %v699
        %v1956 = vunpack.c.l.b16 %v700
        %v1957 = vunpack.c.l.b16 %v701
        %v1958 = vunpack.c.l.b16 %v702
        %v1959 = vunpack.c.l.b16 %v703
        %v1960 = vunpack.c.l.b16 %v704
        %v1961 = vunpack.c.l.b16 %v705
        %v1962 = vunpack.c.l.b16 %v706
        %v1963 = vunpack.c.l.b16 %v707
        %v1964 = vunpack.c.l.b16 %v708
        %v1965 = vunpack.c.l.b16 %v709
        %v1966 = vunpack.c.l.b16 %v710
        %v1967 = vunpack.c.l.b16 %v711
        %v1968 = vunpack.c.l.b16 %v712
        %v1969 = vunpack.c.l.b16 %v713
        %v1970 = vunpack.c.l.b16 %v714
        %v1971 = vunpack.c.l.b16 %v715
        %v1972 = vunpack.c.l.b16 %v716
        %v1973 = vunpack.c.l.b16 %v717
        %v1974 = vunpack.c.l.b16 %v718
        %v1975 = vunpack.c.l.b16 %v719
        %v1976 = vunpack.c.l.b16 %v720
        %v1977 = vunpack.c.l.b16 %v721
        %v1978 = vunpack.c.l.b16 %v722
        %v1979 = vunpack.c.l.b16 %v723
        %v1980 = vunpack.c.l.b16 %v724
        %v1981 = vunpack.c.l.b16 %v725
        %v1982 = vunpack.c.l.b16 %v726
        %v1983 = vunpack.c.l.b16 %v727
        %v1984 = vunpack.c.l.b16 %v728
        %v1985 = vunpack.c.l.b16 %v729
        %v1986 = vunpack.c.l.b16 %v730
        %v1987 = vunpack.c.l.b16 %v731
        %v1988 = vunpack.c.l.b16 %v732
        %v1989 = vunpack.c.l.b16 %v733
        %v1990 = vunpack.c.l.b16 %v734
        %v1991 = vunpack.c.l.b16 %v735
        %v1992 = vunpack.c.l.b16 %v736
        %v1993 = vunpack.c.l.b16 %v737
        %v1994 = vunpack.c.l.b16 %v738
        %v1995 = vunpack.c.l.b16 %v739
        %v1996 = vunpack.c.l.b16 %v740
        %v1997 = vunpack.c.l.b16 %v741
        %v1998 = vunpack.c.l.b16 %v742
        %v1999 = vunpack.c.l.b16 %v743
        %v2000 = vunpack.c.l.b16 %v744
        %v2001 = vunpack.c.l.b16 %v745
        %v2002 = vunpack.c.l.b16 %v746
        %v2003 = vunpack.c.l.b16 %v747
        %v2004 = vunpack.c.l.b16 %v748
        %v2005 = vunpack.c.l.b16 %v749
        %v2006 = vunpack.c.l.b16 %v750
        %v2007 = vunpack.c.l.b16 %v751
        %v2008 = vunpack.c.l.b16 %v752
        %v2009 = vunpack.c.l.b16 %v753
        %v2010 = vunpack.c.l.b16 %v754
        %v2011 = vunpack.c.l.b16 %v755
        %v2012 = vunpack.c.l.b16 %v756
        %v2013 = vunpack.c.l.b16 %v757
        %v2014 = vunpack.c.l.b16 %v758
        %v2015 = vunpack.c.l.b16 %v759
        %v2016 = vunpack.c.l.b16 %v760
        %v2017 = vunpack.c.l.b16 %v761
        %v2018 = vunpack.c.l.b16 %v762
        %v2019 = vunpack.c.l.b16 %v763
        %v2020 = vunpack.c.l.b16 %v764
        %v2021 = vunpack.c.l.b16 %v765
        %v2022 = vunpack.c.l.b16 %v766
        %v2023 = vunpack.c.l.b16 %v767
        %v2024 = vunpack.c.l.b16 %v768
        %v2025 = vunpack.c.l.b16 %v769
        %v2026 = vunpack.c.l.b16 %v770
        %v2027 = vunpack.c.l.b16 %v771
        %v2028 = vunpack.c.l.b16 %v772
        %v2029 = vunpack.c.l.b16 %v773
        %v2030 = vunpack.c.l.b16 %v774
        %v2031 = vunpack.c.l.b16 %v775
        %v2032 = vunpack.c.l.b16 %v776
        %v2033 = vunpack.c.l.b16 %v777
        %v2034 = vunpack.c.l.b16 %v778
        %v2035 = vunpack.c.l.b16 %v779
        %v2036 = vunpack.c.l.b16 %v780
        %v2037 = vunpack.c.l.b16 %v781
        %v2038 = vunpack.c.l.b16 %v782
        %v2039 = vunpack.c.l.b16 %v783
        %v2040 = vunpack.c.l.b16 %v784
        %v2041 = vunpack.c.l.b16 %v785
        %v2042 = vunpack.c.l.b16 %v786
        %v2043 = vunpack.c.l.b16 %v787
        %v2044 = vunpack.c.l.b16 %v788
        %v2045 = vunpack.c.l.b16 %v789
        %v2046 = vunpack.c.l.b16 %v790
        %v2047 = vunpack.c.l.b16 %v791
        %v2048 = vunpack.c.l.b16 %v792
        %v2049 = vunpack.c.l.b16 %v793
        %v2050 = vunpack.c.l.b16 %v794
        %v2051 = vunpack.c.l.b16 %v795
        %v2052 = vunpack.c.l.b16 %v796
        %v2053 = vunpack.c.l.b16 %v797
        %v2054 = vunpack.c.l.b16 %v798
        %v2055 = vunpack.c.l.b16 %v799
        %v2056 = vunpack.c.l.b16 %v800
        %v2057 = vunpack.c.l.b16 %v801
        %v2058 = vunpack.c.l.b16 %v802
        %v2059 = vunpack.c.l.b16 %v803
        %v2060 = vunpack.c.l.b16 %v804
        %v2061 = vunpack.c.l.b16 %v805
        %v2062 = vunpack.c.l.b16 %v806
        %v2063 = vunpack.c.l.b16 %v807
        %v2064 = vunpack.c.l.b16 %v808
        %v2065 = vunpack.c.l.b16 %v809
        %v2066 = vunpack.c.l.b16 %v810
        %v2067 = vunpack.c.l.b16 %v811
        %v2068 = vunpack.c.l.b16 %v812
        %v2069 = vunpack.c.l.b16 %v813
        %v2070 = vunpack.c.l.b16 %v814
        %v2071 = vunpack.c.l.b16 %v815
        %v2072 = vunpack.c.l.b16 %v816
        %v2073 = vunpack.c.l.b16 %v817
        %v2074 = vunpack.c.l.b16 %v818
        %v2075 = vunpack.c.l.b16 %v819
        %v2076 = vunpack.c.l.b16 %v820
        %v2077 = vunpack.c.l.b16 %v821
        %v2078 = vunpack.c.l.b16 %v822
        %v2079 = vunpack.c.l.b16 %v823
        %v2080 = vunpack.c.l.b16 %v824
        %v2081 = vunpack.c.l.b16 %v825
        %v2082 = vunpack.c.l.b16 %v826
        %v2083 = vunpack.c.l.b16 %v827
        %v2084 = vunpack.c.l.b16 %v828
        %v2085 = vunpack.c.l.b16 %v829
        %v2086 = vunpack.c.l.b16 %v830
        %v2087 = vunpack.c.l.b16 %v831
        %v2088 = vunpack.c.l.b16 %v832
        %v2089 = vunpack.c.l.b16 %v833
        %v2090 = vunpack.c.l.b16 %v834
        %v2091 = vunpack.c.l.b16 %v835
        %v2092 = vunpack.c.l.b16 %v836
        %v2093 = vunpack.c.l.b16 %v837
        %v2094 = vunpack.c.l.b16 %v838
        %v2095 = vunpack.c.l.b16 %v839
        %v2096 = vunpack.c.l.b16 %v840
        %v2097 = vunpack.c.l.b16 %v841
        %v2098 = vunpack.c.l.b16 %v842
        %v2099 = vunpack.c.l.b16 %v843
        %v2100 = vunpack.c.l.b16 %v844
        %v2101 = vunpack.c.l.b16 %v845
        %v2102 = vunpack.c.l.b16 %v846
        %v2103 = vunpack.c.l.b16 %v847
        %v2104 = vunpack.c.l.b16 %v848
        %v2105 = vunpack.c.l.b16 %v849
        %v2106 = vunpack.c.l.b16 %v850
        %v2107 = vunpack.c.l.b16 %v851
        %v2108 = vunpack.c.l.b16 %v852
        %v2109 = vunpack.c.l.b16 %v853
        %v2110 = vunpack.c.l.b16 %v854
        %v2111 = vunpack.c.l.b16 %v855
        %v2112 = vunpack.c.l.b16 %v856
        %v2113 = vunpack.c.l.b16 %v857
        %v2114 = vunpack.c.l.b16 %v858
        %v2115 = vunpack.c.l.b16 %v859
        %v2116 = vunpack.c.l.b16 %v860
        %v2117 = vunpack.c.l.b16 %v861
        %v2118 = vunpack.c.l.b16 %v862
        %v2119 = vunpack.c.l.b16 %v863
        %v2120 = vunpack.c.l.b16 %v864
        %v2121 = vunpack.c.l.b16 %v865
        %v2122 = vunpack.c.l.b16 %v866
        %v2123 = vunpack.c.l.b16 %v867
        %v2124 = vunpack.c.l.b16 %v868
        %v2125 = vunpack.c.l.b16 %v869
        %v2126 = vunpack.c.l.b16 %v870
        %v2127 = vunpack.c.l.b16 %v871
        %v2128 = vunpack.c.l.b16 %v872
        %v2129 = vunpack.c.l.b16 %v873
        %v2130 = vunpack.c.l.b16 %v874
        %v2131 = vunpack.c.l.b16 %v875
        %v2132 = vunpack.c.l.b16 %v876
        %v2133 = vunpack.c.l.b16 %v877
        %v2134 = vunpack.c.l.b16 %v878
        %v2135 = vunpack.c.l.b16 %v879
        %v2136 = vunpack.c.l.b16 %v880
        %v2137 = vunpack.c.l.b16 %v881
        %v2138 = vunpack.c.l.b16 %v882
        %v2139 = vunpack.c.l.b16 %v883
        %v2140 = vunpack.c.l.b16 %v884
        %v2141 = vunpack.c.l.b16 %v885
        %v2142 = vunpack.c.l.b16 %v886
        %v2143 = vunpack.c.l.b16 %v887
        %v2144 = vunpack.c.l.b16 %v888
        %v2145 = vunpack.c.l.b16 %v889
        %v2146 = vunpack.c.l.b16 %v890
        %v2147 = vunpack.c.l.b16 %v891
        %v2148 = vunpack.c.l.b16 %v892
        %v2149 = vunpack.c.l.b16 %v893
        %v2150 = vunpack.c.l.b16 %v894
        %v2151 = vunpack.c.l.b16 %v895
        %v2152 = vunpack.c.l.b16 %v896
        %v2153 = vunpack.c.l.b16 %v897
        %v2154 = vunpack.c.l.b16 %v898
        %v2155 = vunpack.c.l.b16 %v899
        %v2156 = vunpack.c.l.b16 %v900
        %v2157 = vunpack.c.l.b16 %v901
        %v2158 = vunpack.c.l.b16 %v902
        %v2159 = vunpack.c.l.b16 %v903
        %v2160 = vunpack.c.l.b16 %v904
        %v2161 = vunpack.c.l.b16 %v905
        %v2162 = vunpack.c.l.b16 %v906
        %v2163 = vunpack.c.l.b16 %v907
        %v2164 = vunpack.c.l.b16 %v908
        %v2165 = vunpack.c.l.b16 %v909
        %v2166 = vunpack.c.l.b16 %v910
        %v2167 = vunpack.c.l.b16 %v911
        %v2168 = vunpack.c.l.b16 %v912
        %v2169 = vunpack.c.l.b16 %v913
        %v2170 = vunpack.c.l.b16 %v914
        %v2171 = vunpack.c.l.b16 %v915
        %v2172 = vunpack.c.l.b16 %v916
        %v2173 = vunpack.c.l.b16 %v917
        %v2174 = vpack.c.b16 %v1663, %v1662
        %v2175 = vpack.c.b16 %v1665, %v1664
        %v2176 = vpack.c.b16 %v1667, %v1666
        %v2177 = vpack.c.b16 %v1669, %v1668
        %v2178 = vpack.c.b16 %v1671, %v1670
        %v2179 = vpack.c.b16 %v1673, %v1672
        %v2180 = vpack.c.b16 %v1675, %v1674
        %v2181 = vpack.c.b16 %v1677, %v1676
        %v2182 = vpack.c.b16 %v1679, %v1678
        %v2183 = vpack.c.b16 %v1681, %v1680
        %v2184 = vpack.c.b16 %v1683, %v1682
        %v2185 = vpack.c.b16 %v1685, %v1684
        %v2186 = vpack.c.b16 %v1687, %v1686
        %v2187 = vpack.c.b16 %v1689, %v1688
        %v2188 = vpack.c.b16 %v1691, %v1690
        %v2189 = vpack.c.b16 %v1693, %v1692
        %v2190 = vpack.c.b16 %v1695, %v1694
        %v2191 = vpack.c.b16 %v1697, %v1696
        %v2192 = vpack.c.b16 %v1699, %v1698
        %v2193 = vpack.c.b16 %v1701, %v1700
        %v2194 = vpack.c.b16 %v1703, %v1702
        %v2195 = vpack.c.b16 %v1705, %v1704
        %v2196 = vpack.c.b16 %v1707, %v1706
        %v2197 = vpack.c.b16 %v1709, %v1708
        %v2198 = vpack.c.b16 %v1711, %v1710
        %v2199 = vpack.c.b16 %v1713, %v1712
        %v2200 = vpack.c.b16 %v1715, %v1714
        %v2201 = vpack.c.b16 %v1717, %v1716
        %v2202 = vpack.c.b16 %v1719, %v1718
        %v2203 = vpack.c.b16 %v1721, %v1720
        %v2204 = vpack.c.b16 %v1723, %v1722
        %v2205 = vpack.c.b16 %v1725, %v1724
        %v2206 = vpack.c.b16 %v1727, %v1726
        %v2207 = vpack.c.b16 %v1729, %v1728
        %v2208 = vpack.c.b16 %v1731, %v1730
        %v2209 = vpack.c.b16 %v1733, %v1732
        %v2210 = vpack.c.b16 %v1735, %v1734
        %v2211 = vpack.c.b16 %v1737, %v1736
        %v2212 = vpack.c.b16 %v1739, %v1738
        %v2213 = vpack.c.b16 %v1741, %v1740
        %v2214 = vpack.c.b16 %v1743, %v1742
        %v2215 = vpack.c.b16 %v1745, %v1744
        %v2216 = vpack.c.b16 %v1747, %v1746
        %v2217 = vpack.c.b16 %v1749, %v1748
        %v2218 = vpack.c.b16 %v1751, %v1750
        %v2219 = vpack.c.b16 %v1753, %v1752
        %v2220 = vpack.c.b16 %v1755, %v1754
        %v2221 = vpack.c.b16 %v1757, %v1756
        %v2222 = vpack.c.b16 %v1759, %v1758
        %v2223 = vpack.c.b16 %v1761, %v1760
        %v2224 = vpack.c.b16 %v1763, %v1762
        %v2225 = vpack.c.b16 %v1765, %v1764
        %v2226 = vpack.c.b16 %v1767, %v1766
        %v2227 = vpack.c.b16 %v1769, %v1768
        %v2228 = vpack.c.b16 %v1771, %v1770
        %v2229 = vpack.c.b16 %v1773, %v1772
        %v2230 = vpack.c.b16 %v1775, %v1774
        %v2231 = vpack.c.b16 %v1777, %v1776
        %v2232 = vpack.c.b16 %v1779, %v1778
        %v2233 = vpack.c.b16 %v1781, %v1780
        %v2234 = vpack.c.b16 %v1783, %v1782
        %v2235 = vpack.c.b16 %v1785, %v1784
        %v2236 = vpack.c.b16 %v1787, %v1786
        %v2237 = vpack.c.b16 %v1789, %v1788
        %v2238 = vpack.c.b16 %v1791, %v1790
        %v2239 = vpack.c.b16 %v1793, %v1792
        %v2240 = vpack.c.b16 %v1795, %v1794
        %v2241 = vpack.c.b16 %v1797, %v1796
        %v2242 = vpack.c.b16 %v1799, %v1798
        %v2243 = vpack.c.b16 %v1801, %v1800
        %v2244 = vpack.c.b16 %v1803, %v1802
        %v2245 = vpack.c.b16 %v1805, %v1804
        %v2246 = vpack.c.b16 %v1807, %v1806
        %v2247 = vpack.c.b16 %v1809, %v1808
        %v2248 = vpack.c.b16 %v1811, %v1810
        %v2249 = vpack.c.b16 %v1813, %v1812
        %v2250 = vpack.c.b16 %v1815, %v1814
        %v2251 = vpack.c.b16 %v1817, %v1816
        %v2252 = vpack.c.b16 %v1819, %v1818
        %v2253 = vpack.c.b16 %v1821, %v1820
        %v2254 = vpack.c.b16 %v1823, %v1822
        %v2255 = vpack.c.b16 %v1825, %v1824
        %v2256 = vpack.c.b16 %v1827, %v1826
        %v2257 = vpack.c.b16 %v1829, %v1828
        %v2258 = vpack.c.b16 %v1831, %v1830
        %v2259 = vpack.c.b16 %v1833, %v1832
        %v2260 = vpack.c.b16 %v1835, %v1834
        %v2261 = vpack.c.b16 %v1837, %v1836
        %v2262 = vpack.c.b16 %v1839, %v1838
        %v2263 = vpack.c.b16 %v1841, %v1840
        %v2264 = vpack.c.b16 %v1843, %v1842
        %v2265 = vpack.c.b16 %v1845, %v1844
        %v2266 = vpack.c.b16 %v1847, %v1846
        %v2267 = vpack.c.b16 %v1849, %v1848
        %v2268 = vpack.c.b16 %v1851, %v1850
        %v2269 = vpack.c.b16 %v1853, %v1852
        %v2270 = vpack.c.b16 %v1855, %v1854
        %v2271 = vpack.c.b16 %v1857, %v1856
        %v2272 = vpack.c.b16 %v1859, %v1858
        %v2273 = vpack.c.b16 %v1861, %v1860
        %v2274 = vpack.c.b16 %v1863, %v1862
        %v2275 = vpack.c.b16 %v1865, %v1864
        %v2276 = vpack.c.b16 %v1867, %v1866
        %v2277 = vpack.c.b16 %v1869, %v1868
        %v2278 = vpack.c.b16 %v1871, %v1870
        %v2279 = vpack.c.b16 %v1873, %v1872
        %v2280 = vpack.c.b16 %v1875, %v1874
        %v2281 = vpack.c.b16 %v1877, %v1876
        %v2282 = vpack.c.b16 %v1879, %v1878
        %v2283 = vpack.c.b16 %v1881, %v1880
        %v2284 = vpack.c.b16 %v1883, %v1882
        %v2285 = vpack.c.b16 %v1885, %v1884
        %v2286 = vpack.c.b16 %v1887, %v1886
        %v2287 = vpack.c.b16 %v1889, %v1888
        %v2288 = vpack.c.b16 %v1891, %v1890
        %v2289 = vpack.c.b16 %v1893, %v1892
        %v2290 = vpack.c.b16 %v1895, %v1894
        %v2291 = vpack.c.b16 %v1897, %v1896
        %v2292 = vpack.c.b16 %v1899, %v1898
        %v2293 = vpack.c.b16 %v1901, %v1900
        %v2294 = vpack.c.b16 %v1903, %v1902
        %v2295 = vpack.c.b16 %v1905, %v1904
        %v2296 = vpack.c.b16 %v1907, %v1906
        %v2297 = vpack.c.b16 %v1909, %v1908
        %v2298 = vpack.c.b16 %v1911, %v1910
        %v2299 = vpack.c.b16 %v1913, %v1912
        %v2300 = vpack.c.b16 %v1915, %v1914
        %v2301 = vpack.c.b16 %v1917, %v1916
        %v2302 = vpack.c.b16 %v1919, %v1918
        %v2303 = vpack.c.b16 %v1921, %v1920
        %v2304 = vpack.c.b16 %v1923, %v1922
        %v2305 = vpack.c.b16 %v1925, %v1924
        %v2306 = vpack.c.b16 %v1927, %v1926
        %v2307 = vpack.c.b16 %v1929, %v1928
        %v2308 = vpack.c.b16 %v1931, %v1930
        %v2309 = vpack.c.b16 %v1933, %v1932
        %v2310 = vpack.c.b16 %v1935, %v1934
        %v2311 = vpack.c.b16 %v1937, %v1936
        %v2312 = vpack.c.b16 %v1939, %v1938
        %v2313 = vpack.c.b16 %v1941, %v1940
        %v2314 = vpack.c.b16 %v1943, %v1942
        %v2315 = vpack.c.b16 %v1945, %v1944
        %v2316 = vpack.c.b16 %v1947, %v1946
        %v2317 = vpack.c.b16 %v1949, %v1948
        %v2318 = vpack.c.b16 %v1951, %v1950
        %v2319 = vpack.c.b16 %v1953, %v1952
        %v2320 = vpack.c.b16 %v1955, %v1954
        %v2321 = vpack.c.b16 %v1957, %v1956
        %v2322 = vpack.c.b16 %v1959, %v1958
        %v2323 = vpack.c.b16 %v1961, %v1960
        %v2324 = vpack.c.b16 %v1963, %v1962
        %v2325 = vpack.c.b16 %v1965, %v1964
        %v2326 = vpack.c.b16 %v1967, %v1966
        %v2327 = vpack.c.b16 %v1969, %v1968
        %v2328 = vpack.c.b16 %v1971, %v1970
        %v2329 = vpack.c.b16 %v1973, %v1972
        %v2330 = vpack.c.b16 %v1975, %v1974
        %v2331 = vpack.c.b16 %v1977, %v1976
        %v2332 = vpack.c.b16 %v1979, %v1978
        %v2333 = vpack.c.b16 %v1981, %v1980
        %v2334 = vpack.c.b16 %v1983, %v1982
        %v2335 = vpack.c.b16 %v1985, %v1984
        %v2336 = vpack.c.b16 %v1987, %v1986
        %v2337 = vpack.c.b16 %v1989, %v1988
        %v2338 = vpack.c.b16 %v1991, %v1990
        %v2339 = vpack.c.b16 %v1993, %v1992
        %v2340 = vpack.c.b16 %v1995, %v1994
        %v2341 = vpack.c.b16 %v1997, %v1996
        %v2342 = vpack.c.b16 %v1999, %v1998
        %v2343 = vpack.c.b16 %v2001, %v2000
        %v2344 = vpack.c.b16 %v2003, %v2002
        %v2345 = vpack.c.b16 %v2005, %v2004
        %v2346 = vpack.c.b16 %v2007, %v2006
        %v2347 = vpack.c.b16 %v2009, %v2008
        %v2348 = vpack.c.b16 %v2011, %v2010
        %v2349 = vpack.c.b16 %v2013, %v2012
        %v2350 = vpack.c.b16 %v2015, %v2014
        %v2351 = vpack.c.b16 %v2017, %v2016
        %v2352 = vpack.c.b16 %v2019, %v2018
        %v2353 = vpack.c.b16 %v2021, %v2020
        %v2354 = vpack.c.b16 %v2023, %v2022
        %v2355 = vpack.c.b16 %v2025, %v2024
        %v2356 = vpack.c.b16 %v2027, %v2026
        %v2357 = vpack.c.b16 %v2029, %v2028
        %v2358 = vpack.c.b16 %v2031, %v2030
        %v2359 = vpack.c.b16 %v2033, %v2032
        %v2360 = vpack.c.b16 %v2035, %v2034
        %v2361 = vpack.c.b16 %v2037, %v2036
        %v2362 = vpack.c.b16 %v2039, %v2038
        %v2363 = vpack.c.b16 %v2041, %v2040
        %v2364 = vpack.c.b16 %v2043, %v2042
        %v2365 = vpack.c.b16 %v2045, %v2044
        %v2366 = vpack.c.b16 %v2047, %v2046
        %v2367 = vpack.c.b16 %v2049, %v2048
        %v2368 = vpack.c.b16 %v2051, %v2050
        %v2369 = vpack.c.b16 %v2053, %v2052
        %v2370 = vpack.c.b16 %v2055, %v2054
        %v2371 = vpack.c.b16 %v2057, %v2056
        %v2372 = vpack.c.b16 %v2059, %v2058
        %v2373 = vpack.c.b16 %v2061, %v2060
        %v2374 = vpack.c.b16 %v2063, %v2062
        %v2375 = vpack.c.b16 %v2065, %v2064
        %v2376 = vpack.c.b16 %v2067, %v2066
        %v2377 = vpack.c.b16 %v2069, %v2068
        %v2378 = vpack.c.b16 %v2071, %v2070
        %v2379 = vpack.c.b16 %v2073, %v2072
        %v2380 = vpack.c.b16 %v2075, %v2074
        %v2381 = vpack.c.b16 %v2077, %v2076
        %v2382 = vpack.c.b16 %v2079, %v2078
        %v2383 = vpack.c.b16 %v2081, %v2080
        %v2384 = vpack.c.b16 %v2083, %v2082
        %v2385 = vpack.c.b16 %v2085, %v2084
        %v2386 = vpack.c.b16 %v2087, %v2086
        %v2387 = vpack.c.b16 %v2089, %v2088
        %v2388 = vpack.c.b16 %v2091, %v2090
        %v2389 = vpack.c.b16 %v2093, %v2092
        %v2390 = vpack.c.b16 %v2095, %v2094
        %v2391 = vpack.c.b16 %v2097, %v2096
        %v2392 = vpack.c.b16 %v2099, %v2098
        %v2393 = vpack.c.b16 %v2101, %v2100
        %v2394 = vpack.c.b16 %v2103, %v2102
        %v2395 = vpack.c.b16 %v2105, %v2104
        %v2396 = vpack.c.b16 %v2107, %v2106
        %v2397 = vpack.c.b16 %v2109, %v2108
        %v2398 = vpack.c.b16 %v2111, %v2110
        %v2399 = vpack.c.b16 %v2113, %v2112
        %v2400 = vpack.c.b16 %v2115, %v2114
        %v2401 = vpack.c.b16 %v2117, %v2116
        %v2402 = vpack.c.b16 %v2119, %v2118
        %v2403 = vpack.c.b16 %v2121, %v2120
        %v2404 = vpack.c.b16 %v2123, %v2122
        %v2405 = vpack.c.b16 %v2125, %v2124
        %v2406 = vpack.c.b16 %v2127, %v2126
        %v2407 = vpack.c.b16 %v2129, %v2128
        %v2408 = vpack.c.b16 %v2131, %v2130
        %v2409 = vpack.c.b16 %v2133, %v2132
        %v2410 = vpack.c.b16 %v2135, %v2134
        %v2411 = vpack.c.b16 %v2137, %v2136
        %v2412 = vpack.c.b16 %v2139, %v2138
        %v2413 = vpack.c.b16 %v2141, %v2140
        %v2414 = vpack.c.b16 %v2143, %v2142
        %v2415 = vpack.c.b16 %v2145, %v2144
        %v2416 = vpack.c.b16 %v2147, %v2146
        %v2417 = vpack.c.b16 %v2149, %v2148
        %v2418 = vpack.c.b16 %v2151, %v2150
        %v2419 = vpack.c.b16 %v2153, %v2152
        %v2420 = vpack.c.b16 %v2155, %v2154
        %v2421 = vpack.c.b16 %v2157, %v2156
        %v2422 = vpack.c.b16 %v2159, %v2158
        %v2423 = vpack.c.b16 %v2161, %v2160
        %v2424 = vpack.c.b16 %v2163, %v2162
        %v2425 = vpack.c.b16 %v2165, %v2164
        %v2426 = vpack.c.b16 %v2167, %v2166
        %v2427 = vpack.c.b16 %v2169, %v2168
        %v2428 = vpack.c.b16 %v2171, %v2170
        %v2429 = vpack.c.b16 %v2173, %v2172
        %2686 = vmatprep.subr.bf16.mxu0 0
        %2687 = vmatpush1.bf16.msra.mxu0 %v2181
        %2688 = vmatprep.subr.bf16.mxu0 0
        %2689 = vmatpush1.bf16.msra.mxu0 %v2180
        %2690 = vmatprep.subr.bf16.mxu0 0
        %2691 = vmatpush1.bf16.msra.mxu0 %v2179
        %2692 = vmatprep.subr.bf16.mxu0 0
        %2693 = vmatpush1.bf16.msra.mxu0 %v2178
        %2694 = vmatprep.subr.bf16.mxu0 0
        %2695 = vmatpush1.bf16.msra.mxu0 %v2177
        %2696 = vmatprep.subr.bf16.mxu0 0
        %2697 = vmatpush1.bf16.msra.mxu0 %v2176
        %2698 = vmatprep.subr.bf16.mxu0 0
        %2699 = vmatpush1.bf16.msra.mxu0 %v2175
        %2700 = vmatprep.subr.bf16.mxu0 0
        %2701 = vmatpush1.bf16.msra.mxu0 %v2174
        %2702 = vmatprep.subr.bf16.mxu0 0
        %2703 = vmatpush2.bf16.msra.mxu0 %v2189
        %2704 = vmatprep.subr.bf16.mxu0 0
        %2705 = vmatpush2.bf16.msra.mxu0 %v2188
        %2706 = vmatprep.subr.bf16.mxu0 0
        %2707 = vmatpush2.bf16.msra.mxu0 %v2187
        %2708 = vmatprep.subr.bf16.mxu0 0
        %2709 = vmatpush2.bf16.msra.mxu0 %v2186
        %2710 = vmatprep.subr.bf16.mxu0 0
        %2711 = vmatpush2.bf16.msra.mxu0 %v2185
        %2712 = vmatprep.subr.bf16.mxu0 0
        %2713 = vmatpush2.bf16.msra.mxu0 %v2184
        %2714 = vmatprep.subr.bf16.mxu0 0
        %2715 = vmatpush2.bf16.msra.mxu0 %v2183
        %2716 = vmatprep.subr.bf16.mxu0 0
        %2717 = vmatpush2.bf16.msra.mxu0 %v2182
        %2718 = vmatprep.mubr.bf16.mxu0 %v959
        %2719 = vmatmul.mubr.bf16.gmra.mxu0 %v945
        %v2720 = vpop.f32.mrf.mxu0
        %v2721 = vadd.f32 0.0, %v2720
        %v2722 = vpop.f32.mrf.mxu0
        %v2723 = vpop.f32.mrf.mxu0
        %v2724 = vpop.f32.mrf.mxu0
        %2725 = vdwg.mxu0
        %2726 = vmatprep.subr.bf16.mxu0 0
        %2727 = vmatpush1.bf16.msra.mxu0 %v2197
        %2728 = vmatprep.subr.bf16.mxu0 0
        %2729 = vmatpush1.bf16.msra.mxu0 %v2196
        %2730 = vmatprep.subr.bf16.mxu0 0
        %2731 = vmatpush1.bf16.msra.mxu0 %v2195
        %2732 = vmatprep.subr.bf16.mxu0 0
        %2733 = vmatpush1.bf16.msra.mxu0 %v2194
        %2734 = vmatprep.subr.bf16.mxu0 0
        %2735 = vmatpush1.bf16.msra.mxu0 %v2193
        %2736 = vmatprep.subr.bf16.mxu0 0
        %2737 = vmatpush1.bf16.msra.mxu0 %v2192
        %2738 = vmatprep.subr.bf16.mxu0 0
        %2739 = vmatpush1.bf16.msra.mxu0 %v2191
        %2740 = vmatprep.subr.bf16.mxu0 0
        %2741 = vmatpush1.bf16.msra.mxu0 %v2190
        %2742 = vmatprep.subr.bf16.mxu0 0
        %2743 = vmatpush2.bf16.msra.mxu0 %v2205
        %2744 = vmatprep.subr.bf16.mxu0 0
        %2745 = vmatpush2.bf16.msra.mxu0 %v2204
        %2746 = vmatprep.subr.bf16.mxu0 0
        %2747 = vmatpush2.bf16.msra.mxu0 %v2203
        %2748 = vmatprep.subr.bf16.mxu0 0
        %2749 = vmatpush2.bf16.msra.mxu0 %v2202
        %2750 = vmatprep.subr.bf16.mxu0 0
        %2751 = vmatpush2.bf16.msra.mxu0 %v2201
        %2752 = vmatprep.subr.bf16.mxu0 0
        %2753 = vmatpush2.bf16.msra.mxu0 %v2200
        %2754 = vmatprep.subr.bf16.mxu0 0
        %2755 = vmatpush2.bf16.msra.mxu0 %v2199
        %2756 = vmatprep.subr.bf16.mxu0 0
        %2757 = vmatpush2.bf16.msra.mxu0 %v2198
        %2758 = vmatprep.mubr.bf16.mxu0 %v969
        %2759 = vmatmul.mubr.bf16.gmra.mxu0 %v967
        %v2760 = vpop.f32.mrf.mxu0
        %v2761 = vadd.f32 %v2721, %v2760
        %v2762 = vpop.f32.mrf.mxu0
        %v2763 = vpop.f32.mrf.mxu0
        %v2764 = vpop.f32.mrf.mxu0
        %2765 = vdwg.mxu0
        %2766 = vmatprep.subr.bf16.mxu0 0
        %2767 = vmatpush1.bf16.msra.mxu0 %v2213
        %2768 = vmatprep.subr.bf16.mxu0 0
        %2769 = vmatpush1.bf16.msra.mxu0 %v2212
        %2770 = vmatprep.subr.bf16.mxu0 0
        %2771 = vmatpush1.bf16.msra.mxu0 %v2211
        %2772 = vmatprep.subr.bf16.mxu0 0
        %2773 = vmatpush1.bf16.msra.mxu0 %v2210
        %2774 = vmatprep.subr.bf16.mxu0 0
        %2775 = vmatpush1.bf16.msra.mxu0 %v2209
        %2776 = vmatprep.subr.bf16.mxu0 0
        %2777 = vmatpush1.bf16.msra.mxu0 %v2208
        %2778 = vmatprep.subr.bf16.mxu0 0
        %2779 = vmatpush1.bf16.msra.mxu0 %v2207
        %2780 = vmatprep.subr.bf16.mxu0 0
        %2781 = vmatpush1.bf16.msra.mxu0 %v2206
        %2782 = vmatprep.subr.bf16.mxu0 0
        %2783 = vmatpush2.bf16.msra.mxu0 %v2221
        %2784 = vmatprep.subr.bf16.mxu0 0
        %2785 = vmatpush2.bf16.msra.mxu0 %v2220
        %2786 = vmatprep.subr.bf16.mxu0 0
        %2787 = vmatpush2.bf16.msra.mxu0 %v2219
        %2788 = vmatprep.subr.bf16.mxu0 0
        %2789 = vmatpush2.bf16.msra.mxu0 %v2218
        %2790 = vmatprep.subr.bf16.mxu0 0
        %2791 = vmatpush2.bf16.msra.mxu0 %v2217
        %2792 = vmatprep.subr.bf16.mxu0 0
        %2793 = vmatpush2.bf16.msra.mxu0 %v2216
        %2794 = vmatprep.subr.bf16.mxu0 0
        %2795 = vmatpush2.bf16.msra.mxu0 %v2215
        %2796 = vmatprep.subr.bf16.mxu0 0
        %2797 = vmatpush2.bf16.msra.mxu0 %v2214
        %2798 = vmatprep.mubr.bf16.mxu0 %v966
        %2799 = vmatmul.mubr.bf16.gmra.mxu0 %v952
        %v2800 = vpop.f32.mrf.mxu0
        %v2801 = vadd.f32 %v2761, %v2800
        %v2802 = vpop.f32.mrf.mxu0
        %v2803 = vpop.f32.mrf.mxu0
        %v2804 = vpop.f32.mrf.mxu0
        %2805 = vdwg.mxu0
        %2806 = vmatprep.subr.bf16.mxu0 0
        %2807 = vmatpush1.bf16.msra.mxu0 %v2229
        %2808 = vmatprep.subr.bf16.mxu0 0
        %2809 = vmatpush1.bf16.msra.mxu0 %v2228
        %2810 = vmatprep.subr.bf16.mxu0 0
        %2811 = vmatpush1.bf16.msra.mxu0 %v2227
        %2812 = vmatprep.subr.bf16.mxu0 0
        %2813 = vmatpush1.bf16.msra.mxu0 %v2226
        %2814 = vmatprep.subr.bf16.mxu0 0
        %2815 = vmatpush1.bf16.msra.mxu0 %v2225
        %2816 = vmatprep.subr.bf16.mxu0 0
        %2817 = vmatpush1.bf16.msra.mxu0 %v2224
        %2818 = vmatprep.subr.bf16.mxu0 0
        %2819 = vmatpush1.bf16.msra.mxu0 %v2223
        %2820 = vmatprep.subr.bf16.mxu0 0
        %2821 = vmatpush1.bf16.msra.mxu0 %v2222
        %2822 = vmatprep.subr.bf16.mxu0 0
        %2823 = vmatpush2.bf16.msra.mxu0 %v2237
        %2824 = vmatprep.subr.bf16.mxu0 0
        %2825 = vmatpush2.bf16.msra.mxu0 %v2236
        %2826 = vmatprep.subr.bf16.mxu0 0
        %2827 = vmatpush2.bf16.msra.mxu0 %v2235
        %2828 = vmatprep.subr.bf16.mxu0 0
        %2829 = vmatpush2.bf16.msra.mxu0 %v2234
        %2830 = vmatprep.subr.bf16.mxu0 0
        %2831 = vmatpush2.bf16.msra.mxu0 %v2233
        %2832 = vmatprep.subr.bf16.mxu0 0
        %2833 = vmatpush2.bf16.msra.mxu0 %v2232
        %2834 = vmatprep.subr.bf16.mxu0 0
        %2835 = vmatpush2.bf16.msra.mxu0 %v2231
        %2836 = vmatprep.subr.bf16.mxu0 0
        %2837 = vmatpush2.bf16.msra.mxu0 %v2230
        %2838 = vmatprep.mubr.bf16.mxu0 %v970
        %2839 = vmatmul.mubr.bf16.gmra.mxu0 %v968
        %v2840 = vpop.f32.mrf.mxu0
        %v2841 = vadd.f32 %v2801, %v2840
        %v2842 = vpop.f32.mrf.mxu0
        %v2843 = vpop.f32.mrf.mxu0
        %v2844 = vpop.f32.mrf.mxu0
        %2845 = vdwg.mxu0
        %2846 = vmatprep.subr.bf16.mxu0 0
        %2847 = vmatpush1.bf16.msra.mxu0 %v2245
        %2848 = vmatprep.subr.bf16.mxu0 0
        %2849 = vmatpush1.bf16.msra.mxu0 %v2244
        %2850 = vmatprep.subr.bf16.mxu0 0
        %2851 = vmatpush1.bf16.msra.mxu0 %v2243
        %2852 = vmatprep.subr.bf16.mxu0 0
        %2853 = vmatpush1.bf16.msra.mxu0 %v2242
        %2854 = vmatprep.subr.bf16.mxu0 0
        %2855 = vmatpush1.bf16.msra.mxu0 %v2241
        %2856 = vmatprep.subr.bf16.mxu0 0
        %2857 = vmatpush1.bf16.msra.mxu0 %v2240
        %2858 = vmatprep.subr.bf16.mxu0 0
        %2859 = vmatpush1.bf16.msra.mxu0 %v2239
        %2860 = vmatprep.subr.bf16.mxu0 0
        %2861 = vmatpush1.bf16.msra.mxu0 %v2238
        %2862 = vmatprep.subr.bf16.mxu0 0
        %2863 = vmatpush2.bf16.msra.mxu0 %v2253
        %2864 = vmatprep.subr.bf16.mxu0 0
        %2865 = vmatpush2.bf16.msra.mxu0 %v2252
        %2866 = vmatprep.subr.bf16.mxu0 0
        %2867 = vmatpush2.bf16.msra.mxu0 %v2251
        %2868 = vmatprep.subr.bf16.mxu0 0
        %2869 = vmatpush2.bf16.msra.mxu0 %v2250
        %2870 = vmatprep.subr.bf16.mxu0 0
        %2871 = vmatpush2.bf16.msra.mxu0 %v2249
        %2872 = vmatprep.subr.bf16.mxu0 0
        %2873 = vmatpush2.bf16.msra.mxu0 %v2248
        %2874 = vmatprep.subr.bf16.mxu0 0
        %2875 = vmatpush2.bf16.msra.mxu0 %v2247
        %2876 = vmatprep.subr.bf16.mxu0 0
        %2877 = vmatpush2.bf16.msra.mxu0 %v2246
        %2878 = vmatprep.mubr.bf16.mxu0 %v1008
        %2879 = vmatmul.mubr.bf16.gmra.mxu0 %v994
        %v2880 = vpop.f32.mrf.mxu0
        %v2881 = vadd.f32 %v2841, %v2880
        %v2882 = vpop.f32.mrf.mxu0
        %v2883 = vpop.f32.mrf.mxu0
        %v2884 = vpop.f32.mrf.mxu0
        %2885 = vdwg.mxu0
        %2886 = vmatprep.subr.bf16.mxu0 0
        %2887 = vmatpush1.bf16.msra.mxu0 %v2261
        %2888 = vmatprep.subr.bf16.mxu0 0
        %2889 = vmatpush1.bf16.msra.mxu0 %v2260
        %2890 = vmatprep.subr.bf16.mxu0 0
        %2891 = vmatpush1.bf16.msra.mxu0 %v2259
        %2892 = vmatprep.subr.bf16.mxu0 0
        %2893 = vmatpush1.bf16.msra.mxu0 %v2258
        %2894 = vmatprep.subr.bf16.mxu0 0
        %2895 = vmatpush1.bf16.msra.mxu0 %v2257
        %2896 = vmatprep.subr.bf16.mxu0 0
        %2897 = vmatpush1.bf16.msra.mxu0 %v2256
        %2898 = vmatprep.subr.bf16.mxu0 0
        %2899 = vmatpush1.bf16.msra.mxu0 %v2255
        %2900 = vmatprep.subr.bf16.mxu0 0
        %2901 = vmatpush1.bf16.msra.mxu0 %v2254
        %2902 = vmatprep.subr.bf16.mxu0 0
        %2903 = vmatpush2.bf16.msra.mxu0 %v2269
        %2904 = vmatprep.subr.bf16.mxu0 0
        %2905 = vmatpush2.bf16.msra.mxu0 %v2268
        %2906 = vmatprep.subr.bf16.mxu0 0
        %2907 = vmatpush2.bf16.msra.mxu0 %v2267
        %2908 = vmatprep.subr.bf16.mxu0 0
        %2909 = vmatpush2.bf16.msra.mxu0 %v2266
        %2910 = vmatprep.subr.bf16.mxu0 0
        %2911 = vmatpush2.bf16.msra.mxu0 %v2265
        %2912 = vmatprep.subr.bf16.mxu0 0
        %2913 = vmatpush2.bf16.msra.mxu0 %v2264
        %2914 = vmatprep.subr.bf16.mxu0 0
        %2915 = vmatpush2.bf16.msra.mxu0 %v2263
        %2916 = vmatprep.subr.bf16.mxu0 0
        %2917 = vmatpush2.bf16.msra.mxu0 %v2262
        %2918 = vmatprep.mubr.bf16.mxu0 %v1018
        %2919 = vmatmul.mubr.bf16.gmra.mxu0 %v1016
        %v2920 = vpop.f32.mrf.mxu0
        %v2921 = vadd.f32 %v2881, %v2920
        %v2922 = vpop.f32.mrf.mxu0
        %v2923 = vpop.f32.mrf.mxu0
        %v2924 = vpop.f32.mrf.mxu0
        %2925 = vdwg.mxu0
        %2926 = vmatprep.subr.bf16.mxu0 0
        %2927 = vmatpush1.bf16.msra.mxu0 %v2277
        %2928 = vmatprep.subr.bf16.mxu0 0
        %2929 = vmatpush1.bf16.msra.mxu0 %v2276
        %2930 = vmatprep.subr.bf16.mxu0 0
        %2931 = vmatpush1.bf16.msra.mxu0 %v2275
        %2932 = vmatprep.subr.bf16.mxu0 0
        %2933 = vmatpush1.bf16.msra.mxu0 %v2274
        %2934 = vmatprep.subr.bf16.mxu0 0
        %2935 = vmatpush1.bf16.msra.mxu0 %v2273
        %2936 = vmatprep.subr.bf16.mxu0 0
        %2937 = vmatpush1.bf16.msra.mxu0 %v2272
        %2938 = vmatprep.subr.bf16.mxu0 0
        %2939 = vmatpush1.bf16.msra.mxu0 %v2271
        %2940 = vmatprep.subr.bf16.mxu0 0
        %2941 = vmatpush1.bf16.msra.mxu0 %v2270
        %2942 = vmatprep.subr.bf16.mxu0 0
        %2943 = vmatpush2.bf16.msra.mxu0 %v2285
        %2944 = vmatprep.subr.bf16.mxu0 0
        %2945 = vmatpush2.bf16.msra.mxu0 %v2284
        %2946 = vmatprep.subr.bf16.mxu0 0
        %2947 = vmatpush2.bf16.msra.mxu0 %v2283
        %2948 = vmatprep.subr.bf16.mxu0 0
        %2949 = vmatpush2.bf16.msra.mxu0 %v2282
        %2950 = vmatprep.subr.bf16.mxu0 0
        %2951 = vmatpush2.bf16.msra.mxu0 %v2281
        %2952 = vmatprep.subr.bf16.mxu0 0
        %2953 = vmatpush2.bf16.msra.mxu0 %v2280
        %2954 = vmatprep.subr.bf16.mxu0 0
        %2955 = vmatpush2.bf16.msra.mxu0 %v2279
        %2956 = vmatprep.subr.bf16.mxu0 0
        %2957 = vmatpush2.bf16.msra.mxu0 %v2278
        %2958 = vmatprep.mubr.bf16.mxu0 %v1015
        %2959 = vmatmul.mubr.bf16.gmra.mxu0 %v1001
        %v2960 = vpop.f32.mrf.mxu0
        %v2961 = vadd.f32 %v2921, %v2960
        %v2962 = vpop.f32.mrf.mxu0
        %v2963 = vpop.f32.mrf.mxu0
        %v2964 = vpop.f32.mrf.mxu0
        %2965 = vdwg.mxu0
        %2966 = vmatprep.subr.bf16.mxu0 0
        %2967 = vmatpush1.bf16.msra.mxu0 %v2293
        %2968 = vmatprep.subr.bf16.mxu0 0
        %2969 = vmatpush1.bf16.msra.mxu0 %v2292
        %2970 = vmatprep.subr.bf16.mxu0 0
        %2971 = vmatpush1.bf16.msra.mxu0 %v2291
        %2972 = vmatprep.subr.bf16.mxu0 0
        %2973 = vmatpush1.bf16.msra.mxu0 %v2290
        %2974 = vmatprep.subr.bf16.mxu0 0
        %2975 = vmatpush1.bf16.msra.mxu0 %v2289
        %2976 = vmatprep.subr.bf16.mxu0 0
        %2977 = vmatpush1.bf16.msra.mxu0 %v2288
        %2978 = vmatprep.subr.bf16.mxu0 0
        %2979 = vmatpush1.bf16.msra.mxu0 %v2287
        %2980 = vmatprep.subr.bf16.mxu0 0
        %2981 = vmatpush1.bf16.msra.mxu0 %v2286
        %2982 = vmatprep.subr.bf16.mxu0 0
        %2983 = vmatpush2.bf16.msra.mxu0 %v2301
        %2984 = vmatprep.subr.bf16.mxu0 0
        %2985 = vmatpush2.bf16.msra.mxu0 %v2300
        %2986 = vmatprep.subr.bf16.mxu0 0
        %2987 = vmatpush2.bf16.msra.mxu0 %v2299
        %2988 = vmatprep.subr.bf16.mxu0 0
        %2989 = vmatpush2.bf16.msra.mxu0 %v2298
        %2990 = vmatprep.subr.bf16.mxu0 0
        %2991 = vmatpush2.bf16.msra.mxu0 %v2297
        %2992 = vmatprep.subr.bf16.mxu0 0
        %2993 = vmatpush2.bf16.msra.mxu0 %v2296
        %2994 = vmatprep.subr.bf16.mxu0 0
        %2995 = vmatpush2.bf16.msra.mxu0 %v2295
        %2996 = vmatprep.subr.bf16.mxu0 0
        %2997 = vmatpush2.bf16.msra.mxu0 %v2294
        %2998 = vmatprep.mubr.bf16.mxu0 %v1019
        %2999 = vmatmul.mubr.bf16.gmra.mxu0 %v1017
        %v3000 = vpop.f32.mrf.mxu0
        %v3001 = vadd.f32 %v2961, %v3000
        %v3002 = vpop.f32.mrf.mxu0
        %v3003 = vpop.f32.mrf.mxu0
        %v3004 = vpop.f32.mrf.mxu0
        %3005 = vdwg.mxu0
        %3006 = vmatprep.subr.bf16.mxu0 0
        %3007 = vmatpush1.bf16.msra.mxu0 %v2309
        %3008 = vmatprep.subr.bf16.mxu0 0
        %3009 = vmatpush1.bf16.msra.mxu0 %v2308
        %3010 = vmatprep.subr.bf16.mxu0 0
        %3011 = vmatpush1.bf16.msra.mxu0 %v2307
        %3012 = vmatprep.subr.bf16.mxu0 0
        %3013 = vmatpush1.bf16.msra.mxu0 %v2306
        %3014 = vmatprep.subr.bf16.mxu0 0
        %3015 = vmatpush1.bf16.msra.mxu0 %v2305
        %3016 = vmatprep.subr.bf16.mxu0 0
        %3017 = vmatpush1.bf16.msra.mxu0 %v2304
        %3018 = vmatprep.subr.bf16.mxu0 0
        %3019 = vmatpush1.bf16.msra.mxu0 %v2303
        %3020 = vmatprep.subr.bf16.mxu0 0
        %3021 = vmatpush1.bf16.msra.mxu0 %v2302
        %3022 = vmatprep.subr.bf16.mxu0 0
        %3023 = vmatpush2.bf16.msra.mxu0 %v2317
        %3024 = vmatprep.subr.bf16.mxu0 0
        %3025 = vmatpush2.bf16.msra.mxu0 %v2316
        %3026 = vmatprep.subr.bf16.mxu0 0
        %3027 = vmatpush2.bf16.msra.mxu0 %v2315
        %3028 = vmatprep.subr.bf16.mxu0 0
        %3029 = vmatpush2.bf16.msra.mxu0 %v2314
        %3030 = vmatprep.subr.bf16.mxu0 0
        %3031 = vmatpush2.bf16.msra.mxu0 %v2313
        %3032 = vmatprep.subr.bf16.mxu0 0
        %3033 = vmatpush2.bf16.msra.mxu0 %v2312
        %3034 = vmatprep.subr.bf16.mxu0 0
        %3035 = vmatpush2.bf16.msra.mxu0 %v2311
        %3036 = vmatprep.subr.bf16.mxu0 0
        %3037 = vmatpush2.bf16.msra.mxu0 %v2310
        %3038 = vmatprep.mubr.bf16.mxu0 %v1057
        %3039 = vmatmul.mubr.bf16.gmra.mxu0 %v1043
        %v3040 = vpop.f32.mrf.mxu0
        %v3041 = vadd.f32 %v3001, %v3040
        %v3042 = vpop.f32.mrf.mxu0
        %v3043 = vpop.f32.mrf.mxu0
        %v3044 = vpop.f32.mrf.mxu0
        %3045 = vdwg.mxu0
        %3046 = vmatprep.subr.bf16.mxu0 0
        %3047 = vmatpush1.bf16.msra.mxu0 %v2325
        %3048 = vmatprep.subr.bf16.mxu0 0
        %3049 = vmatpush1.bf16.msra.mxu0 %v2324
        %3050 = vmatprep.subr.bf16.mxu0 0
        %3051 = vmatpush1.bf16.msra.mxu0 %v2323
        %3052 = vmatprep.subr.bf16.mxu0 0
        %3053 = vmatpush1.bf16.msra.mxu0 %v2322
        %3054 = vmatprep.subr.bf16.mxu0 0
        %3055 = vmatpush1.bf16.msra.mxu0 %v2321
        %3056 = vmatprep.subr.bf16.mxu0 0
        %3057 = vmatpush1.bf16.msra.mxu0 %v2320
        %3058 = vmatprep.subr.bf16.mxu0 0
        %3059 = vmatpush1.bf16.msra.mxu0 %v2319
        %3060 = vmatprep.subr.bf16.mxu0 0
        %3061 = vmatpush1.bf16.msra.mxu0 %v2318
        %3062 = vmatprep.subr.bf16.mxu0 0
        %3063 = vmatpush2.bf16.msra.mxu0 %v2333
        %3064 = vmatprep.subr.bf16.mxu0 0
        %3065 = vmatpush2.bf16.msra.mxu0 %v2332
        %3066 = vmatprep.subr.bf16.mxu0 0
        %3067 = vmatpush2.bf16.msra.mxu0 %v2331
        %3068 = vmatprep.subr.bf16.mxu0 0
        %3069 = vmatpush2.bf16.msra.mxu0 %v2330
        %3070 = vmatprep.subr.bf16.mxu0 0
        %3071 = vmatpush2.bf16.msra.mxu0 %v2329
        %3072 = vmatprep.subr.bf16.mxu0 0
        %3073 = vmatpush2.bf16.msra.mxu0 %v2328
        %3074 = vmatprep.subr.bf16.mxu0 0
        %3075 = vmatpush2.bf16.msra.mxu0 %v2327
        %3076 = vmatprep.subr.bf16.mxu0 0
        %3077 = vmatpush2.bf16.msra.mxu0 %v2326
        %3078 = vmatprep.mubr.bf16.mxu0 %v1067
        %3079 = vmatmul.mubr.bf16.gmra.mxu0 %v1065
        %v3080 = vpop.f32.mrf.mxu0
        %v3081 = vadd.f32 %v3041, %v3080
        %v3082 = vpop.f32.mrf.mxu0
        %v3083 = vpop.f32.mrf.mxu0
        %v3084 = vpop.f32.mrf.mxu0
        %3085 = vdwg.mxu0
        %3086 = vmatprep.subr.bf16.mxu0 0
        %3087 = vmatpush1.bf16.msra.mxu0 %v2341
        %3088 = vmatprep.subr.bf16.mxu0 0
        %3089 = vmatpush1.bf16.msra.mxu0 %v2340
        %3090 = vmatprep.subr.bf16.mxu0 0
        %3091 = vmatpush1.bf16.msra.mxu0 %v2339
        %3092 = vmatprep.subr.bf16.mxu0 0
        %3093 = vmatpush1.bf16.msra.mxu0 %v2338
        %3094 = vmatprep.subr.bf16.mxu0 0
        %3095 = vmatpush1.bf16.msra.mxu0 %v2337
        %3096 = vmatprep.subr.bf16.mxu0 0
        %3097 = vmatpush1.bf16.msra.mxu0 %v2336
        %3098 = vmatprep.subr.bf16.mxu0 0
        %3099 = vmatpush1.bf16.msra.mxu0 %v2335
        %3100 = vmatprep.subr.bf16.mxu0 0
        %3101 = vmatpush1.bf16.msra.mxu0 %v2334
        %3102 = vmatprep.subr.bf16.mxu0 0
        %3103 = vmatpush2.bf16.msra.mxu0 %v2349
        %3104 = vmatprep.subr.bf16.mxu0 0
        %3105 = vmatpush2.bf16.msra.mxu0 %v2348
        %3106 = vmatprep.subr.bf16.mxu0 0
        %3107 = vmatpush2.bf16.msra.mxu0 %v2347
        %3108 = vmatprep.subr.bf16.mxu0 0
        %3109 = vmatpush2.bf16.msra.mxu0 %v2346
        %3110 = vmatprep.subr.bf16.mxu0 0
        %3111 = vmatpush2.bf16.msra.mxu0 %v2345
        %3112 = vmatprep.subr.bf16.mxu0 0
        %3113 = vmatpush2.bf16.msra.mxu0 %v2344
        %3114 = vmatprep.subr.bf16.mxu0 0
        %3115 = vmatpush2.bf16.msra.mxu0 %v2343
        %3116 = vmatprep.subr.bf16.mxu0 0
        %3117 = vmatpush2.bf16.msra.mxu0 %v2342
        %3118 = vmatprep.mubr.bf16.mxu0 %v1064
        %3119 = vmatmul.mubr.bf16.gmra.mxu0 %v1050
        %v3120 = vpop.f32.mrf.mxu0
        %v3121 = vadd.f32 %v3081, %v3120
        %v3122 = vpop.f32.mrf.mxu0
        %v3123 = vpop.f32.mrf.mxu0
        %v3124 = vpop.f32.mrf.mxu0
        %3125 = vdwg.mxu0
        %3126 = vmatprep.subr.bf16.mxu0 0
        %3127 = vmatpush1.bf16.msra.mxu0 %v2357
        %3128 = vmatprep.subr.bf16.mxu0 0
        %3129 = vmatpush1.bf16.msra.mxu0 %v2356
        %3130 = vmatprep.subr.bf16.mxu0 0
        %3131 = vmatpush1.bf16.msra.mxu0 %v2355
        %3132 = vmatprep.subr.bf16.mxu0 0
        %3133 = vmatpush1.bf16.msra.mxu0 %v2354
        %3134 = vmatprep.subr.bf16.mxu0 0
        %3135 = vmatpush1.bf16.msra.mxu0 %v2353
        %3136 = vmatprep.subr.bf16.mxu0 0
        %3137 = vmatpush1.bf16.msra.mxu0 %v2352
        %3138 = vmatprep.subr.bf16.mxu0 0
        %3139 = vmatpush1.bf16.msra.mxu0 %v2351
        %3140 = vmatprep.subr.bf16.mxu0 0
        %3141 = vmatpush1.bf16.msra.mxu0 %v2350
        %3142 = vmatprep.subr.bf16.mxu0 0
        %3143 = vmatpush2.bf16.msra.mxu0 %v2365
        %3144 = vmatprep.subr.bf16.mxu0 0
        %3145 = vmatpush2.bf16.msra.mxu0 %v2364
        %3146 = vmatprep.subr.bf16.mxu0 0
        %3147 = vmatpush2.bf16.msra.mxu0 %v2363
        %3148 = vmatprep.subr.bf16.mxu0 0
        %3149 = vmatpush2.bf16.msra.mxu0 %v2362
        %3150 = vmatprep.subr.bf16.mxu0 0
        %3151 = vmatpush2.bf16.msra.mxu0 %v2361
        %3152 = vmatprep.subr.bf16.mxu0 0
        %3153 = vmatpush2.bf16.msra.mxu0 %v2360
        %3154 = vmatprep.subr.bf16.mxu0 0
        %3155 = vmatpush2.bf16.msra.mxu0 %v2359
        %3156 = vmatprep.subr.bf16.mxu0 0
        %3157 = vmatpush2.bf16.msra.mxu0 %v2358
        %3158 = vmatprep.mubr.bf16.mxu0 %v1068
        %3159 = vmatmul.mubr.bf16.gmra.mxu0 %v1066
        %v3160 = vpop.f32.mrf.mxu0
        %v3161 = vadd.f32 %v3121, %v3160
        %v3162 = vpop.f32.mrf.mxu0
        %v3163 = vpop.f32.mrf.mxu0
        %v3164 = vpop.f32.mrf.mxu0
        %3165 = vdwg.mxu0
        %3166 = vmatprep.subr.bf16.mxu0 0
        %3167 = vmatpush1.bf16.msra.mxu0 %v2373
        %3168 = vmatprep.subr.bf16.mxu0 0
        %3169 = vmatpush1.bf16.msra.mxu0 %v2372
        %3170 = vmatprep.subr.bf16.mxu0 0
        %3171 = vmatpush1.bf16.msra.mxu0 %v2371
        %3172 = vmatprep.subr.bf16.mxu0 0
        %3173 = vmatpush1.bf16.msra.mxu0 %v2370
        %3174 = vmatprep.subr.bf16.mxu0 0
        %3175 = vmatpush1.bf16.msra.mxu0 %v2369
        %3176 = vmatprep.subr.bf16.mxu0 0
        %3177 = vmatpush1.bf16.msra.mxu0 %v2368
        %3178 = vmatprep.subr.bf16.mxu0 0
        %3179 = vmatpush1.bf16.msra.mxu0 %v2367
        %3180 = vmatprep.subr.bf16.mxu0 0
        %3181 = vmatpush1.bf16.msra.mxu0 %v2366
        %3182 = vmatprep.subr.bf16.mxu0 0
        %3183 = vmatpush2.bf16.msra.mxu0 %v2381
        %3184 = vmatprep.subr.bf16.mxu0 0
        %3185 = vmatpush2.bf16.msra.mxu0 %v2380
        %3186 = vmatprep.subr.bf16.mxu0 0
        %3187 = vmatpush2.bf16.msra.mxu0 %v2379
        %3188 = vmatprep.subr.bf16.mxu0 0
        %3189 = vmatpush2.bf16.msra.mxu0 %v2378
        %3190 = vmatprep.subr.bf16.mxu0 0
        %3191 = vmatpush2.bf16.msra.mxu0 %v2377
        %3192 = vmatprep.subr.bf16.mxu0 0
        %3193 = vmatpush2.bf16.msra.mxu0 %v2376
        %3194 = vmatprep.subr.bf16.mxu0 0
        %3195 = vmatpush2.bf16.msra.mxu0 %v2375
        %3196 = vmatprep.subr.bf16.mxu0 0
        %3197 = vmatpush2.bf16.msra.mxu0 %v2374
        %3198 = vmatprep.mubr.bf16.mxu0 %v1106
        %3199 = vmatmul.mubr.bf16.gmra.mxu0 %v1092
        %v3200 = vpop.f32.mrf.mxu0
        %v3201 = vadd.f32 %v3161, %v3200
        %v3202 = vpop.f32.mrf.mxu0
        %v3203 = vpop.f32.mrf.mxu0
        %v3204 = vpop.f32.mrf.mxu0
        %3205 = vdwg.mxu0
        %3206 = vmatprep.subr.bf16.mxu0 0
        %3207 = vmatpush1.bf16.msra.mxu0 %v2389
        %3208 = vmatprep.subr.bf16.mxu0 0
        %3209 = vmatpush1.bf16.msra.mxu0 %v2388
        %3210 = vmatprep.subr.bf16.mxu0 0
        %3211 = vmatpush1.bf16.msra.mxu0 %v2387
        %3212 = vmatprep.subr.bf16.mxu0 0
        %3213 = vmatpush1.bf16.msra.mxu0 %v2386
        %3214 = vmatprep.subr.bf16.mxu0 0
        %3215 = vmatpush1.bf16.msra.mxu0 %v2385
        %3216 = vmatprep.subr.bf16.mxu0 0
        %3217 = vmatpush1.bf16.msra.mxu0 %v2384
        %3218 = vmatprep.subr.bf16.mxu0 0
        %3219 = vmatpush1.bf16.msra.mxu0 %v2383
        %3220 = vmatprep.subr.bf16.mxu0 0
        %3221 = vmatpush1.bf16.msra.mxu0 %v2382
        %3222 = vmatprep.subr.bf16.mxu0 0
        %3223 = vmatpush2.bf16.msra.mxu0 %v2397
        %3224 = vmatprep.subr.bf16.mxu0 0
        %3225 = vmatpush2.bf16.msra.mxu0 %v2396
        %3226 = vmatprep.subr.bf16.mxu0 0
        %3227 = vmatpush2.bf16.msra.mxu0 %v2395
        %3228 = vmatprep.subr.bf16.mxu0 0
        %3229 = vmatpush2.bf16.msra.mxu0 %v2394
        %3230 = vmatprep.subr.bf16.mxu0 0
        %3231 = vmatpush2.bf16.msra.mxu0 %v2393
        %3232 = vmatprep.subr.bf16.mxu0 0
        %3233 = vmatpush2.bf16.msra.mxu0 %v2392
        %3234 = vmatprep.subr.bf16.mxu0 0
        %3235 = vmatpush2.bf16.msra.mxu0 %v2391
        %3236 = vmatprep.subr.bf16.mxu0 0
        %3237 = vmatpush2.bf16.msra.mxu0 %v2390
        %3238 = vmatprep.mubr.bf16.mxu0 %v1116
        %3239 = vmatmul.mubr.bf16.gmra.mxu0 %v1114
        %v3240 = vpop.f32.mrf.mxu0
        %v3241 = vadd.f32 %v3201, %v3240
        %v3242 = vpop.f32.mrf.mxu0
        %v3243 = vpop.f32.mrf.mxu0
        %v3244 = vpop.f32.mrf.mxu0
        %3245 = vdwg.mxu0
        %3246 = vmatprep.subr.bf16.mxu0 0
        %3247 = vmatpush1.bf16.msra.mxu0 %v2405
        %3248 = vmatprep.subr.bf16.mxu0 0
        %3249 = vmatpush1.bf16.msra.mxu0 %v2404
        %3250 = vmatprep.subr.bf16.mxu0 0
        %3251 = vmatpush1.bf16.msra.mxu0 %v2403
        %3252 = vmatprep.subr.bf16.mxu0 0
        %3253 = vmatpush1.bf16.msra.mxu0 %v2402
        %3254 = vmatprep.subr.bf16.mxu0 0
        %3255 = vmatpush1.bf16.msra.mxu0 %v2401
        %3256 = vmatprep.subr.bf16.mxu0 0
        %3257 = vmatpush1.bf16.msra.mxu0 %v2400
        %3258 = vmatprep.subr.bf16.mxu0 0
        %3259 = vmatpush1.bf16.msra.mxu0 %v2399
        %3260 = vmatprep.subr.bf16.mxu0 0
        %3261 = vmatpush1.bf16.msra.mxu0 %v2398
        %3262 = vmatprep.subr.bf16.mxu0 0
        %3263 = vmatpush2.bf16.msra.mxu0 %v2413
        %3264 = vmatprep.subr.bf16.mxu0 0
        %3265 = vmatpush2.bf16.msra.mxu0 %v2412
        %3266 = vmatprep.subr.bf16.mxu0 0
        %3267 = vmatpush2.bf16.msra.mxu0 %v2411
        %3268 = vmatprep.subr.bf16.mxu0 0
        %3269 = vmatpush2.bf16.msra.mxu0 %v2410
        %3270 = vmatprep.subr.bf16.mxu0 0
        %3271 = vmatpush2.bf16.msra.mxu0 %v2409
        %3272 = vmatprep.subr.bf16.mxu0 0
        %3273 = vmatpush2.bf16.msra.mxu0 %v2408
        %3274 = vmatprep.subr.bf16.mxu0 0
        %3275 = vmatpush2.bf16.msra.mxu0 %v2407
        %3276 = vmatprep.subr.bf16.mxu0 0
        %3277 = vmatpush2.bf16.msra.mxu0 %v2406
        %3278 = vmatprep.mubr.bf16.mxu0 %v1113
        %3279 = vmatmul.mubr.bf16.gmra.mxu0 %v1099
        %v3280 = vpop.f32.mrf.mxu0
        %v3281 = vadd.f32 %v3241, %v3280
        %v3282 = vpop.f32.mrf.mxu0
        %v3283 = vpop.f32.mrf.mxu0
        %v3284 = vpop.f32.mrf.mxu0
        %3285 = vdwg.mxu0
        %3286 = vmatprep.subr.bf16.mxu0 0
        %3287 = vmatpush1.bf16.msra.mxu0 %v2421
        %3288 = vmatprep.subr.bf16.mxu0 0
        %3289 = vmatpush1.bf16.msra.mxu0 %v2420
        %3290 = vmatprep.subr.bf16.mxu0 0
        %3291 = vmatpush1.bf16.msra.mxu0 %v2419
        %3292 = vmatprep.subr.bf16.mxu0 0
        %3293 = vmatpush1.bf16.msra.mxu0 %v2418
        %3294 = vmatprep.subr.bf16.mxu0 0
        %3295 = vmatpush1.bf16.msra.mxu0 %v2417
        %3296 = vmatprep.subr.bf16.mxu0 0
        %3297 = vmatpush1.bf16.msra.mxu0 %v2416
        %3298 = vmatprep.subr.bf16.mxu0 0
        %3299 = vmatpush1.bf16.msra.mxu0 %v2415
        %3300 = vmatprep.subr.bf16.mxu0 0
        %3301 = vmatpush1.bf16.msra.mxu0 %v2414
        %3302 = vmatprep.subr.bf16.mxu0 0
        %3303 = vmatpush2.bf16.msra.mxu0 %v2429
        %3304 = vmatprep.subr.bf16.mxu0 0
        %3305 = vmatpush2.bf16.msra.mxu0 %v2428
        %3306 = vmatprep.subr.bf16.mxu0 0
        %3307 = vmatpush2.bf16.msra.mxu0 %v2427
        %3308 = vmatprep.subr.bf16.mxu0 0
        %3309 = vmatpush2.bf16.msra.mxu0 %v2426
        %3310 = vmatprep.subr.bf16.mxu0 0
        %3311 = vmatpush2.bf16.msra.mxu0 %v2425
        %3312 = vmatprep.subr.bf16.mxu0 0
        %3313 = vmatpush2.bf16.msra.mxu0 %v2424
        %3314 = vmatprep.subr.bf16.mxu0 0
        %3315 = vmatpush2.bf16.msra.mxu0 %v2423
        %3316 = vmatprep.subr.bf16.mxu0 0
        %3317 = vmatpush2.bf16.msra.mxu0 %v2422
        %3318 = vmatprep.mubr.bf16.mxu0 %v1117
        %3319 = vmatmul.mubr.bf16.gmra.mxu0 %v1115
        %v3320 = vpop.f32.mrf.mxu0
        %v3321 = vadd.f32 %v3281, %v3320
        %v3322 = vpop.f32.mrf.mxu0
        %v3323 = vpop.f32.mrf.mxu0
        %v3324 = vpop.f32.mrf.mxu0
        %3325 = vdwg.mxu0
        %v3326 = vadd.f32 %v401, %v3321
        %vm3327 = vcmask 254976
        %3328 = vst.msk [vmem:[#allocation2] sm:$0x3] %vm3327, %v3326
        %p3329 = scmp.eq.s32.totalorder %s23, 1
        // Predicated region
        $region69: #{gradient_model_forward.3} parent=63 // pred_check
          %p3330 = pneg %p3329
        $region70: #{gradient_model_forward.3} parent=63 // pred_check_branch
          %3332 = sbr.rel (%p3330) target = $region72
        $region71: #{gradient_model_forward.3} parent=63 // pred_region
          %v3333 = vld [vmem:[#allocation2] sm:$0x3]
          %v3334 = vld [vmem:[%s2] sm:$0x3]
          %v3335 = vld [vmem:[%s3] sm:$0xff]
          %v3336 = vld [vmem:[%s3 + $0x8] sm:$0xff]
          %v3337 = vld [vmem:[%s3 + $0x10] sm:$0xff]
          %v3338 = vld [vmem:[%s3 + $0x18] sm:$0xff]
          %v3339 = vld [vmem:[%s3 + $0x20] sm:$0xff]
          %v3340 = vld [vmem:[%s3 + $0x28] sm:$0xff]
          %v3341 = vld [vmem:[%s3 + $0x30] sm:$0xff]
          %v3342 = vld [vmem:[%s3 + $0x38] sm:$0xff]
          %vm3343 = vcmask 523264
          %v3345 = vsel %vm3343, %v3334, 0
          %3347 = vmatprep.subr.mxu0 0.0
          %3348 = vmatpush1.msra.mxu0 0.0
          %3349 = vmatprep.subr.mxu0 0.0
          %3350 = vmatpush1.msra.mxu0 0.0
          %3351 = vmatprep.subr.mxu0 0.0
          %3352 = vmatpush1.msra.mxu0 0.0
          %3353 = vmatprep.subr.mxu0 0.0
          %3354 = vmatpush1.msra.mxu0 0.0
          %3355 = vmatprep.subr.mxu0 0.0
          %3356 = vmatpush1.msra.mxu0 0.0
          %3357 = vmatprep.subr.mxu0 0.0
          %3358 = vmatpush1.msra.mxu0 0.0
          %3359 = vmatprep.subr.mxu0 0.0
          %3360 = vmatpush1.msra.mxu0 0.0
          %3361 = vmatprep.subr.mxu0 0.0
          %3362 = vmatpush1.msra.mxu0 0.0
          %3363 = vmatprep.subr.mxu0 0.0
          %3364 = vmatpush1.msra.mxu0 %v3342
          %3365 = vmatprep.subr.mxu0 0.0
          %3366 = vmatpush1.msra.mxu0 %v3341
          %3367 = vmatprep.subr.mxu0 0.0
          %3368 = vmatpush1.msra.mxu0 %v3340
          %3369 = vmatprep.subr.mxu0 0.0
          %3370 = vmatpush1.msra.mxu0 %v3339
          %3371 = vmatprep.subr.mxu0 0.0
          %3372 = vmatpush1.msra.mxu0 %v3338
          %3373 = vmatprep.subr.mxu0 0.0
          %3374 = vmatpush1.msra.mxu0 %v3337
          %3375 = vmatprep.subr.mxu0 0.0
          %3376 = vmatpush1.msra.mxu0 %v3336
          %3377 = vmatprep.subr.mxu0 0.0
          %3378 = vmatpush1.msra.mxu0 %v3335
          %3379 = vmatprep.subr.mxu0 0.0
          %3380 = vmatpush2.msra.mxu0 0.0
          %3381 = vmatprep.subr.mxu0 0.0
          %3382 = vmatpush2.msra.mxu0 0.0
          %3383 = vmatprep.subr.mxu0 0.0
          %3384 = vmatpush2.msra.mxu0 0.0
          %3385 = vmatprep.subr.mxu0 0.0
          %3386 = vmatpush2.msra.mxu0 0.0
          %3387 = vmatprep.subr.mxu0 0.0
          %3388 = vmatpush2.msra.mxu0 0.0
          %3389 = vmatprep.subr.mxu0 0.0
          %3390 = vmatpush2.msra.mxu0 0.0
          %3391 = vmatprep.subr.mxu0 0.0
          %3392 = vmatpush2.msra.mxu0 0.0
          %3393 = vmatprep.subr.mxu0 0.0
          %3394 = vmatpush2.msra.mxu0 0.0
          %3395 = vmatprep.subr.mxu0 0.0
          %3396 = vmatpush2.msra.mxu0 0.0
          %3397 = vmatprep.subr.mxu0 0.0
          %3398 = vmatpush2.msra.mxu0 0.0
          %3399 = vmatprep.subr.mxu0 0.0
          %3400 = vmatpush2.msra.mxu0 0.0
          %3401 = vmatprep.subr.mxu0 0.0
          %3402 = vmatpush2.msra.mxu0 0.0
          %3403 = vmatprep.subr.mxu0 0.0
          %3404 = vmatpush2.msra.mxu0 0.0
          %3405 = vmatprep.subr.mxu0 0.0
          %3406 = vmatpush2.msra.mxu0 0.0
          %3407 = vmatprep.subr.mxu0 0.0
          %3408 = vmatpush2.msra.mxu0 0.0
          %3409 = vmatprep.subr.mxu0 0.0
          %3410 = vmatpush2.msra.mxu0 0.0
          %3411 = vmatprep.mubr.f32.mxu0 0.0
          %3412 = vmatmul.mubr.f32.gmra.mxu0 %v3345
          %v3413 = vpop.f32.mrf.mxu0
          %v3414 = vadd.f32 0.0, %v3413
          %v3415 = vpop.f32.mrf.mxu0
          %3416 = vdwg.mxu0
          %v3417 = vadd.f32 %v3333, %v3414
          %v3418 = vld [vmem:[%s4] sm:$0x1]
          %v3419 = vld [vmem:[%s5] sm:$0xff]
          %vm3420 = vcmask 64512
          %v3422 = vsel %vm3420, %v3418, 0
          %3424 = vmatprep.subr.mxu0 0.0
          %3425 = vmatpush1.msra.mxu0 0.0
          %3426 = vmatprep.subr.mxu0 0.0
          %3427 = vmatpush1.msra.mxu0 0.0
          %3428 = vmatprep.subr.mxu0 0.0
          %3429 = vmatpush1.msra.mxu0 0.0
          %3430 = vmatprep.subr.mxu0 0.0
          %3431 = vmatpush1.msra.mxu0 0.0
          %3432 = vmatprep.subr.mxu0 0.0
          %3433 = vmatpush1.msra.mxu0 0.0
          %3434 = vmatprep.subr.mxu0 0.0
          %3435 = vmatpush1.msra.mxu0 0.0
          %3436 = vmatprep.subr.mxu0 0.0
          %3437 = vmatpush1.msra.mxu0 0.0
          %3438 = vmatprep.subr.mxu0 0.0
          %3439 = vmatpush1.msra.mxu0 0.0
          %3440 = vmatprep.subr.mxu0 0.0
          %3441 = vmatpush1.msra.mxu0 0.0
          %3442 = vmatprep.subr.mxu0 0.0
          %3443 = vmatpush1.msra.mxu0 0.0
          %3444 = vmatprep.subr.mxu0 0.0
          %3445 = vmatpush1.msra.mxu0 0.0
          %3446 = vmatprep.subr.mxu0 0.0
          %3447 = vmatpush1.msra.mxu0 0.0
          %3448 = vmatprep.subr.mxu0 0.0
          %3449 = vmatpush1.msra.mxu0 0.0
          %3450 = vmatprep.subr.mxu0 0.0
          %3451 = vmatpush1.msra.mxu0 0.0
          %3452 = vmatprep.subr.mxu0 0.0
          %3453 = vmatpush1.msra.mxu0 0.0
          %3454 = vmatprep.subr.mxu0 0.0
          %3455 = vmatpush1.msra.mxu0 %v3419
          %3456 = vmatprep.subr.mxu0 0.0
          %3457 = vmatpush2.msra.mxu0 0.0
          %3458 = vmatprep.subr.mxu0 0.0
          %3459 = vmatpush2.msra.mxu0 0.0
          %3460 = vmatprep.subr.mxu0 0.0
          %3461 = vmatpush2.msra.mxu0 0.0
          %3462 = vmatprep.subr.mxu0 0.0
          %3463 = vmatpush2.msra.mxu0 0.0
          %3464 = vmatprep.subr.mxu0 0.0
          %3465 = vmatpush2.msra.mxu0 0.0
          %3466 = vmatprep.subr.mxu0 0.0
          %3467 = vmatpush2.msra.mxu0 0.0
          %3468 = vmatprep.subr.mxu0 0.0
          %3469 = vmatpush2.msra.mxu0 0.0
          %3470 = vmatprep.subr.mxu0 0.0
          %3471 = vmatpush2.msra.mxu0 0.0
          %3472 = vmatprep.subr.mxu0 0.0
          %3473 = vmatpush2.msra.mxu0 0.0
          %3474 = vmatprep.subr.mxu0 0.0
          %3475 = vmatpush2.msra.mxu0 0.0
          %3476 = vmatprep.subr.mxu0 0.0
          %3477 = vmatpush2.msra.mxu0 0.0
          %3478 = vmatprep.subr.mxu0 0.0
          %3479 = vmatpush2.msra.mxu0 0.0
          %3480 = vmatprep.subr.mxu0 0.0
          %3481 = vmatpush2.msra.mxu0 0.0
          %3482 = vmatprep.subr.mxu0 0.0
          %3483 = vmatpush2.msra.mxu0 0.0
          %3484 = vmatprep.subr.mxu0 0.0
          %3485 = vmatpush2.msra.mxu0 0.0
          %3486 = vmatprep.subr.mxu0 0.0
          %3487 = vmatpush2.msra.mxu0 0.0
          %3488 = vmatprep.mubr.f32.mxu0 0.0
          %3489 = vmatmul.mubr.f32.gmra.mxu0 %v3422
          %v3490 = vpop.f32.mrf.mxu0
          %v3491 = vadd.f32 0.0, %v3490
          %v3492 = vpop.f32.mrf.mxu0
          %3493 = vdwg.mxu0
          %v3494 = vlaneseq
          %v3495 = vshrl.u32 %v3494, 7
          %v3496 = vsub.s32 0, %v3495
          %v3497 = vrot.slane %v3491, %v3496
          %v3498 = vadd.f32 %v3417, %v3497
          %v3499 = vld [vmem:[%s6] sm:$0x1]
          %v3501 = vlaneseq
          %v3502 = vshrl.u32 %v3501, 7
          %v3503 = vsub.s32 0, %v3502
          %v3504 = vrot.slane %v3499, %v3503
          %v3506 = vadd.f32 %v3498, %v3504
          %v3507 = vmax.f32 %v3506, 0.0
          %v3508 = vld [vmem:[%s7] sm:$0xff]
          %v3509 = vld [vmem:[%s7 + $0x8] sm:$0xff]
          %v3510 = vld [vmem:[%s7 + $0x10] sm:$0xff]
          %v3511 = vld [vmem:[%s7 + $0x18] sm:$0xff]
          %v3512 = vld [vmem:[%s8] sm:$0x1]
          %v3514 = vlaneseq
          %v3515 = vshrl.u32 %v3514, 7
          %v3516 = vsub.s32 0, %v3515
          %v3517 = vrot.slane %v3512, %v3516
          %vm3519 = vcmask 261120
          %v3521 = vsel %vm3519, %v3507, 0
          %3523 = vmatprep.subr.mxu0 0.0
          %3524 = vmatpush1.msra.mxu0 0.0
          %3525 = vmatprep.subr.mxu0 0.0
          %3526 = vmatpush1.msra.mxu0 0.0
          %3527 = vmatprep.subr.mxu0 0.0
          %3528 = vmatpush1.msra.mxu0 0.0
          %3529 = vmatprep.subr.mxu0 0.0
          %3530 = vmatpush1.msra.mxu0 0.0
          %3531 = vmatprep.subr.mxu0 0.0
          %3532 = vmatpush1.msra.mxu0 0.0
          %3533 = vmatprep.subr.mxu0 0.0
          %3534 = vmatpush1.msra.mxu0 0.0
          %3535 = vmatprep.subr.mxu0 0.0
          %3536 = vmatpush1.msra.mxu0 0.0
          %3537 = vmatprep.subr.mxu0 0.0
          %3538 = vmatpush1.msra.mxu0 0.0
          %3539 = vmatprep.subr.mxu0 0.0
          %3540 = vmatpush1.msra.mxu0 0.0
          %3541 = vmatprep.subr.mxu0 0.0
          %3542 = vmatpush1.msra.mxu0 0.0
          %3543 = vmatprep.subr.mxu0 0.0
          %3544 = vmatpush1.msra.mxu0 0.0
          %3545 = vmatprep.subr.mxu0 0.0
          %3546 = vmatpush1.msra.mxu0 0.0
          %3547 = vmatprep.subr.mxu0 0.0
          %3548 = vmatpush1.msra.mxu0 %v3511
          %3549 = vmatprep.subr.mxu0 0.0
          %3550 = vmatpush1.msra.mxu0 %v3510
          %3551 = vmatprep.subr.mxu0 0.0
          %3552 = vmatpush1.msra.mxu0 %v3509
          %3553 = vmatprep.subr.mxu0 0.0
          %3554 = vmatpush1.msra.mxu0 %v3508
          %3555 = vmatprep.subr.mxu0 0.0
          %3556 = vmatpush2.msra.mxu0 0.0
          %3557 = vmatprep.subr.mxu0 0.0
          %3558 = vmatpush2.msra.mxu0 0.0
          %3559 = vmatprep.subr.mxu0 0.0
          %3560 = vmatpush2.msra.mxu0 0.0
          %3561 = vmatprep.subr.mxu0 0.0
          %3562 = vmatpush2.msra.mxu0 0.0
          %3563 = vmatprep.subr.mxu0 0.0
          %3564 = vmatpush2.msra.mxu0 0.0
          %3565 = vmatprep.subr.mxu0 0.0
          %3566 = vmatpush2.msra.mxu0 0.0
          %3567 = vmatprep.subr.mxu0 0.0
          %3568 = vmatpush2.msra.mxu0 0.0
          %3569 = vmatprep.subr.mxu0 0.0
          %3570 = vmatpush2.msra.mxu0 0.0
          %3571 = vmatprep.subr.mxu0 0.0
          %3572 = vmatpush2.msra.mxu0 0.0
          %3573 = vmatprep.subr.mxu0 0.0
          %3574 = vmatpush2.msra.mxu0 0.0
          %3575 = vmatprep.subr.mxu0 0.0
          %3576 = vmatpush2.msra.mxu0 0.0
          %3577 = vmatprep.subr.mxu0 0.0
          %3578 = vmatpush2.msra.mxu0 0.0
          %3579 = vmatprep.subr.mxu0 0.0
          %3580 = vmatpush2.msra.mxu0 0.0
          %3581 = vmatprep.subr.mxu0 0.0
          %3582 = vmatpush2.msra.mxu0 0.0
          %3583 = vmatprep.subr.mxu0 0.0
          %3584 = vmatpush2.msra.mxu0 0.0
          %3585 = vmatprep.subr.mxu0 0.0
          %3586 = vmatpush2.msra.mxu0 0.0
          %3587 = vmatprep.mubr.f32.mxu0 0.0
          %3588 = vmatmul.mubr.f32.gmra.mxu0 %v3521
          %v3589 = vpop.f32.mrf.mxu0
          %v3590 = vadd.f32 %v3517, %v3589
          %v3591 = vpop.f32.mrf.mxu0
          %3592 = vdwg.mxu0
          %v3593 = vmax.f32 %v3590, 0.0
          %v3594 = vld [vmem:[%s9] sm:$0xff]
          %v3595 = vld [vmem:[%s9 + $0x8] sm:$0xff]
          %v3596 = vld [vmem:[%s9 + $0x10] sm:$0xff]
          %v3597 = vld [vmem:[%s9 + $0x18] sm:$0xff]
          %v3598 = vld [vmem:[%s10] sm:$0x1]
          %v3600 = vlaneseq
          %v3601 = vshrl.u32 %v3600, 7
          %v3602 = vsub.s32 0, %v3601
          %v3603 = vrot.slane %v3598, %v3602
          %v3606 = vsel %vm3519, %v3593, 0
          %3608 = vmatprep.subr.mxu0 0.0
          %3609 = vmatpush1.msra.mxu0 0.0
          %3610 = vmatprep.subr.mxu0 0.0
          %3611 = vmatpush1.msra.mxu0 0.0
          %3612 = vmatprep.subr.mxu0 0.0
          %3613 = vmatpush1.msra.mxu0 0.0
          %3614 = vmatprep.subr.mxu0 0.0
          %3615 = vmatpush1.msra.mxu0 0.0
          %3616 = vmatprep.subr.mxu0 0.0
          %3617 = vmatpush1.msra.mxu0 0.0
          %3618 = vmatprep.subr.mxu0 0.0
          %3619 = vmatpush1.msra.mxu0 0.0
          %3620 = vmatprep.subr.mxu0 0.0
          %3621 = vmatpush1.msra.mxu0 0.0
          %3622 = vmatprep.subr.mxu0 0.0
          %3623 = vmatpush1.msra.mxu0 0.0
          %3624 = vmatprep.subr.mxu0 0.0
          %3625 = vmatpush1.msra.mxu0 0.0
          %3626 = vmatprep.subr.mxu0 0.0
          %3627 = vmatpush1.msra.mxu0 0.0
          %3628 = vmatprep.subr.mxu0 0.0
          %3629 = vmatpush1.msra.mxu0 0.0
          %3630 = vmatprep.subr.mxu0 0.0
          %3631 = vmatpush1.msra.mxu0 0.0
          %3632 = vmatprep.subr.mxu0 0.0
          %3633 = vmatpush1.msra.mxu0 %v3597
          %3634 = vmatprep.subr.mxu0 0.0
          %3635 = vmatpush1.msra.mxu0 %v3596
          %3636 = vmatprep.subr.mxu0 0.0
          %3637 = vmatpush1.msra.mxu0 %v3595
          %3638 = vmatprep.subr.mxu0 0.0
          %3639 = vmatpush1.msra.mxu0 %v3594
          %3640 = vmatprep.subr.mxu0 0.0
          %3641 = vmatpush2.msra.mxu0 0.0
          %3642 = vmatprep.subr.mxu0 0.0
          %3643 = vmatpush2.msra.mxu0 0.0
          %3644 = vmatprep.subr.mxu0 0.0
          %3645 = vmatpush2.msra.mxu0 0.0
          %3646 = vmatprep.subr.mxu0 0.0
          %3647 = vmatpush2.msra.mxu0 0.0
          %3648 = vmatprep.subr.mxu0 0.0
          %3649 = vmatpush2.msra.mxu0 0.0
          %3650 = vmatprep.subr.mxu0 0.0
          %3651 = vmatpush2.msra.mxu0 0.0
          %3652 = vmatprep.subr.mxu0 0.0
          %3653 = vmatpush2.msra.mxu0 0.0
          %3654 = vmatprep.subr.mxu0 0.0
          %3655 = vmatpush2.msra.mxu0 0.0
          %3656 = vmatprep.subr.mxu0 0.0
          %3657 = vmatpush2.msra.mxu0 0.0
          %3658 = vmatprep.subr.mxu0 0.0
          %3659 = vmatpush2.msra.mxu0 0.0
          %3660 = vmatprep.subr.mxu0 0.0
          %3661 = vmatpush2.msra.mxu0 0.0
          %3662 = vmatprep.subr.mxu0 0.0
          %3663 = vmatpush2.msra.mxu0 0.0
          %3664 = vmatprep.subr.mxu0 0.0
          %3665 = vmatpush2.msra.mxu0 0.0
          %3666 = vmatprep.subr.mxu0 0.0
          %3667 = vmatpush2.msra.mxu0 0.0
          %3668 = vmatprep.subr.mxu0 0.0
          %3669 = vmatpush2.msra.mxu0 0.0
          %3670 = vmatprep.subr.mxu0 0.0
          %3671 = vmatpush2.msra.mxu0 0.0
          %3672 = vmatprep.mubr.f32.mxu0 0.0
          %3673 = vmatmul.mubr.f32.gmra.mxu0 %v3606
          %v3674 = vpop.f32.mrf.mxu0
          %v3675 = vadd.f32 %v3603, %v3674
          %v3676 = vpop.f32.mrf.mxu0
          %3677 = vdwg.mxu0
          %vm3678 = vcmask 58368
          %v3679 = vsel %vm3678, %v3675, 0.0
          %v3680 = vrot.slane %v3679, 4
          %v3681 = vadd.f32 %v3679, %v3680
          %v3682 = vrot.slane %v3681, 2
          %v3683 = vadd.f32 %v3681, %v3682
          %v3684 = vrot.slane %v3683, 1
          %v3685 = vadd.f32 %v3683, %v3684
          %v3686 = vrcp.pop 2.0
          %v3687 = vmul.f32 %v3685, %v3686
          %vm3688 = vcmask 57344
          %3689 = vst.msk [vmem:[#allocation3] sm:$0x1] %vm3688, %v3687
        $region72: #{gradient_model_forward.3} parent=63 // pred_fallthru
          _
        // Predicated region
        $region73: #{gradient_model_forward.3} parent=63 // pred_check
          %p3690 = pneg %p277
        $region74: #{gradient_model_forward.3} parent=63 // pred_check_branch
          %3692 = sbr.rel (%p3690) target = $region76
        $region75: #{gradient_model_forward.3} parent=63 // pred_region
          %s3694 = ssub.s32 16, 16
          %3695 = vsyncadd [#allocation4], %s3694
          %s3697 = sshll.u32 [#allocation3], 4
          %s3698 = int_to_ptr.vmem [resolvable:$true] %s3697
          %3700 = dma.vmem_to_hbm [thread:$0]  %s3698, 16, %s11, [#allocation4]
        $region76: #{gradient_model_forward.3} parent=63 // pred_fallthru
          _
        // Predicated region
        $region77: #{gradient_model_forward.3} parent=63 // pred_check
          %p3701 = pneg %p277
        $region78: #{gradient_model_forward.3} parent=63 // pred_check_branch
          %3703 = sbr.rel (%p3701) target = $region80
        $region79: #{gradient_model_forward.3} parent=63 // pred_region
          %3704 = dma.done [#allocation4], 16
        $region80: #{gradient_model_forward.3} parent=63 // pred_fallthru
          _
      $region64: #{gradient_model_forward.3} parent=5 // pred_fallthru
        _
      %p3705 = scmp.le.s32.totalorder 2, %s18
      // Predicated region
      $region81: #{gradient_model_forward.3} parent=5 // pred_check
        %p3706 = pneg %p3705
      $region82: #{gradient_model_forward.3} parent=5 // pred_check_branch
        %3708 = sbr.rel (%p3706) target = $region84
      $region83: #{gradient_model_forward.3} parent=5 // pred_region
        %s3709 = ssub.s32 %s18, 2
      $region84: #{gradient_model_forward.3} parent=5 // pred_fallthru
        _
    $region6: #{gradient_model_forward.3} parent=1 // loop_footer
      %s22 = sadd.s32 1, %s18
    $region7: #{gradient_model_forward.3} parent=1 // loop_footer_branch
      %17 = sbr.rel target = $region3
    $region8: #{gradient_model_forward.3} parent=1 // loop_exit
      _
    %3710 = vsyncpa [#allocation4], 1
    %s3711 = scalar_lea.sflag [#allocation4], 1
    %3712 = vsyncpa %s3711, 1

</llo_original>
